<compile_context>
chip_gen: v6e
topology: v6e:2x2x1
jax: 0.10.0
libtpu: 0.0.40
codegen_flags: <defaults>
</compile_context>

<pallas_src>
import functools
import math

import jax
import jax.numpy as jnp
from jax.experimental import pallas as pl
from jax.experimental.pallas import tpu as pltpu


def gru_decoder_kernel(*refs, num_layers, hidden, seq_len, time_chunk, time_unroll):
    """Multi-layer GRU (PyTorch gate order r,z,n) + tiled dense head.

    Grid = (batch tiles [parallel], vocab tiles [arbitrary]).  The GRU recurrence runs only
    when program_id(1) == 0 and leaves the per-layer output sequence in the hseq scratch,
    which every vocab-tile iteration then projects with its own (Hp, V_TILE) weight slab.

    refs (L > 1):
      xctx, h0, wih0, wihr, whh, bih, bhn, wd, bd, out, hT, hseq, gi
    refs (L == 1): same without wihr.

    xctx : (T, Bt, INp) f32          h0  : (L, Bt, Hp) f32
    wih0 : (INp, 3*Hp)  wdt          wihr: (L-1, Hp, 3*Hp) wdt
    whh  : (L, Hp, 3*Hp) wdt
    bih  : (L, 1, 3*Hp) f32  (r/z hidden biases folded in)     bhn: (L, 1, Hp) f32
    wd   : (Hp, V_TILE) wdt          bd  : (1, V_TILE) f32
    out  : (T, Bt, V_TILE) f32       hT  : (L, Bt, Hp) f32
    hseq : VMEM scratch (T, Bt, Hp) f32
    gi   : VMEM scratch (TC, Bt, 3*Hp) f32
    """
    if num_layers > 1:
        (xctx_ref, h0_ref, wih0_ref, wihr_ref, whh_ref, bih_ref, bhn_ref,
         wd_ref, bd_ref, out_ref, hT_ref, hseq_ref, gi_ref) = refs
    else:
        (xctx_ref, h0_ref, wih0_ref, whh_ref, bih_ref, bhn_ref,
         wd_ref, bd_ref, out_ref, hT_ref, hseq_ref, gi_ref) = refs
        wihr_ref = None

    L, H, T, TC = num_layers, hidden, seq_len, time_chunk
    Bt = hseq_ref.shape[1]

    # ---- recurrence: only on the first vocab-tile iteration of each batch tile ----
    @pl.when(pl.program_id(1) == 0)
    def _recurrence():
        for l in range(L):                               # static unroll over layers
            w_in = wih0_ref[...] if l == 0 else wihr_ref[l - 1]
            w_hh = whh_ref[l]                            # (Hp, 3*Hp)
            b_ih = bih_ref[l]                            # (1, 3*Hp)
            b_hn = bhn_ref[l]                            # (1, Hp)
            h = h0_ref[l]                                # (Bt, Hp) f32

            for c in range(T // TC):                     # static loop over time chunks
                t0 = c * TC
                # input-side gates for the whole chunk: one large MXU matmul
                if l == 0:
                    x2d = xctx_ref[pl.ds(t0, TC)].reshape(TC * Bt, xctx_ref.shape[-1])
                else:
                    x2d = hseq_ref[pl.ds(t0, TC)].reshape(TC * Bt, H)
                gi = jnp.dot(x2d.astype(w_in.dtype), w_in,
                             preferred_element_type=jnp.float32) + b_ih
                gi_ref[...] = gi.reshape(TC, Bt, 3 * H)

                def step(t, h, w_hh=w_hh, b_hn=b_hn, t0=t0):
                    gh = jnp.dot(h.astype(w_hh.dtype), w_hh,
                                 preferred_element_type=jnp.float32)
                    gi_t = gi_ref[t]                     # (Bt, 3*Hp)
                    r = jax.nn.sigmoid(gi_t[:, 0:H] + gh[:, 0:H])
                    z = jax.nn.sigmoid(gi_t[:, H:2 * H] + gh[:, H:2 * H])
                    n = jnp.tanh(gi_t[:, 2 * H:3 * H] + r * (gh[:, 2 * H:3 * H] + b_hn))
                    h_new = (1.0 - z) * n + z * h
                    hseq_ref[t0 + t] = h_new             # feeds next layer / dense head
                    return h_new

                if time_unroll >= TC:                    # short chunks: full trace-time unroll
                    for t in range(TC):
                        h = step(t, h)
                else:                                    # long chunks: partially unrolled loop
                    h = jax.lax.fori_loop(0, TC, step, h, unroll=time_unroll)
            hT_ref[l] = h

    # ---- vocab projection for this (batch tile, vocab tile): lane-dense stores ----
    h_all = hseq_ref[...].reshape(T * Bt, H)
    logits = jnp.dot(h_all.astype(wd_ref.dtype), wd_ref[...],
                     preferred_element_type=jnp.float32) + bd_ref[...]
    out_ref[...] = logits.reshape(T, Bt, out_ref.shape[-1]).astype(out_ref.dtype)
    # TODO(synk): inter-layer GRU dropout not implemented (module default dropout=0 / eval mode).


def make_params(key, vocab_size, embed_size, num_hiddens, num_layers):
    """Deterministic synthetic parameters with the same shapes as the PyTorch module."""
    H = num_hiddens
    scale = 1.0 / math.sqrt(H)
    keys = iter(jax.random.split(key, 4 * num_layers + 3))
    params = {"embedding": jax.random.normal(next(keys), (vocab_size, embed_size), jnp.float32)}
    for l in range(num_layers):
        in_dim = embed_size + num_hiddens if l == 0 else num_hiddens
        params[f"w_ih_{l}"] = jax.random.uniform(next(keys), (3 * H, in_dim), jnp.float32, -scale, scale)
        params[f"w_hh_{l}"] = jax.random.uniform(next(keys), (3 * H, H), jnp.float32, -scale, scale)
        params[f"b_ih_{l}"] = jax.random.uniform(next(keys), (3 * H,), jnp.float32, -scale, scale)
        params[f"b_hh_{l}"] = jax.random.uniform(next(keys), (3 * H,), jnp.float32, -scale, scale)
    params["w_dense"] = jax.random.uniform(next(keys), (vocab_size, H), jnp.float32, -scale, scale)
    params["b_dense"] = jax.random.uniform(next(keys), (vocab_size,), jnp.float32, -scale, scale)
    return params


def _round_up(x, m):
    return (x + m - 1) // m * m


def _pick_divisor_tile(total, candidates):
    for c in candidates:
        if c <= total and total % c == 0:
            return c
    return total


def _vmem_capacity_bytes():
    try:
        cap = getattr(pltpu.get_tpu_info(), "vmem_capacity_bytes", None)
        if cap:
            return int(cap)
    except Exception:
        pass
    return 64 << 20  # conservative fallback (v7x per-core VMEM)


def seq2seq_decoder_forward(X, state, params, *, embed_size, num_hiddens, num_layers,
                            vocab_size, weight_dtype=jnp.bfloat16):
    """X: (B, T) int32 tokens; state: (L, B, H). Returns ((B, T, V) logits, (L, B, H) state)."""
    B, T = X.shape
    L, H, E, V = num_layers, num_hiddens, embed_size, vocab_size
    IN = E + H

    # ---- tiling (adaptive) ----
    Bp8 = _round_up(B, 8)
    B_TILE = min(Bp8, 128)                       # many MXU rows per recurrent matmul
    Bp = _round_up(B, B_TILE)
    Hp = _round_up(H, 128)
    Vp = _round_up(V, 128)
    INp = _round_up(IN, 128)
    V_TILE = Vp if Vp <= 2048 else _pick_divisor_tile(Vp, (2048, 1024, 512, 256, 128))
    T_CHUNK = T if T <= 128 else _pick_divisor_tile(T, (128, 64, 32, 16, 8, 4, 2, 1))
    time_unroll = T_CHUNK if T_CHUNK <= 32 else 8

    # ---- glue (plain JAX): embedding gather, context repeat, concat, pad, time-major ----
    emb = params["embedding"][X]                                   # (B, T, E)
    context = jnp.broadcast_to(state[-1][:, None, :], (B, T, H))   # (B, T, H)
    x_and_ctx = jnp.concatenate([emb, context], axis=2)            # (B, T, IN)
    xctx_tm = jnp.transpose(x_and_ctx, (1, 0, 2))                  # (T, B, IN)
    xctx_tm = jnp.pad(xctx_tm, ((0, 0), (0, Bp - B), (0, INp - IN)))
    h0 = jnp.pad(state, ((0, 0), (0, Bp - B), (0, Hp - H)))

    # ---- fuse + pad GRU weights (PyTorch gate order r,z,n; per-gate lane padding) ----
    def pack_w(w, in_dim, in_pad):                # w: (3H, in_dim) -> (in_pad, 3*Hp), cols [r|z|n]
        gates = [w[g * H:(g + 1) * H, :].T for g in range(3)]
        gates = [jnp.pad(g, ((0, in_pad - in_dim), (0, Hp - H))) for g in gates]
        return jnp.concatenate(gates, axis=1).astype(weight_dtype)

    def pack_gate_bias(b):                        # (3H,) -> (1, 3*Hp)
        gates = [jnp.pad(b[g * H:(g + 1) * H], (0, Hp - H)) for g in range(3)]
        return jnp.concatenate(gates).reshape(1, 3 * Hp)

    wih0 = pack_w(params["w_ih_0"], IN, INp)
    wihr = (jnp.stack([pack_w(params[f"w_ih_{l}"], H, Hp) for l in range(1, L)])
            if L > 1 else None)                   # no dummy operand when L == 1
    whh = jnp.stack([pack_w(params[f"w_hh_{l}"], H, Hp) for l in range(L)])

    # fold r/z hidden biases into the precomputed input-side bias; keep only the n-gate b_hh
    bih_list, bhn_list = [], []
    for l in range(L):
        b_ih, b_hh = params[f"b_ih_{l}"], params[f"b_hh_{l}"]
        folded = b_ih + jnp.concatenate([b_hh[:2 * H], jnp.zeros((H,), b_hh.dtype)])
        bih_list.append(pack_gate_bias(folded))
        bhn_list.append(jnp.pad(b_hh[2 * H:], (0, Hp - H)).reshape(1, Hp))
    bih = jnp.stack(bih_list).astype(jnp.float32)                  # (L, 1, 3*Hp)
    bhn = jnp.stack(bhn_list).astype(jnp.float32)                  # (L, 1, Hp)
    wd = jnp.pad(params["w_dense"].T, ((0, Hp - H), (0, Vp - V))).astype(weight_dtype)
    bd = jnp.pad(params["b_dense"], (0, Vp - V)).reshape(1, Vp).astype(jnp.float32)

    # ---- generation-aware VMEM budget (blocks double-buffered by the pipeline) ----
    def nb(shape, dtype):
        return int(math.prod(shape)) * jnp.dtype(dtype).itemsize

    wdt = weight_dtype
    block_bytes = (nb((T, B_TILE, INp), jnp.float32) + nb((L, B_TILE, Hp), jnp.float32)
                   + nb(wih0.shape, wdt)
                   + (nb(wihr.shape, wdt) if wihr is not None else 0)
                   + nb(whh.shape, wdt) + nb(bih.shape, jnp.float32) + nb(bhn.shape, jnp.float32)
                   + nb((Hp, V_TILE), wdt) + nb((1, V_TILE), jnp.float32)
                   + nb((T, B_TILE, V_TILE), jnp.float32) + nb((L, B_TILE, Hp), jnp.float32))
    scratch_bytes = nb((T, B_TILE, Hp), jnp.float32) + nb((T_CHUNK, B_TILE, 3 * Hp), jnp.float32)
    cap = _vmem_capacity_bytes()                  # 128 MiB on v5e/v6e, 64 MiB per core on v7x
    vmem_limit = int(min(max(2 * block_bytes + scratch_bytes + (4 << 20), 32 << 20),
                         max(cap - (8 << 20), 32 << 20)))

    kernel = functools.partial(gru_decoder_kernel, num_layers=L, hidden=Hp, seq_len=T,
                               time_chunk=T_CHUNK, time_unroll=time_unroll)

    operands = [xctx_tm, h0, wih0]
    in_specs = [
        pl.BlockSpec((T, B_TILE, INp), lambda b, v: (0, b, 0)),    # x_and_context
        pl.BlockSpec((L, B_TILE, Hp), lambda b, v: (0, b, 0)),     # initial state
        pl.BlockSpec(wih0.shape, lambda b, v: (0, 0)),             # layer-0 input weights
    ]
    if wihr is not None:
        operands.append(wihr)
        in_specs.append(pl.BlockSpec(wihr.shape, lambda b, v: (0, 0, 0)))
    operands += [whh, bih, bhn, wd, bd]
    in_specs += [
        pl.BlockSpec(whh.shape, lambda b, v: (0, 0, 0)),           # hidden weights (fused gates)
        pl.BlockSpec(bih.shape, lambda b, v: (0, 0, 0)),
        pl.BlockSpec(bhn.shape, lambda b, v: (0, 0, 0)),
        pl.BlockSpec((Hp, V_TILE), lambda b, v: (0, v)),           # dense head: streamed V tiles
        pl.BlockSpec((1, V_TILE), lambda b, v: (0, v)),
    ]

    out_tm, hT = pl.pallas_call(
        kernel,
        out_shape=(jax.ShapeDtypeStruct((T, Bp, Vp), jnp.float32),
                   jax.ShapeDtypeStruct((L, Bp, Hp), jnp.float32)),
        grid=(Bp // B_TILE, Vp // V_TILE),
        in_specs=in_specs,
        out_specs=(pl.BlockSpec((T, B_TILE, V_TILE), lambda b, v: (0, b, v)),
                   pl.BlockSpec((L, B_TILE, Hp), lambda b, v: (0, b, 0))),
        scratch_shapes=[pltpu.VMEM((T, B_TILE, Hp), jnp.float32),           # layer output seq
                        pltpu.VMEM((T_CHUNK, B_TILE, 3 * Hp), jnp.float32)],  # chunked gi
        compiler_params=pltpu.CompilerParams(
            dimension_semantics=("parallel", "arbitrary"),   # batch tiles -> megacore split
            vmem_limit_bytes=vmem_limit),
    )(*operands)

    out = jnp.transpose(out_tm[:, :B, :V], (1, 0, 2))              # (B, T, V)
    return out, hT[:, :B, :H]


def seq2seq_decoder_reference(X, state, params, *, embed_size, num_hiddens, num_layers, vocab_size):
    """Pure-JAX reference matching torch.nn.GRU(batch_first=True) semantics (f32, HIGHEST)."""
    B, T = X.shape
    L, H = num_layers, num_hiddens
    hp = jax.lax.Precision.HIGHEST
    emb = params["embedding"][X]
    context = jnp.broadcast_to(state[-1][:, None, :], (B, T, H))
    layer_in = jnp.concatenate([emb, context], axis=2)
    new_states = []
    for l in range(L):
        Wih, Whh = params[f"w_ih_{l}"], params[f"w_hh_{l}"]
        bih, bhh = params[f"b_ih_{l}"], params[f"b_hh_{l}"]

        def step(h, x_t, Wih=Wih, Whh=Whh, bih=bih, bhh=bhh):
            gi = jnp.dot(x_t, Wih.T, precision=hp) + bih
            gh = jnp.dot(h, Whh.T, precision=hp) + bhh
            r = jax.nn.sigmoid(gi[:, :H] + gh[:, :H])
            z = jax.nn.sigmoid(gi[:, H:2 * H] + gh[:, H:2 * H])
            n = jnp.tanh(gi[:, 2 * H:] + r * gh[:, 2 * H:])
            h_new = (1.0 - z) * n + z * h
            return h_new, h_new

        h_final, outs = jax.lax.scan(step, state[l], jnp.swapaxes(layer_in, 0, 1))
        layer_in = jnp.swapaxes(outs, 0, 1)
        new_states.append(h_final)
    out = jnp.dot(layer_in, params["w_dense"].T, precision=hp) + params["b_dense"]
    return out, jnp.stack(new_states)


if __name__ == "__main__":
    vocab_size, embed_size, num_hiddens, num_layers = 32, 16, 32, 2
    batch, num_steps = 2, 8

    key = jax.random.PRNGKey(0)
    k_params, k_tokens, k_state = jax.random.split(key, 3)
    params = make_params(k_params, vocab_size, embed_size, num_hiddens, num_layers)

    X = jax.random.randint(k_tokens, (batch, num_steps), 0, vocab_size, dtype=jnp.int32)
    state = jax.random.normal(k_state, (num_layers, batch, num_hiddens), jnp.float32)

    fwd = jax.jit(functools.partial(
        seq2seq_decoder_forward, embed_size=embed_size, num_hiddens=num_hiddens,
        num_layers=num_layers, vocab_size=vocab_size))
    out, new_state = fwd(X, state, params)
    out = jax.block_until_ready(out)
    new_state = jax.block_until_ready(new_state)

    assert out.shape == (batch, num_steps, vocab_size)
    assert new_state.shape == (num_layers, batch, num_hiddens)

    ref_out, ref_state = seq2seq_decoder_reference(
        X, state, params, embed_size=embed_size, num_hiddens=num_hiddens,
        num_layers=num_layers, vocab_size=vocab_size)
    err_out = float(jnp.max(jnp.abs(out - ref_out)))
    err_state = float(jnp.max(jnp.abs(new_state - ref_state)))
    # bf16 MXU operands (f32 accumulation / f32 carried state) vs f32-HIGHEST reference.
    assert err_out < 5e-2 and err_state < 5e-2, (err_out, err_state)

    print("KERNEL_OK")
</pallas_src>

<mosaic_0001>
module attributes {stable_mosaic.version = 11 : i64} {
  func.func @gru_decoder_kernel(%arg0: i32, %arg1: i32, %arg2: memref<8x8x128xf32, #tpu.memory_space<vmem>>, %arg3: memref<2x8x128xf32, #tpu.memory_space<vmem>>, %arg4: memref<128x384xbf16, #tpu.memory_space<vmem>>, %arg5: memref<1x128x384xbf16, #tpu.memory_space<vmem>>, %arg6: memref<2x128x384xbf16, #tpu.memory_space<vmem>>, %arg7: memref<2x1x384xf32, #tpu.memory_space<vmem>>, %arg8: memref<2x1x128xf32, #tpu.memory_space<vmem>>, %arg9: memref<128x128xbf16, #tpu.memory_space<vmem>>, %arg10: memref<1x128xf32, #tpu.memory_space<vmem>>, %arg11: memref<8x8x128xf32, #tpu.memory_space<vmem>>, %arg12: memref<2x8x128xf32, #tpu.memory_space<vmem>>, %arg13: memref<8x8x128xf32, #tpu.memory_space<vmem>>, %arg14: memref<8x8x384xf32, #tpu.memory_space<vmem>>) attributes {dimension_semantics = [#tpu.dimension_semantics<parallel>, #tpu.dimension_semantics<arbitrary>], iteration_bounds = array<i64: 1, 1>, scalar_prefetch = 0 : i64, scratch_operands = 2 : i64, tpu.core_type = #tpu.core_type<tc>, window_params = [{transform_indices = @transform_0, window_bounds = array<i64: 8, 8, 128>}, {transform_indices = @transform_1, window_bounds = array<i64: 2, 8, 128>}, {pipeline_mode = #tpu.pipeline_mode<synchronous>, transform_indices = @transform_2, window_bounds = array<i64: 128, 384>}, {pipeline_mode = #tpu.pipeline_mode<synchronous>, transform_indices = @transform_3, window_bounds = array<i64: 1, 128, 384>}, {pipeline_mode = #tpu.pipeline_mode<synchronous>, transform_indices = @transform_4, window_bounds = array<i64: 2, 128, 384>}, {pipeline_mode = #tpu.pipeline_mode<synchronous>, transform_indices = @transform_5, window_bounds = array<i64: 2, 1, 384>}, {pipeline_mode = #tpu.pipeline_mode<synchronous>, transform_indices = @transform_6, window_bounds = array<i64: 2, 1, 128>}, {transform_indices = @transform_7, window_bounds = array<i64: 128, 128>}, {transform_indices = @transform_8, window_bounds = array<i64: 1, 128>}, {transform_indices = @transform_9, window_bounds = array<i64: 8, 8, 128>}, {transform_indices = @transform_10, window_bounds = array<i64: 2, 8, 128>}]} {
    %c0_i32 = arith.constant 0 : i32
    %0 = arith.cmpi eq, %arg1, %c0_i32 : i32
    %1 = arith.extui %0 : i1 to i32
    %c0_i32_0 = arith.constant 0 : i32
    %2 = arith.cmpi ne, %1, %c0_i32_0 : i32
    scf.if %2 {
      %c0_10 = arith.constant 0 : index
      %c0_11 = arith.constant 0 : index
      %13 = vector.load %arg4[%c0_10, %c0_11] : memref<128x384xbf16, #tpu.memory_space<vmem>>, vector<128x384xbf16>
      %c0_12 = arith.constant 0 : index
      %c0_13 = arith.constant 0 : index
      %c0_14 = arith.constant 0 : index
      %14 = vector.load %arg6[%c0_12, %c0_13, %c0_14] : memref<2x128x384xbf16, #tpu.memory_space<vmem>>, vector<1x128x384xbf16>
      %15 = vector.shape_cast %14 : vector<1x128x384xbf16> to vector<128x384xbf16>
      %c0_15 = arith.constant 0 : index
      %c0_16 = arith.constant 0 : index
      %c0_17 = arith.constant 0 : index
      %16 = vector.load %arg7[%c0_15, %c0_16, %c0_17] : memref<2x1x384xf32, #tpu.memory_space<vmem>>, vector<1x1x384xf32>
      %17 = vector.shape_cast %16 : vector<1x1x384xf32> to vector<1x384xf32>
      %c0_18 = arith.constant 0 : index
      %c0_19 = arith.constant 0 : index
      %c0_20 = arith.constant 0 : index
      %18 = vector.load %arg8[%c0_18, %c0_19, %c0_20] : memref<2x1x128xf32, #tpu.memory_space<vmem>>, vector<1x1x128xf32>
      %19 = vector.shape_cast %18 : vector<1x1x128xf32> to vector<1x128xf32>
      %c0_21 = arith.constant 0 : index
      %c0_22 = arith.constant 0 : index
      %c0_23 = arith.constant 0 : index
      %20 = vector.load %arg3[%c0_21, %c0_22, %c0_23] : memref<2x8x128xf32, #tpu.memory_space<vmem>>, vector<1x8x128xf32>
      %21 = vector.shape_cast %20 : vector<1x8x128xf32> to vector<8x128xf32>
      %c0_24 = arith.constant 0 : index
      %c0_25 = arith.constant 0 : index
      %c0_26 = arith.constant 0 : index
      %22 = vector.load %arg2[%c0_24, %c0_25, %c0_26] : memref<8x8x128xf32, #tpu.memory_space<vmem>>, vector<8x8x128xf32>
      %23 = vector.shape_cast %22 : vector<8x8x128xf32> to vector<64x128xf32>
      %24 = arith.truncf %23 : vector<64x128xf32> to vector<64x128xbf16>
      %cst_27 = arith.constant dense<0.000000e+00> : vector<64x384xf32>
      %25 = tpu.matmul %24, %13, %cst_27 {dimension_numbers = #tpu.dot_dimension_numbers<[1], [0], [0], [1], [0, 0, 1, 1], [], []>} : vector<64x128xbf16>, vector<128x384xbf16>, vector<64x384xf32> -> vector<64x384xf32>
      %26 = vector.broadcast %17 : vector<1x384xf32> to vector<64x384xf32>
      %27 = arith.addf %25, %26 : vector<64x384xf32>
      %28 = vector.shape_cast %27 : vector<64x384xf32> to vector<8x8x384xf32>
      %c0_28 = arith.constant 0 : index
      %c0_29 = arith.constant 0 : index
      %c0_30 = arith.constant 0 : index
      %29 = vector.load %arg14[%c0_28, %c0_29, %c0_30] : memref<8x8x384xf32, #tpu.memory_space<vmem>>, vector<8x8x384xf32>
      tpu.vector_store %arg14[%c0_28, %c0_29, %c0_30], %28 {strides = array<i32>} : memref<8x8x384xf32, #tpu.memory_space<vmem>>, vector<8x8x384xf32>,
      %30 = arith.truncf %21 : vector<8x128xf32> to vector<8x128xbf16>
      %cst_31 = arith.constant dense<0.000000e+00> : vector<8x384xf32>
      %31 = tpu.matmul %30, %15, %cst_31 {dimension_numbers = #tpu.dot_dimension_numbers<[1], [0], [0], [1], [0, 0, 1, 1], [], []>} : vector<8x128xbf16>, vector<128x384xbf16>, vector<8x384xf32> -> vector<8x384xf32>
      %c0_32 = arith.constant 0 : index
      %c0_33 = arith.constant 0 : index
      %c0_34 = arith.constant 0 : index
      %32 = vector.load %arg14[%c0_32, %c0_33, %c0_34] : memref<8x8x384xf32, #tpu.memory_space<vmem>>, vector<1x8x384xf32>
      %33 = vector.shape_cast %32 : vector<1x8x384xf32> to vector<8x384xf32>
      %34 = vector.extract_strided_slice %33 {offsets = [0, 0], sizes = [8, 128], strides = [1, 1]} : vector<8x384xf32> to vector<8x128xf32>
      %35 = vector.extract_strided_slice %31 {offsets = [0, 0], sizes = [8, 128], strides = [1, 1]} : vector<8x384xf32> to vector<8x128xf32>
      %36 = arith.addf %34, %35 : vector<8x128xf32>
      %37 = arith.negf %36 : vector<8x128xf32>
      %38 = math.exp %37 : vector<8x128xf32>
      %cst_35 = arith.constant 1.000000e+00 : f32
      %39 = vector.broadcast %cst_35 : f32 to vector<8x128xf32>
      %40 = arith.addf %39, %38 : vector<8x128xf32>
      %41 = arith.divf %39, %40 : vector<8x128xf32>
      %42 = vector.extract_strided_slice %33 {offsets = [0, 128], sizes = [8, 128], strides = [1, 1]} : vector<8x384xf32> to vector<8x128xf32>
      %43 = vector.extract_strided_slice %31 {offsets = [0, 128], sizes = [8, 128], strides = [1, 1]} : vector<8x384xf32> to vector<8x128xf32>
      %44 = arith.addf %42, %43 : vector<8x128xf32>
      %45 = arith.negf %44 : vector<8x128xf32>
      %46 = math.exp %45 : vector<8x128xf32>
      %cst_36 = arith.constant 1.000000e+00 : f32
      %47 = vector.broadcast %cst_36 : f32 to vector<8x128xf32>
      %48 = arith.addf %47, %46 : vector<8x128xf32>
      %49 = arith.divf %47, %48 : vector<8x128xf32>
      %50 = vector.extract_strided_slice %33 {offsets = [0, 256], sizes = [8, 128], strides = [1, 1]} : vector<8x384xf32> to vector<8x128xf32>
      %51 = vector.extract_strided_slice %31 {offsets = [0, 256], sizes = [8, 128], strides = [1, 1]} : vector<8x384xf32> to vector<8x128xf32>
      %52 = vector.broadcast %19 : vector<1x128xf32> to vector<8x128xf32>
      %53 = arith.addf %51, %52 : vector<8x128xf32>
      %54 = arith.mulf %41, %53 : vector<8x128xf32>
      %55 = arith.addf %50, %54 : vector<8x128xf32>
      %56 = math.tanh %55 : vector<8x128xf32>
      %cst_37 = arith.constant 1.000000e+00 : f32
      %57 = vector.broadcast %cst_37 : f32 to vector<8x128xf32>
      %58 = arith.subf %57, %49 : vector<8x128xf32>
      %59 = arith.mulf %58, %56 : vector<8x128xf32>
      %60 = arith.mulf %49, %21 : vector<8x128xf32>
      %61 = arith.addf %59, %60 : vector<8x128xf32>
      %c0_38 = arith.constant 0 : index
      %c0_39 = arith.constant 0 : index
      %c0_40 = arith.constant 0 : index
      %62 = vector.load %arg13[%c0_38, %c0_39, %c0_40] : memref<8x8x128xf32, #tpu.memory_space<vmem>>, vector<1x8x128xf32>
      %63 = vector.shape_cast %62 : vector<1x8x128xf32> to vector<8x128xf32>
      %64 = vector.shape_cast %61 : vector<8x128xf32> to vector<1x8x128xf32>
      tpu.vector_store %arg13[%c0_38, %c0_39, %c0_40], %64 {strides = array<i32>} : memref<8x8x128xf32, #tpu.memory_space<vmem>>, vector<1x8x128xf32>,
      %65 = arith.truncf %61 : vector<8x128xf32> to vector<8x128xbf16>
      %cst_41 = arith.constant dense<0.000000e+00> : vector<8x384xf32>
      %66 = tpu.matmul %65, %15, %cst_41 {dimension_numbers = #tpu.dot_dimension_numbers<[1], [0], [0], [1], [0, 0, 1, 1], [], []>} : vector<8x128xbf16>, vector<128x384xbf16>, vector<8x384xf32> -> vector<8x384xf32>
      %c1 = arith.constant 1 : index
      %c0_42 = arith.constant 0 : index
      %c0_43 = arith.constant 0 : index
      %67 = vector.load %arg14[%c1, %c0_42, %c0_43] : memref<8x8x384xf32, #tpu.memory_space<vmem>>, vector<1x8x384xf32>
      %68 = vector.shape_cast %67 : vector<1x8x384xf32> to vector<8x384xf32>
      %69 = vector.extract_strided_slice %68 {offsets = [0, 0], sizes = [8, 128], strides = [1, 1]} : vector<8x384xf32> to vector<8x128xf32>
      %70 = vector.extract_strided_slice %66 {offsets = [0, 0], sizes = [8, 128], strides = [1, 1]} : vector<8x384xf32> to vector<8x128xf32>
      %71 = arith.addf %69, %70 : vector<8x128xf32>
      %72 = arith.negf %71 : vector<8x128xf32>
      %73 = math.exp %72 : vector<8x128xf32>
      %cst_44 = arith.constant 1.000000e+00 : f32
      %74 = vector.broadcast %cst_44 : f32 to vector<8x128xf32>
      %75 = arith.addf %74, %73 : vector<8x128xf32>
      %76 = arith.divf %74, %75 : vector<8x128xf32>
      %77 = vector.extract_strided_slice %68 {offsets = [0, 128], sizes = [8, 128], strides = [1, 1]} : vector<8x384xf32> to vector<8x128xf32>
      %78 = vector.extract_strided_slice %66 {offsets = [0, 128], sizes = [8, 128], strides = [1, 1]} : vector<8x384xf32> to vector<8x128xf32>
      %79 = arith.addf %77, %78 : vector<8x128xf32>
      %80 = arith.negf %79 : vector<8x128xf32>
      %81 = math.exp %80 : vector<8x128xf32>
      %cst_45 = arith.constant 1.000000e+00 : f32
      %82 = vector.broadcast %cst_45 : f32 to vector<8x128xf32>
      %83 = arith.addf %82, %81 : vector<8x128xf32>
      %84 = arith.divf %82, %83 : vector<8x128xf32>
      %85 = vector.extract_strided_slice %68 {offsets = [0, 256], sizes = [8, 128], strides = [1, 1]} : vector<8x384xf32> to vector<8x128xf32>
      %86 = vector.extract_strided_slice %66 {offsets = [0, 256], sizes = [8, 128], strides = [1, 1]} : vector<8x384xf32> to vector<8x128xf32>
      %87 = vector.broadcast %19 : vector<1x128xf32> to vector<8x128xf32>
      %88 = arith.addf %86, %87 : vector<8x128xf32>
      %89 = arith.mulf %76, %88 : vector<8x128xf32>
      %90 = arith.addf %85, %89 : vector<8x128xf32>
      %91 = math.tanh %90 : vector<8x128xf32>
      %cst_46 = arith.constant 1.000000e+00 : f32
      %92 = vector.broadcast %cst_46 : f32 to vector<8x128xf32>
      %93 = arith.subf %92, %84 : vector<8x128xf32>
      %94 = arith.mulf %93, %91 : vector<8x128xf32>
      %95 = arith.mulf %84, %61 : vector<8x128xf32>
      %96 = arith.addf %94, %95 : vector<8x128xf32>
      %c1_47 = arith.constant 1 : index
      %c0_48 = arith.constant 0 : index
      %c0_49 = arith.constant 0 : index
      %97 = vector.load %arg13[%c1_47, %c0_48, %c0_49] : memref<8x8x128xf32, #tpu.memory_space<vmem>>, vector<1x8x128xf32>
      %98 = vector.shape_cast %97 : vector<1x8x128xf32> to vector<8x128xf32>
      %99 = vector.shape_cast %96 : vector<8x128xf32> to vector<1x8x128xf32>
      tpu.vector_store %arg13[%c1_47, %c0_48, %c0_49], %99 {strides = array<i32>} : memref<8x8x128xf32, #tpu.memory_space<vmem>>, vector<1x8x128xf32>,
      %100 = arith.truncf %96 : vector<8x128xf32> to vector<8x128xbf16>
      %cst_50 = arith.constant dense<0.000000e+00> : vector<8x384xf32>
      %101 = tpu.matmul %100, %15, %cst_50 {dimension_numbers = #tpu.dot_dimension_numbers<[1], [0], [0], [1], [0, 0, 1, 1], [], []>} : vector<8x128xbf16>, vector<128x384xbf16>, vector<8x384xf32> -> vector<8x384xf32>
      %c2 = arith.constant 2 : index
      %c0_51 = arith.constant 0 : index
      %c0_52 = arith.constant 0 : index
      %102 = vector.load %arg14[%c2, %c0_51, %c0_52] : memref<8x8x384xf32, #tpu.memory_space<vmem>>, vector<1x8x384xf32>
      %103 = vector.shape_cast %102 : vector<1x8x384xf32> to vector<8x384xf32>
      %104 = vector.extract_strided_slice %103 {offsets = [0, 0], sizes = [8, 128], strides = [1, 1]} : vector<8x384xf32> to vector<8x128xf32>
      %105 = vector.extract_strided_slice %101 {offsets = [0, 0], sizes = [8, 128], strides = [1, 1]} : vector<8x384xf32> to vector<8x128xf32>
      %106 = arith.addf %104, %105 : vector<8x128xf32>
      %107 = arith.negf %106 : vector<8x128xf32>
      %108 = math.exp %107 : vector<8x128xf32>
      %cst_53 = arith.constant 1.000000e+00 : f32
      %109 = vector.broadcast %cst_53 : f32 to vector<8x128xf32>
      %110 = arith.addf %109, %108 : vector<8x128xf32>
      %111 = arith.divf %109, %110 : vector<8x128xf32>
      %112 = vector.extract_strided_slice %103 {offsets = [0, 128], sizes = [8, 128], strides = [1, 1]} : vector<8x384xf32> to vector<8x128xf32>
      %113 = vector.extract_strided_slice %101 {offsets = [0, 128], sizes = [8, 128], strides = [1, 1]} : vector<8x384xf32> to vector<8x128xf32>
      %114 = arith.addf %112, %113 : vector<8x128xf32>
      %115 = arith.negf %114 : vector<8x128xf32>
      %116 = math.exp %115 : vector<8x128xf32>
      %cst_54 = arith.constant 1.000000e+00 : f32
      %117 = vector.broadcast %cst_54 : f32 to vector<8x128xf32>
      %118 = arith.addf %117, %116 : vector<8x128xf32>
      %119 = arith.divf %117, %118 : vector<8x128xf32>
      %120 = vector.extract_strided_slice %103 {offsets = [0, 256], sizes = [8, 128], strides = [1, 1]} : vector<8x384xf32> to vector<8x128xf32>
      %121 = vector.extract_strided_slice %101 {offsets = [0, 256], sizes = [8, 128], strides = [1, 1]} : vector<8x384xf32> to vector<8x128xf32>
      %122 = vector.broadcast %19 : vector<1x128xf32> to vector<8x128xf32>
      %123 = arith.addf %121, %122 : vector<8x128xf32>
      %124 = arith.mulf %111, %123 : vector<8x128xf32>
      %125 = arith.addf %120, %124 : vector<8x128xf32>
      %126 = math.tanh %125 : vector<8x128xf32>
      %cst_55 = arith.constant 1.000000e+00 : f32
      %127 = vector.broadcast %cst_55 : f32 to vector<8x128xf32>
      %128 = arith.subf %127, %119 : vector<8x128xf32>
      %129 = arith.mulf %128, %126 : vector<8x128xf32>
      %130 = arith.mulf %119, %96 : vector<8x128xf32>
      %131 = arith.addf %129, %130 : vector<8x128xf32>
      %c2_56 = arith.constant 2 : index
      %c0_57 = arith.constant 0 : index
      %c0_58 = arith.constant 0 : index
      %132 = vector.load %arg13[%c2_56, %c0_57, %c0_58] : memref<8x8x128xf32, #tpu.memory_space<vmem>>, vector<1x8x128xf32>
      %133 = vector.shape_cast %132 : vector<1x8x128xf32> to vector<8x128xf32>
      %134 = vector.shape_cast %131 : vector<8x128xf32> to vector<1x8x128xf32>
      tpu.vector_store %arg13[%c2_56, %c0_57, %c0_58], %134 {strides = array<i32>} : memref<8x8x128xf32, #tpu.memory_space<vmem>>, vector<1x8x128xf32>,
      %135 = arith.truncf %131 : vector<8x128xf32> to vector<8x128xbf16>
      %cst_59 = arith.constant dense<0.000000e+00> : vector<8x384xf32>
      %136 = tpu.matmul %135, %15, %cst_59 {dimension_numbers = #tpu.dot_dimension_numbers<[1], [0], [0], [1], [0, 0, 1, 1], [], []>} : vector<8x128xbf16>, vector<128x384xbf16>, vector<8x384xf32> -> vector<8x384xf32>
      %c3 = arith.constant 3 : index
      %c0_60 = arith.constant 0 : index
      %c0_61 = arith.constant 0 : index
      %137 = vector.load %arg14[%c3, %c0_60, %c0_61] : memref<8x8x384xf32, #tpu.memory_space<vmem>>, vector<1x8x384xf32>
      %138 = vector.shape_cast %137 : vector<1x8x384xf32> to vector<8x384xf32>
      %139 = vector.extract_strided_slice %138 {offsets = [0, 0], sizes = [8, 128], strides = [1, 1]} : vector<8x384xf32> to vector<8x128xf32>
      %140 = vector.extract_strided_slice %136 {offsets = [0, 0], sizes = [8, 128], strides = [1, 1]} : vector<8x384xf32> to vector<8x128xf32>
      %141 = arith.addf %139, %140 : vector<8x128xf32>
      %142 = arith.negf %141 : vector<8x128xf32>
      %143 = math.exp %142 : vector<8x128xf32>
      %cst_62 = arith.constant 1.000000e+00 : f32
      %144 = vector.broadcast %cst_62 : f32 to vector<8x128xf32>
      %145 = arith.addf %144, %143 : vector<8x128xf32>
      %146 = arith.divf %144, %145 : vector<8x128xf32>
      %147 = vector.extract_strided_slice %138 {offsets = [0, 128], sizes = [8, 128], strides = [1, 1]} : vector<8x384xf32> to vector<8x128xf32>
      %148 = vector.extract_strided_slice %136 {offsets = [0, 128], sizes = [8, 128], strides = [1, 1]} : vector<8x384xf32> to vector<8x128xf32>
      %149 = arith.addf %147, %148 : vector<8x128xf32>
      %150 = arith.negf %149 : vector<8x128xf32>
      %151 = math.exp %150 : vector<8x128xf32>
      %cst_63 = arith.constant 1.000000e+00 : f32
      %152 = vector.broadcast %cst_63 : f32 to vector<8x128xf32>
      %153 = arith.addf %152, %151 : vector<8x128xf32>
      %154 = arith.divf %152, %153 : vector<8x128xf32>
      %155 = vector.extract_strided_slice %138 {offsets = [0, 256], sizes = [8, 128], strides = [1, 1]} : vector<8x384xf32> to vector<8x128xf32>
      %156 = vector.extract_strided_slice %136 {offsets = [0, 256], sizes = [8, 128], strides = [1, 1]} : vector<8x384xf32> to vector<8x128xf32>
      %157 = vector.broadcast %19 : vector<1x128xf32> to vector<8x128xf32>
      %158 = arith.addf %156, %157 : vector<8x128xf32>
      %159 = arith.mulf %146, %158 : vector<8x128xf32>
      %160 = arith.addf %155, %159 : vector<8x128xf32>
      %161 = math.tanh %160 : vector<8x128xf32>
      %cst_64 = arith.constant 1.000000e+00 : f32
      %162 = vector.broadcast %cst_64 : f32 to vector<8x128xf32>
      %163 = arith.subf %162, %154 : vector<8x128xf32>
      %164 = arith.mulf %163, %161 : vector<8x128xf32>
      %165 = arith.mulf %154, %131 : vector<8x128xf32>
      %166 = arith.addf %164, %165 : vector<8x128xf32>
      %c3_65 = arith.constant 3 : index
      %c0_66 = arith.constant 0 : index
      %c0_67 = arith.constant 0 : index
      %167 = vector.load %arg13[%c3_65, %c0_66, %c0_67] : memref<8x8x128xf32, #tpu.memory_space<vmem>>, vector<1x8x128xf32>
      %168 = vector.shape_cast %167 : vector<1x8x128xf32> to vector<8x128xf32>
      %169 = vector.shape_cast %166 : vector<8x128xf32> to vector<1x8x128xf32>
      tpu.vector_store %arg13[%c3_65, %c0_66, %c0_67], %169 {strides = array<i32>} : memref<8x8x128xf32, #tpu.memory_space<vmem>>, vector<1x8x128xf32>,
      %170 = arith.truncf %166 : vector<8x128xf32> to vector<8x128xbf16>
      %cst_68 = arith.constant dense<0.000000e+00> : vector<8x384xf32>
      %171 = tpu.matmul %170, %15, %cst_68 {dimension_numbers = #tpu.dot_dimension_numbers<[1], [0], [0], [1], [0, 0, 1, 1], [], []>} : vector<8x128xbf16>, vector<128x384xbf16>, vector<8x384xf32> -> vector<8x384xf32>
      %c4 = arith.constant 4 : index
      %c0_69 = arith.constant 0 : index
      %c0_70 = arith.constant 0 : index
      %172 = vector.load %arg14[%c4, %c0_69, %c0_70] : memref<8x8x384xf32, #tpu.memory_space<vmem>>, vector<1x8x384xf32>
      %173 = vector.shape_cast %172 : vector<1x8x384xf32> to vector<8x384xf32>
      %174 = vector.extract_strided_slice %173 {offsets = [0, 0], sizes = [8, 128], strides = [1, 1]} : vector<8x384xf32> to vector<8x128xf32>
      %175 = vector.extract_strided_slice %171 {offsets = [0, 0], sizes = [8, 128], strides = [1, 1]} : vector<8x384xf32> to vector<8x128xf32>
      %176 = arith.addf %174, %175 : vector<8x128xf32>
      %177 = arith.negf %176 : vector<8x128xf32>
      %178 = math.exp %177 : vector<8x128xf32>
      %cst_71 = arith.constant 1.000000e+00 : f32
      %179 = vector.broadcast %cst_71 : f32 to vector<8x128xf32>
      %180 = arith.addf %179, %178 : vector<8x128xf32>
      %181 = arith.divf %179, %180 : vector<8x128xf32>
      %182 = vector.extract_strided_slice %173 {offsets = [0, 128], sizes = [8, 128], strides = [1, 1]} : vector<8x384xf32> to vector<8x128xf32>
      %183 = vector.extract_strided_slice %171 {offsets = [0, 128], sizes = [8, 128], strides = [1, 1]} : vector<8x384xf32> to vector<8x128xf32>
      %184 = arith.addf %182, %183 : vector<8x128xf32>
      %185 = arith.negf %184 : vector<8x128xf32>
      %186 = math.exp %185 : vector<8x128xf32>
      %cst_72 = arith.constant 1.000000e+00 : f32
      %187 = vector.broadcast %cst_72 : f32 to vector<8x128xf32>
      %188 = arith.addf %187, %186 : vector<8x128xf32>
      %189 = arith.divf %187, %188 : vector<8x128xf32>
      %190 = vector.extract_strided_slice %173 {offsets = [0, 256], sizes = [8, 128], strides = [1, 1]} : vector<8x384xf32> to vector<8x128xf32>
      %191 = vector.extract_strided_slice %171 {offsets = [0, 256], sizes = [8, 128], strides = [1, 1]} : vector<8x384xf32> to vector<8x128xf32>
      %192 = vector.broadcast %19 : vector<1x128xf32> to vector<8x128xf32>
      %193 = arith.addf %191, %192 : vector<8x128xf32>
      %194 = arith.mulf %181, %193 : vector<8x128xf32>
      %195 = arith.addf %190, %194 : vector<8x128xf32>
      %196 = math.tanh %195 : vector<8x128xf32>
      %cst_73 = arith.constant 1.000000e+00 : f32
      %197 = vector.broadcast %cst_73 : f32 to vector<8x128xf32>
      %198 = arith.subf %197, %189 : vector<8x128xf32>
      %199 = arith.mulf %198, %196 : vector<8x128xf32>
      %200 = arith.mulf %189, %166 : vector<8x128xf32>
      %201 = arith.addf %199, %200 : vector<8x128xf32>
      %c4_74 = arith.constant 4 : index
      %c0_75 = arith.constant 0 : index
      %c0_76 = arith.constant 0 : index
      %202 = vector.load %arg13[%c4_74, %c0_75, %c0_76] : memref<8x8x128xf32, #tpu.memory_space<vmem>>, vector<1x8x128xf32>
      %203 = vector.shape_cast %202 : vector<1x8x128xf32> to vector<8x128xf32>
      %204 = vector.shape_cast %201 : vector<8x128xf32> to vector<1x8x128xf32>
      tpu.vector_store %arg13[%c4_74, %c0_75, %c0_76], %204 {strides = array<i32>} : memref<8x8x128xf32, #tpu.memory_space<vmem>>, vector<1x8x128xf32>,
      %205 = arith.truncf %201 : vector<8x128xf32> to vector<8x128xbf16>
      %cst_77 = arith.constant dense<0.000000e+00> : vector<8x384xf32>
      %206 = tpu.matmul %205, %15, %cst_77 {dimension_numbers = #tpu.dot_dimension_numbers<[1], [0], [0], [1], [0, 0, 1, 1], [], []>} : vector<8x128xbf16>, vector<128x384xbf16>, vector<8x384xf32> -> vector<8x384xf32>
      %c5 = arith.constant 5 : index
      %c0_78 = arith.constant 0 : index
      %c0_79 = arith.constant 0 : index
      %207 = vector.load %arg14[%c5, %c0_78, %c0_79] : memref<8x8x384xf32, #tpu.memory_space<vmem>>, vector<1x8x384xf32>
      %208 = vector.shape_cast %207 : vector<1x8x384xf32> to vector<8x384xf32>
      %209 = vector.extract_strided_slice %208 {offsets = [0, 0], sizes = [8, 128], strides = [1, 1]} : vector<8x384xf32> to vector<8x128xf32>
      %210 = vector.extract_strided_slice %206 {offsets = [0, 0], sizes = [8, 128], strides = [1, 1]} : vector<8x384xf32> to vector<8x128xf32>
      %211 = arith.addf %209, %210 : vector<8x128xf32>
      %212 = arith.negf %211 : vector<8x128xf32>
      %213 = math.exp %212 : vector<8x128xf32>
      %cst_80 = arith.constant 1.000000e+00 : f32
      %214 = vector.broadcast %cst_80 : f32 to vector<8x128xf32>
      %215 = arith.addf %214, %213 : vector<8x128xf32>
      %216 = arith.divf %214, %215 : vector<8x128xf32>
      %217 = vector.extract_strided_slice %208 {offsets = [0, 128], sizes = [8, 128], strides = [1, 1]} : vector<8x384xf32> to vector<8x128xf32>
      %218 = vector.extract_strided_slice %206 {offsets = [0, 128], sizes = [8, 128], strides = [1, 1]} : vector<8x384xf32> to vector<8x128xf32>
      %219 = arith.addf %217, %218 : vector<8x128xf32>
      %220 = arith.negf %219 : vector<8x128xf32>
      %221 = math.exp %220 : vector<8x128xf32>
      %cst_81 = arith.constant 1.000000e+00 : f32
      %222 = vector.broadcast %cst_81 : f32 to vector<8x128xf32>
      %223 = arith.addf %222, %221 : vector<8x128xf32>
      %224 = arith.divf %222, %223 : vector<8x128xf32>
      %225 = vector.extract_strided_slice %208 {offsets = [0, 256], sizes = [8, 128], strides = [1, 1]} : vector<8x384xf32> to vector<8x128xf32>
      %226 = vector.extract_strided_slice %206 {offsets = [0, 256], sizes = [8, 128], strides = [1, 1]} : vector<8x384xf32> to vector<8x128xf32>
      %227 = vector.broadcast %19 : vector<1x128xf32> to vector<8x128xf32>
      %228 = arith.addf %226, %227 : vector<8x128xf32>
      %229 = arith.mulf %216, %228 : vector<8x128xf32>
      %230 = arith.addf %225, %229 : vector<8x128xf32>
      %231 = math.tanh %230 : vector<8x128xf32>
      %cst_82 = arith.constant 1.000000e+00 : f32
      %232 = vector.broadcast %cst_82 : f32 to vector<8x128xf32>
      %233 = arith.subf %232, %224 : vector<8x128xf32>
      %234 = arith.mulf %233, %231 : vector<8x128xf32>
      %235 = arith.mulf %224, %201 : vector<8x128xf32>
      %236 = arith.addf %234, %235 : vector<8x128xf32>
      %c5_83 = arith.constant 5 : index
      %c0_84 = arith.constant 0 : index
      %c0_85 = arith.constant 0 : index
      %237 = vector.load %arg13[%c5_83, %c0_84, %c0_85] : memref<8x8x128xf32, #tpu.memory_space<vmem>>, vector<1x8x128xf32>
      %238 = vector.shape_cast %237 : vector<1x8x128xf32> to vector<8x128xf32>
      %239 = vector.shape_cast %236 : vector<8x128xf32> to vector<1x8x128xf32>
      tpu.vector_store %arg13[%c5_83, %c0_84, %c0_85], %239 {strides = array<i32>} : memref<8x8x128xf32, #tpu.memory_space<vmem>>, vector<1x8x128xf32>,
      %240 = arith.truncf %236 : vector<8x128xf32> to vector<8x128xbf16>
      %cst_86 = arith.constant dense<0.000000e+00> : vector<8x384xf32>
      %241 = tpu.matmul %240, %15, %cst_86 {dimension_numbers = #tpu.dot_dimension_numbers<[1], [0], [0], [1], [0, 0, 1, 1], [], []>} : vector<8x128xbf16>, vector<128x384xbf16>, vector<8x384xf32> -> vector<8x384xf32>
      %c6 = arith.constant 6 : index
      %c0_87 = arith.constant 0 : index
      %c0_88 = arith.constant 0 : index
      %242 = vector.load %arg14[%c6, %c0_87, %c0_88] : memref<8x8x384xf32, #tpu.memory_space<vmem>>, vector<1x8x384xf32>
      %243 = vector.shape_cast %242 : vector<1x8x384xf32> to vector<8x384xf32>
      %244 = vector.extract_strided_slice %243 {offsets = [0, 0], sizes = [8, 128], strides = [1, 1]} : vector<8x384xf32> to vector<8x128xf32>
      %245 = vector.extract_strided_slice %241 {offsets = [0, 0], sizes = [8, 128], strides = [1, 1]} : vector<8x384xf32> to vector<8x128xf32>
      %246 = arith.addf %244, %245 : vector<8x128xf32>
      %247 = arith.negf %246 : vector<8x128xf32>
      %248 = math.exp %247 : vector<8x128xf32>
      %cst_89 = arith.constant 1.000000e+00 : f32
      %249 = vector.broadcast %cst_89 : f32 to vector<8x128xf32>
      %250 = arith.addf %249, %248 : vector<8x128xf32>
      %251 = arith.divf %249, %250 : vector<8x128xf32>
      %252 = vector.extract_strided_slice %243 {offsets = [0, 128], sizes = [8, 128], strides = [1, 1]} : vector<8x384xf32> to vector<8x128xf32>
      %253 = vector.extract_strided_slice %241 {offsets = [0, 128], sizes = [8, 128], strides = [1, 1]} : vector<8x384xf32> to vector<8x128xf32>
      %254 = arith.addf %252, %253 : vector<8x128xf32>
      %255 = arith.negf %254 : vector<8x128xf32>
      %256 = math.exp %255 : vector<8x128xf32>
      %cst_90 = arith.constant 1.000000e+00 : f32
      %257 = vector.broadcast %cst_90 : f32 to vector<8x128xf32>
      %258 = arith.addf %257, %256 : vector<8x128xf32>
      %259 = arith.divf %257, %258 : vector<8x128xf32>
      %260 = vector.extract_strided_slice %243 {offsets = [0, 256], sizes = [8, 128], strides = [1, 1]} : vector<8x384xf32> to vector<8x128xf32>
      %261 = vector.extract_strided_slice %241 {offsets = [0, 256], sizes = [8, 128], strides = [1, 1]} : vector<8x384xf32> to vector<8x128xf32>
      %262 = vector.broadcast %19 : vector<1x128xf32> to vector<8x128xf32>
      %263 = arith.addf %261, %262 : vector<8x128xf32>
      %264 = arith.mulf %251, %263 : vector<8x128xf32>
      %265 = arith.addf %260, %264 : vector<8x128xf32>
      %266 = math.tanh %265 : vector<8x128xf32>
      %cst_91 = arith.constant 1.000000e+00 : f32
      %267 = vector.broadcast %cst_91 : f32 to vector<8x128xf32>
      %268 = arith.subf %267, %259 : vector<8x128xf32>
      %269 = arith.mulf %268, %266 : vector<8x128xf32>
      %270 = arith.mulf %259, %236 : vector<8x128xf32>
      %271 = arith.addf %269, %270 : vector<8x128xf32>
      %c6_92 = arith.constant 6 : index
      %c0_93 = arith.constant 0 : index
      %c0_94 = arith.constant 0 : index
      %272 = vector.load %arg13[%c6_92, %c0_93, %c0_94] : memref<8x8x128xf32, #tpu.memory_space<vmem>>, vector<1x8x128xf32>
      %273 = vector.shape_cast %272 : vector<1x8x128xf32> to vector<8x128xf32>
      %274 = vector.shape_cast %271 : vector<8x128xf32> to vector<1x8x128xf32>
      tpu.vector_store %arg13[%c6_92, %c0_93, %c0_94], %274 {strides = array<i32>} : memref<8x8x128xf32, #tpu.memory_space<vmem>>, vector<1x8x128xf32>,
      %275 = arith.truncf %271 : vector<8x128xf32> to vector<8x128xbf16>
      %cst_95 = arith.constant dense<0.000000e+00> : vector<8x384xf32>
      %276 = tpu.matmul %275, %15, %cst_95 {dimension_numbers = #tpu.dot_dimension_numbers<[1], [0], [0], [1], [0, 0, 1, 1], [], []>} : vector<8x128xbf16>, vector<128x384xbf16>, vector<8x384xf32> -> vector<8x384xf32>
      %c7 = arith.constant 7 : index
      %c0_96 = arith.constant 0 : index
      %c0_97 = arith.constant 0 : index
      %277 = vector.load %arg14[%c7, %c0_96, %c0_97] : memref<8x8x384xf32, #tpu.memory_space<vmem>>, vector<1x8x384xf32>
      %278 = vector.shape_cast %277 : vector<1x8x384xf32> to vector<8x384xf32>
      %279 = vector.extract_strided_slice %278 {offsets = [0, 0], sizes = [8, 128], strides = [1, 1]} : vector<8x384xf32> to vector<8x128xf32>
      %280 = vector.extract_strided_slice %276 {offsets = [0, 0], sizes = [8, 128], strides = [1, 1]} : vector<8x384xf32> to vector<8x128xf32>
      %281 = arith.addf %279, %280 : vector<8x128xf32>
      %282 = arith.negf %281 : vector<8x128xf32>
      %283 = math.exp %282 : vector<8x128xf32>
      %cst_98 = arith.constant 1.000000e+00 : f32
      %284 = vector.broadcast %cst_98 : f32 to vector<8x128xf32>
      %285 = arith.addf %284, %283 : vector<8x128xf32>
      %286 = arith.divf %284, %285 : vector<8x128xf32>
      %287 = vector.extract_strided_slice %278 {offsets = [0, 128], sizes = [8, 128], strides = [1, 1]} : vector<8x384xf32> to vector<8x128xf32>
      %288 = vector.extract_strided_slice %276 {offsets = [0, 128], sizes = [8, 128], strides = [1, 1]} : vector<8x384xf32> to vector<8x128xf32>
      %289 = arith.addf %287, %288 : vector<8x128xf32>
      %290 = arith.negf %289 : vector<8x128xf32>
      %291 = math.exp %290 : vector<8x128xf32>
      %cst_99 = arith.constant 1.000000e+00 : f32
      %292 = vector.broadcast %cst_99 : f32 to vector<8x128xf32>
      %293 = arith.addf %292, %291 : vector<8x128xf32>
      %294 = arith.divf %292, %293 : vector<8x128xf32>
      %295 = vector.extract_strided_slice %278 {offsets = [0, 256], sizes = [8, 128], strides = [1, 1]} : vector<8x384xf32> to vector<8x128xf32>
      %296 = vector.extract_strided_slice %276 {offsets = [0, 256], sizes = [8, 128], strides = [1, 1]} : vector<8x384xf32> to vector<8x128xf32>
      %297 = vector.broadcast %19 : vector<1x128xf32> to vector<8x128xf32>
      %298 = arith.addf %296, %297 : vector<8x128xf32>
      %299 = arith.mulf %286, %298 : vector<8x128xf32>
      %300 = arith.addf %295, %299 : vector<8x128xf32>
      %301 = math.tanh %300 : vector<8x128xf32>
      %cst_100 = arith.constant 1.000000e+00 : f32
      %302 = vector.broadcast %cst_100 : f32 to vector<8x128xf32>
      %303 = arith.subf %302, %294 : vector<8x128xf32>
      %304 = arith.mulf %303, %301 : vector<8x128xf32>
      %305 = arith.mulf %294, %271 : vector<8x128xf32>
      %306 = arith.addf %304, %305 : vector<8x128xf32>
      %c7_101 = arith.constant 7 : index
      %c0_102 = arith.constant 0 : index
      %c0_103 = arith.constant 0 : index
      %307 = vector.load %arg13[%c7_101, %c0_102, %c0_103] : memref<8x8x128xf32, #tpu.memory_space<vmem>>, vector<1x8x128xf32>
      %308 = vector.shape_cast %307 : vector<1x8x128xf32> to vector<8x128xf32>
      %309 = vector.shape_cast %306 : vector<8x128xf32> to vector<1x8x128xf32>
      tpu.vector_store %arg13[%c7_101, %c0_102, %c0_103], %309 {strides = array<i32>} : memref<8x8x128xf32, #tpu.memory_space<vmem>>, vector<1x8x128xf32>,
      %c0_104 = arith.constant 0 : index
      %c0_105 = arith.constant 0 : index
      %c0_106 = arith.constant 0 : index
      %310 = vector.load %arg12[%c0_104, %c0_105, %c0_106] : memref<2x8x128xf32, #tpu.memory_space<vmem>>, vector<1x8x128xf32>
      %311 = vector.shape_cast %310 : vector<1x8x128xf32> to vector<8x128xf32>
      %312 = vector.shape_cast %306 : vector<8x128xf32> to vector<1x8x128xf32>
      tpu.vector_store %arg12[%c0_104, %c0_105, %c0_106], %312 {strides = array<i32>} : memref<2x8x128xf32, #tpu.memory_space<vmem>>, vector<1x8x128xf32>,
      %c0_107 = arith.constant 0 : index
      %c0_108 = arith.constant 0 : index
      %c0_109 = arith.constant 0 : index
      %313 = vector.load %arg5[%c0_107, %c0_108, %c0_109] : memref<1x128x384xbf16, #tpu.memory_space<vmem>>, vector<1x128x384xbf16>
      %314 = vector.shape_cast %313 : vector<1x128x384xbf16> to vector<128x384xbf16>
      %c1_110 = arith.constant 1 : index
      %c0_111 = arith.constant 0 : index
      %c0_112 = arith.constant 0 : index
      %315 = vector.load %arg6[%c1_110, %c0_111, %c0_112] : memref<2x128x384xbf16, #tpu.memory_space<vmem>>, vector<1x128x384xbf16>
      %316 = vector.shape_cast %315 : vector<1x128x384xbf16> to vector<128x384xbf16>
      %c1_113 = arith.constant 1 : index
      %c0_114 = arith.constant 0 : index
      %c0_115 = arith.constant 0 : index
      %317 = vector.load %arg7[%c1_113, %c0_114, %c0_115] : memref<2x1x384xf32, #tpu.memory_space<vmem>>, vector<1x1x384xf32>
      %318 = vector.shape_cast %317 : vector<1x1x384xf32> to vector<1x384xf32>
      %c1_116 = arith.constant 1 : index
      %c0_117 = arith.constant 0 : index
      %c0_118 = arith.constant 0 : index
      %319 = vector.load %arg8[%c1_116, %c0_117, %c0_118] : memref<2x1x128xf32, #tpu.memory_space<vmem>>, vector<1x1x128xf32>
      %320 = vector.shape_cast %319 : vector<1x1x128xf32> to vector<1x128xf32>
      %c1_119 = arith.constant 1 : index
      %c0_120 = arith.constant 0 : index
      %c0_121 = arith.constant 0 : index
      %321 = vector.load %arg3[%c1_119, %c0_120, %c0_121] : memref<2x8x128xf32, #tpu.memory_space<vmem>>, vector<1x8x128xf32>
      %322 = vector.shape_cast %321 : vector<1x8x128xf32> to vector<8x128xf32>
      %c0_122 = arith.constant 0 : index
      %c0_123 = arith.constant 0 : index
      %c0_124 = arith.constant 0 : index
      %323 = vector.load %arg13[%c0_122, %c0_123, %c0_124] : memref<8x8x128xf32, #tpu.memory_space<vmem>>, vector<8x8x128xf32>
      %324 = vector.shape_cast %323 : vector<8x8x128xf32> to vector<64x128xf32>
      %325 = arith.truncf %324 : vector<64x128xf32> to vector<64x128xbf16>
      %cst_125 = arith.constant dense<0.000000e+00> : vector<64x384xf32>
      %326 = tpu.matmul %325, %314, %cst_125 {dimension_numbers = #tpu.dot_dimension_numbers<[1], [0], [0], [1], [0, 0, 1, 1], [], []>} : vector<64x128xbf16>, vector<128x384xbf16>, vector<64x384xf32> -> vector<64x384xf32>
      %327 = vector.broadcast %318 : vector<1x384xf32> to vector<64x384xf32>
      %328 = arith.addf %326, %327 : vector<64x384xf32>
      %329 = vector.shape_cast %328 : vector<64x384xf32> to vector<8x8x384xf32>
      %c0_126 = arith.constant 0 : index
      %c0_127 = arith.constant 0 : index
      %c0_128 = arith.constant 0 : index
      %330 = vector.load %arg14[%c0_126, %c0_127, %c0_128] : memref<8x8x384xf32, #tpu.memory_space<vmem>>, vector<8x8x384xf32>
      tpu.vector_store %arg14[%c0_126, %c0_127, %c0_128], %329 {strides = array<i32>} : memref<8x8x384xf32, #tpu.memory_space<vmem>>, vector<8x8x384xf32>,
      %331 = arith.truncf %322 : vector<8x128xf32> to vector<8x128xbf16>
      %cst_129 = arith.constant dense<0.000000e+00> : vector<8x384xf32>
      %332 = tpu.matmul %331, %316, %cst_129 {dimension_numbers = #tpu.dot_dimension_numbers<[1], [0], [0], [1], [0, 0, 1, 1], [], []>} : vector<8x128xbf16>, vector<128x384xbf16>, vector<8x384xf32> -> vector<8x384xf32>
      %c0_130 = arith.constant 0 : index
      %c0_131 = arith.constant 0 : index
      %c0_132 = arith.constant 0 : index
      %333 = vector.load %arg14[%c0_130, %c0_131, %c0_132] : memref<8x8x384xf32, #tpu.memory_space<vmem>>, vector<1x8x384xf32>
      %334 = vector.shape_cast %333 : vector<1x8x384xf32> to vector<8x384xf32>
      %335 = vector.extract_strided_slice %334 {offsets = [0, 0], sizes = [8, 128], strides = [1, 1]} : vector<8x384xf32> to vector<8x128xf32>
      %336 = vector.extract_strided_slice %332 {offsets = [0, 0], sizes = [8, 128], strides = [1, 1]} : vector<8x384xf32> to vector<8x128xf32>
      %337 = arith.addf %335, %336 : vector<8x128xf32>
      %338 = arith.negf %337 : vector<8x128xf32>
      %339 = math.exp %338 : vector<8x128xf32>
      %cst_133 = arith.constant 1.000000e+00 : f32
      %340 = vector.broadcast %cst_133 : f32 to vector<8x128xf32>
      %341 = arith.addf %340, %339 : vector<8x128xf32>
      %342 = arith.divf %340, %341 : vector<8x128xf32>
      %343 = vector.extract_strided_slice %334 {offsets = [0, 128], sizes = [8, 128], strides = [1, 1]} : vector<8x384xf32> to vector<8x128xf32>
      %344 = vector.extract_strided_slice %332 {offsets = [0, 128], sizes = [8, 128], strides = [1, 1]} : vector<8x384xf32> to vector<8x128xf32>
      %345 = arith.addf %343, %344 : vector<8x128xf32>
      %346 = arith.negf %345 : vector<8x128xf32>
      %347 = math.exp %346 : vector<8x128xf32>
      %cst_134 = arith.constant 1.000000e+00 : f32
      %348 = vector.broadcast %cst_134 : f32 to vector<8x128xf32>
      %349 = arith.addf %348, %347 : vector<8x128xf32>
      %350 = arith.divf %348, %349 : vector<8x128xf32>
      %351 = vector.extract_strided_slice %334 {offsets = [0, 256], sizes = [8, 128], strides = [1, 1]} : vector<8x384xf32> to vector<8x128xf32>
      %352 = vector.extract_strided_slice %332 {offsets = [0, 256], sizes = [8, 128], strides = [1, 1]} : vector<8x384xf32> to vector<8x128xf32>
      %353 = vector.broadcast %320 : vector<1x128xf32> to vector<8x128xf32>
      %354 = arith.addf %352, %353 : vector<8x128xf32>
      %355 = arith.mulf %342, %354 : vector<8x128xf32>
      %356 = arith.addf %351, %355 : vector<8x128xf32>
      %357 = math.tanh %356 : vector<8x128xf32>
      %cst_135 = arith.constant 1.000000e+00 : f32
      %358 = vector.broadcast %cst_135 : f32 to vector<8x128xf32>
      %359 = arith.subf %358, %350 : vector<8x128xf32>
      %360 = arith.mulf %359, %357 : vector<8x128xf32>
      %361 = arith.mulf %350, %322 : vector<8x128xf32>
      %362 = arith.addf %360, %361 : vector<8x128xf32>
      %c0_136 = arith.constant 0 : index
      %c0_137 = arith.constant 0 : index
      %c0_138 = arith.constant 0 : index
      %363 = vector.load %arg13[%c0_136, %c0_137, %c0_138] : memref<8x8x128xf32, #tpu.memory_space<vmem>>, vector<1x8x128xf32>
      %364 = vector.shape_cast %363 : vector<1x8x128xf32> to vector<8x128xf32>
      %365 = vector.shape_cast %362 : vector<8x128xf32> to vector<1x8x128xf32>
      tpu.vector_store %arg13[%c0_136, %c0_137, %c0_138], %365 {strides = array<i32>} : memref<8x8x128xf32, #tpu.memory_space<vmem>>, vector<1x8x128xf32>,
      %366 = arith.truncf %362 : vector<8x128xf32> to vector<8x128xbf16>
      %cst_139 = arith.constant dense<0.000000e+00> : vector<8x384xf32>
      %367 = tpu.matmul %366, %316, %cst_139 {dimension_numbers = #tpu.dot_dimension_numbers<[1], [0], [0], [1], [0, 0, 1, 1], [], []>} : vector<8x128xbf16>, vector<128x384xbf16>, vector<8x384xf32> -> vector<8x384xf32>
      %c1_140 = arith.constant 1 : index
      %c0_141 = arith.constant 0 : index
      %c0_142 = arith.constant 0 : index
      %368 = vector.load %arg14[%c1_140, %c0_141, %c0_142] : memref<8x8x384xf32, #tpu.memory_space<vmem>>, vector<1x8x384xf32>
      %369 = vector.shape_cast %368 : vector<1x8x384xf32> to vector<8x384xf32>
      %370 = vector.extract_strided_slice %369 {offsets = [0, 0], sizes = [8, 128], strides = [1, 1]} : vector<8x384xf32> to vector<8x128xf32>
      %371 = vector.extract_strided_slice %367 {offsets = [0, 0], sizes = [8, 128], strides = [1, 1]} : vector<8x384xf32> to vector<8x128xf32>
      %372 = arith.addf %370, %371 : vector<8x128xf32>
      %373 = arith.negf %372 : vector<8x128xf32>
      %374 = math.exp %373 : vector<8x128xf32>
      %cst_143 = arith.constant 1.000000e+00 : f32
      %375 = vector.broadcast %cst_143 : f32 to vector<8x128xf32>
      %376 = arith.addf %375, %374 : vector<8x128xf32>
      %377 = arith.divf %375, %376 : vector<8x128xf32>
      %378 = vector.extract_strided_slice %369 {offsets = [0, 128], sizes = [8, 128], strides = [1, 1]} : vector<8x384xf32> to vector<8x128xf32>
      %379 = vector.extract_strided_slice %367 {offsets = [0, 128], sizes = [8, 128], strides = [1, 1]} : vector<8x384xf32> to vector<8x128xf32>
      %380 = arith.addf %378, %379 : vector<8x128xf32>
      %381 = arith.negf %380 : vector<8x128xf32>
      %382 = math.exp %381 : vector<8x128xf32>
      %cst_144 = arith.constant 1.000000e+00 : f32
      %383 = vector.broadcast %cst_144 : f32 to vector<8x128xf32>
      %384 = arith.addf %383, %382 : vector<8x128xf32>
      %385 = arith.divf %383, %384 : vector<8x128xf32>
      %386 = vector.extract_strided_slice %369 {offsets = [0, 256], sizes = [8, 128], strides = [1, 1]} : vector<8x384xf32> to vector<8x128xf32>
      %387 = vector.extract_strided_slice %367 {offsets = [0, 256], sizes = [8, 128], strides = [1, 1]} : vector<8x384xf32> to vector<8x128xf32>
      %388 = vector.broadcast %320 : vector<1x128xf32> to vector<8x128xf32>
      %389 = arith.addf %387, %388 : vector<8x128xf32>
      %390 = arith.mulf %377, %389 : vector<8x128xf32>
      %391 = arith.addf %386, %390 : vector<8x128xf32>
      %392 = math.tanh %391 : vector<8x128xf32>
      %cst_145 = arith.constant 1.000000e+00 : f32
      %393 = vector.broadcast %cst_145 : f32 to vector<8x128xf32>
      %394 = arith.subf %393, %385 : vector<8x128xf32>
      %395 = arith.mulf %394, %392 : vector<8x128xf32>
      %396 = arith.mulf %385, %362 : vector<8x128xf32>
      %397 = arith.addf %395, %396 : vector<8x128xf32>
      %c1_146 = arith.constant 1 : index
      %c0_147 = arith.constant 0 : index
      %c0_148 = arith.constant 0 : index
      %398 = vector.load %arg13[%c1_146, %c0_147, %c0_148] : memref<8x8x128xf32, #tpu.memory_space<vmem>>, vector<1x8x128xf32>
      %399 = vector.shape_cast %398 : vector<1x8x128xf32> to vector<8x128xf32>
      %400 = vector.shape_cast %397 : vector<8x128xf32> to vector<1x8x128xf32>
      tpu.vector_store %arg13[%c1_146, %c0_147, %c0_148], %400 {strides = array<i32>} : memref<8x8x128xf32, #tpu.memory_space<vmem>>, vector<1x8x128xf32>,
      %401 = arith.truncf %397 : vector<8x128xf32> to vector<8x128xbf16>
      %cst_149 = arith.constant dense<0.000000e+00> : vector<8x384xf32>
      %402 = tpu.matmul %401, %316, %cst_149 {dimension_numbers = #tpu.dot_dimension_numbers<[1], [0], [0], [1], [0, 0, 1, 1], [], []>} : vector<8x128xbf16>, vector<128x384xbf16>, vector<8x384xf32> -> vector<8x384xf32>
      %c2_150 = arith.constant 2 : index
      %c0_151 = arith.constant 0 : index
      %c0_152 = arith.constant 0 : index
      %403 = vector.load %arg14[%c2_150, %c0_151, %c0_152] : memref<8x8x384xf32, #tpu.memory_space<vmem>>, vector<1x8x384xf32>
      %404 = vector.shape_cast %403 : vector<1x8x384xf32> to vector<8x384xf32>
      %405 = vector.extract_strided_slice %404 {offsets = [0, 0], sizes = [8, 128], strides = [1, 1]} : vector<8x384xf32> to vector<8x128xf32>
      %406 = vector.extract_strided_slice %402 {offsets = [0, 0], sizes = [8, 128], strides = [1, 1]} : vector<8x384xf32> to vector<8x128xf32>
      %407 = arith.addf %405, %406 : vector<8x128xf32>
      %408 = arith.negf %407 : vector<8x128xf32>
      %409 = math.exp %408 : vector<8x128xf32>
      %cst_153 = arith.constant 1.000000e+00 : f32
      %410 = vector.broadcast %cst_153 : f32 to vector<8x128xf32>
      %411 = arith.addf %410, %409 : vector<8x128xf32>
      %412 = arith.divf %410, %411 : vector<8x128xf32>
      %413 = vector.extract_strided_slice %404 {offsets = [0, 128], sizes = [8, 128], strides = [1, 1]} : vector<8x384xf32> to vector<8x128xf32>
      %414 = vector.extract_strided_slice %402 {offsets = [0, 128], sizes = [8, 128], strides = [1, 1]} : vector<8x384xf32> to vector<8x128xf32>
      %415 = arith.addf %413, %414 : vector<8x128xf32>
      %416 = arith.negf %415 : vector<8x128xf32>
      %417 = math.exp %416 : vector<8x128xf32>
      %cst_154 = arith.constant 1.000000e+00 : f32
      %418 = vector.broadcast %cst_154 : f32 to vector<8x128xf32>
      %419 = arith.addf %418, %417 : vector<8x128xf32>
      %420 = arith.divf %418, %419 : vector<8x128xf32>
      %421 = vector.extract_strided_slice %404 {offsets = [0, 256], sizes = [8, 128], strides = [1, 1]} : vector<8x384xf32> to vector<8x128xf32>
      %422 = vector.extract_strided_slice %402 {offsets = [0, 256], sizes = [8, 128], strides = [1, 1]} : vector<8x384xf32> to vector<8x128xf32>
      %423 = vector.broadcast %320 : vector<1x128xf32> to vector<8x128xf32>
      %424 = arith.addf %422, %423 : vector<8x128xf32>
      %425 = arith.mulf %412, %424 : vector<8x128xf32>
      %426 = arith.addf %421, %425 : vector<8x128xf32>
      %427 = math.tanh %426 : vector<8x128xf32>
      %cst_155 = arith.constant 1.000000e+00 : f32
      %428 = vector.broadcast %cst_155 : f32 to vector<8x128xf32>
      %429 = arith.subf %428, %420 : vector<8x128xf32>
      %430 = arith.mulf %429, %427 : vector<8x128xf32>
      %431 = arith.mulf %420, %397 : vector<8x128xf32>
      %432 = arith.addf %430, %431 : vector<8x128xf32>
      %c2_156 = arith.constant 2 : index
      %c0_157 = arith.constant 0 : index
      %c0_158 = arith.constant 0 : index
      %433 = vector.load %arg13[%c2_156, %c0_157, %c0_158] : memref<8x8x128xf32, #tpu.memory_space<vmem>>, vector<1x8x128xf32>
      %434 = vector.shape_cast %433 : vector<1x8x128xf32> to vector<8x128xf32>
      %435 = vector.shape_cast %432 : vector<8x128xf32> to vector<1x8x128xf32>
      tpu.vector_store %arg13[%c2_156, %c0_157, %c0_158], %435 {strides = array<i32>} : memref<8x8x128xf32, #tpu.memory_space<vmem>>, vector<1x8x128xf32>,
      %436 = arith.truncf %432 : vector<8x128xf32> to vector<8x128xbf16>
      %cst_159 = arith.constant dense<0.000000e+00> : vector<8x384xf32>
      %437 = tpu.matmul %436, %316, %cst_159 {dimension_numbers = #tpu.dot_dimension_numbers<[1], [0], [0], [1], [0, 0, 1, 1], [], []>} : vector<8x128xbf16>, vector<128x384xbf16>, vector<8x384xf32> -> vector<8x384xf32>
      %c3_160 = arith.constant 3 : index
      %c0_161 = arith.constant 0 : index
      %c0_162 = arith.constant 0 : index
      %438 = vector.load %arg14[%c3_160, %c0_161, %c0_162] : memref<8x8x384xf32, #tpu.memory_space<vmem>>, vector<1x8x384xf32>
      %439 = vector.shape_cast %438 : vector<1x8x384xf32> to vector<8x384xf32>
      %440 = vector.extract_strided_slice %439 {offsets = [0, 0], sizes = [8, 128], strides = [1, 1]} : vector<8x384xf32> to vector<8x128xf32>
      %441 = vector.extract_strided_slice %437 {offsets = [0, 0], sizes = [8, 128], strides = [1, 1]} : vector<8x384xf32> to vector<8x128xf32>
      %442 = arith.addf %440, %441 : vector<8x128xf32>
      %443 = arith.negf %442 : vector<8x128xf32>
      %444 = math.exp %443 : vector<8x128xf32>
      %cst_163 = arith.constant 1.000000e+00 : f32
      %445 = vector.broadcast %cst_163 : f32 to vector<8x128xf32>
      %446 = arith.addf %445, %444 : vector<8x128xf32>
      %447 = arith.divf %445, %446 : vector<8x128xf32>
      %448 = vector.extract_strided_slice %439 {offsets = [0, 128], sizes = [8, 128], strides = [1, 1]} : vector<8x384xf32> to vector<8x128xf32>
      %449 = vector.extract_strided_slice %437 {offsets = [0, 128], sizes = [8, 128], strides = [1, 1]} : vector<8x384xf32> to vector<8x128xf32>
      %450 = arith.addf %448, %449 : vector<8x128xf32>
      %451 = arith.negf %450 : vector<8x128xf32>
      %452 = math.exp %451 : vector<8x128xf32>
      %cst_164 = arith.constant 1.000000e+00 : f32
      %453 = vector.broadcast %cst_164 : f32 to vector<8x128xf32>
      %454 = arith.addf %453, %452 : vector<8x128xf32>
      %455 = arith.divf %453, %454 : vector<8x128xf32>
      %456 = vector.extract_strided_slice %439 {offsets = [0, 256], sizes = [8, 128], strides = [1, 1]} : vector<8x384xf32> to vector<8x128xf32>
      %457 = vector.extract_strided_slice %437 {offsets = [0, 256], sizes = [8, 128], strides = [1, 1]} : vector<8x384xf32> to vector<8x128xf32>
      %458 = vector.broadcast %320 : vector<1x128xf32> to vector<8x128xf32>
      %459 = arith.addf %457, %458 : vector<8x128xf32>
      %460 = arith.mulf %447, %459 : vector<8x128xf32>
      %461 = arith.addf %456, %460 : vector<8x128xf32>
      %462 = math.tanh %461 : vector<8x128xf32>
      %cst_165 = arith.constant 1.000000e+00 : f32
      %463 = vector.broadcast %cst_165 : f32 to vector<8x128xf32>
      %464 = arith.subf %463, %455 : vector<8x128xf32>
      %465 = arith.mulf %464, %462 : vector<8x128xf32>
      %466 = arith.mulf %455, %432 : vector<8x128xf32>
      %467 = arith.addf %465, %466 : vector<8x128xf32>
      %c3_166 = arith.constant 3 : index
      %c0_167 = arith.constant 0 : index
      %c0_168 = arith.constant 0 : index
      %468 = vector.load %arg13[%c3_166, %c0_167, %c0_168] : memref<8x8x128xf32, #tpu.memory_space<vmem>>, vector<1x8x128xf32>
      %469 = vector.shape_cast %468 : vector<1x8x128xf32> to vector<8x128xf32>
      %470 = vector.shape_cast %467 : vector<8x128xf32> to vector<1x8x128xf32>
      tpu.vector_store %arg13[%c3_166, %c0_167, %c0_168], %470 {strides = array<i32>} : memref<8x8x128xf32, #tpu.memory_space<vmem>>, vector<1x8x128xf32>,
      %471 = arith.truncf %467 : vector<8x128xf32> to vector<8x128xbf16>
      %cst_169 = arith.constant dense<0.000000e+00> : vector<8x384xf32>
      %472 = tpu.matmul %471, %316, %cst_169 {dimension_numbers = #tpu.dot_dimension_numbers<[1], [0], [0], [1], [0, 0, 1, 1], [], []>} : vector<8x128xbf16>, vector<128x384xbf16>, vector<8x384xf32> -> vector<8x384xf32>
      %c4_170 = arith.constant 4 : index
      %c0_171 = arith.constant 0 : index
      %c0_172 = arith.constant 0 : index
      %473 = vector.load %arg14[%c4_170, %c0_171, %c0_172] : memref<8x8x384xf32, #tpu.memory_space<vmem>>, vector<1x8x384xf32>
      %474 = vector.shape_cast %473 : vector<1x8x384xf32> to vector<8x384xf32>
      %475 = vector.extract_strided_slice %474 {offsets = [0, 0], sizes = [8, 128], strides = [1, 1]} : vector<8x384xf32> to vector<8x128xf32>
      %476 = vector.extract_strided_slice %472 {offsets = [0, 0], sizes = [8, 128], strides = [1, 1]} : vector<8x384xf32> to vector<8x128xf32>
      %477 = arith.addf %475, %476 : vector<8x128xf32>
      %478 = arith.negf %477 : vector<8x128xf32>
      %479 = math.exp %478 : vector<8x128xf32>
      %cst_173 = arith.constant 1.000000e+00 : f32
      %480 = vector.broadcast %cst_173 : f32 to vector<8x128xf32>
      %481 = arith.addf %480, %479 : vector<8x128xf32>
      %482 = arith.divf %480, %481 : vector<8x128xf32>
      %483 = vector.extract_strided_slice %474 {offsets = [0, 128], sizes = [8, 128], strides = [1, 1]} : vector<8x384xf32> to vector<8x128xf32>
      %484 = vector.extract_strided_slice %472 {offsets = [0, 128], sizes = [8, 128], strides = [1, 1]} : vector<8x384xf32> to vector<8x128xf32>
      %485 = arith.addf %483, %484 : vector<8x128xf32>
      %486 = arith.negf %485 : vector<8x128xf32>
      %487 = math.exp %486 : vector<8x128xf32>
      %cst_174 = arith.constant 1.000000e+00 : f32
      %488 = vector.broadcast %cst_174 : f32 to vector<8x128xf32>
      %489 = arith.addf %488, %487 : vector<8x128xf32>
      %490 = arith.divf %488, %489 : vector<8x128xf32>
      %491 = vector.extract_strided_slice %474 {offsets = [0, 256], sizes = [8, 128], strides = [1, 1]} : vector<8x384xf32> to vector<8x128xf32>
      %492 = vector.extract_strided_slice %472 {offsets = [0, 256], sizes = [8, 128], strides = [1, 1]} : vector<8x384xf32> to vector<8x128xf32>
      %493 = vector.broadcast %320 : vector<1x128xf32> to vector<8x128xf32>
      %494 = arith.addf %492, %493 : vector<8x128xf32>
      %495 = arith.mulf %482, %494 : vector<8x128xf32>
      %496 = arith.addf %491, %495 : vector<8x128xf32>
      %497 = math.tanh %496 : vector<8x128xf32>
      %cst_175 = arith.constant 1.000000e+00 : f32
      %498 = vector.broadcast %cst_175 : f32 to vector<8x128xf32>
      %499 = arith.subf %498, %490 : vector<8x128xf32>
      %500 = arith.mulf %499, %497 : vector<8x128xf32>
      %501 = arith.mulf %490, %467 : vector<8x128xf32>
      %502 = arith.addf %500, %501 : vector<8x128xf32>
      %c4_176 = arith.constant 4 : index
      %c0_177 = arith.constant 0 : index
      %c0_178 = arith.constant 0 : index
      %503 = vector.load %arg13[%c4_176, %c0_177, %c0_178] : memref<8x8x128xf32, #tpu.memory_space<vmem>>, vector<1x8x128xf32>
      %504 = vector.shape_cast %503 : vector<1x8x128xf32> to vector<8x128xf32>
      %505 = vector.shape_cast %502 : vector<8x128xf32> to vector<1x8x128xf32>
      tpu.vector_store %arg13[%c4_176, %c0_177, %c0_178], %505 {strides = array<i32>} : memref<8x8x128xf32, #tpu.memory_space<vmem>>, vector<1x8x128xf32>,
      %506 = arith.truncf %502 : vector<8x128xf32> to vector<8x128xbf16>
      %cst_179 = arith.constant dense<0.000000e+00> : vector<8x384xf32>
      %507 = tpu.matmul %506, %316, %cst_179 {dimension_numbers = #tpu.dot_dimension_numbers<[1], [0], [0], [1], [0, 0, 1, 1], [], []>} : vector<8x128xbf16>, vector<128x384xbf16>, vector<8x384xf32> -> vector<8x384xf32>
      %c5_180 = arith.constant 5 : index
      %c0_181 = arith.constant 0 : index
      %c0_182 = arith.constant 0 : index
      %508 = vector.load %arg14[%c5_180, %c0_181, %c0_182] : memref<8x8x384xf32, #tpu.memory_space<vmem>>, vector<1x8x384xf32>
      %509 = vector.shape_cast %508 : vector<1x8x384xf32> to vector<8x384xf32>
      %510 = vector.extract_strided_slice %509 {offsets = [0, 0], sizes = [8, 128], strides = [1, 1]} : vector<8x384xf32> to vector<8x128xf32>
      %511 = vector.extract_strided_slice %507 {offsets = [0, 0], sizes = [8, 128], strides = [1, 1]} : vector<8x384xf32> to vector<8x128xf32>
      %512 = arith.addf %510, %511 : vector<8x128xf32>
      %513 = arith.negf %512 : vector<8x128xf32>
      %514 = math.exp %513 : vector<8x128xf32>
      %cst_183 = arith.constant 1.000000e+00 : f32
      %515 = vector.broadcast %cst_183 : f32 to vector<8x128xf32>
      %516 = arith.addf %515, %514 : vector<8x128xf32>
      %517 = arith.divf %515, %516 : vector<8x128xf32>
      %518 = vector.extract_strided_slice %509 {offsets = [0, 128], sizes = [8, 128], strides = [1, 1]} : vector<8x384xf32> to vector<8x128xf32>
      %519 = vector.extract_strided_slice %507 {offsets = [0, 128], sizes = [8, 128], strides = [1, 1]} : vector<8x384xf32> to vector<8x128xf32>
      %520 = arith.addf %518, %519 : vector<8x128xf32>
      %521 = arith.negf %520 : vector<8x128xf32>
      %522 = math.exp %521 : vector<8x128xf32>
      %cst_184 = arith.constant 1.000000e+00 : f32
      %523 = vector.broadcast %cst_184 : f32 to vector<8x128xf32>
      %524 = arith.addf %523, %522 : vector<8x128xf32>
      %525 = arith.divf %523, %524 : vector<8x128xf32>
      %526 = vector.extract_strided_slice %509 {offsets = [0, 256], sizes = [8, 128], strides = [1, 1]} : vector<8x384xf32> to vector<8x128xf32>
      %527 = vector.extract_strided_slice %507 {offsets = [0, 256], sizes = [8, 128], strides = [1, 1]} : vector<8x384xf32> to vector<8x128xf32>
      %528 = vector.broadcast %320 : vector<1x128xf32> to vector<8x128xf32>
      %529 = arith.addf %527, %528 : vector<8x128xf32>
      %530 = arith.mulf %517, %529 : vector<8x128xf32>
      %531 = arith.addf %526, %530 : vector<8x128xf32>
      %532 = math.tanh %531 : vector<8x128xf32>
      %cst_185 = arith.constant 1.000000e+00 : f32
      %533 = vector.broadcast %cst_185 : f32 to vector<8x128xf32>
      %534 = arith.subf %533, %525 : vector<8x128xf32>
      %535 = arith.mulf %534, %532 : vector<8x128xf32>
      %536 = arith.mulf %525, %502 : vector<8x128xf32>
      %537 = arith.addf %535, %536 : vector<8x128xf32>
      %c5_186 = arith.constant 5 : index
      %c0_187 = arith.constant 0 : index
      %c0_188 = arith.constant 0 : index
      %538 = vector.load %arg13[%c5_186, %c0_187, %c0_188] : memref<8x8x128xf32, #tpu.memory_space<vmem>>, vector<1x8x128xf32>
      %539 = vector.shape_cast %538 : vector<1x8x128xf32> to vector<8x128xf32>
      %540 = vector.shape_cast %537 : vector<8x128xf32> to vector<1x8x128xf32>
      tpu.vector_store %arg13[%c5_186, %c0_187, %c0_188], %540 {strides = array<i32>} : memref<8x8x128xf32, #tpu.memory_space<vmem>>, vector<1x8x128xf32>,
      %541 = arith.truncf %537 : vector<8x128xf32> to vector<8x128xbf16>
      %cst_189 = arith.constant dense<0.000000e+00> : vector<8x384xf32>
      %542 = tpu.matmul %541, %316, %cst_189 {dimension_numbers = #tpu.dot_dimension_numbers<[1], [0], [0], [1], [0, 0, 1, 1], [], []>} : vector<8x128xbf16>, vector<128x384xbf16>, vector<8x384xf32> -> vector<8x384xf32>
      %c6_190 = arith.constant 6 : index
      %c0_191 = arith.constant 0 : index
      %c0_192 = arith.constant 0 : index
      %543 = vector.load %arg14[%c6_190, %c0_191, %c0_192] : memref<8x8x384xf32, #tpu.memory_space<vmem>>, vector<1x8x384xf32>
      %544 = vector.shape_cast %543 : vector<1x8x384xf32> to vector<8x384xf32>
      %545 = vector.extract_strided_slice %544 {offsets = [0, 0], sizes = [8, 128], strides = [1, 1]} : vector<8x384xf32> to vector<8x128xf32>
      %546 = vector.extract_strided_slice %542 {offsets = [0, 0], sizes = [8, 128], strides = [1, 1]} : vector<8x384xf32> to vector<8x128xf32>
      %547 = arith.addf %545, %546 : vector<8x128xf32>
      %548 = arith.negf %547 : vector<8x128xf32>
      %549 = math.exp %548 : vector<8x128xf32>
      %cst_193 = arith.constant 1.000000e+00 : f32
      %550 = vector.broadcast %cst_193 : f32 to vector<8x128xf32>
      %551 = arith.addf %550, %549 : vector<8x128xf32>
      %552 = arith.divf %550, %551 : vector<8x128xf32>
      %553 = vector.extract_strided_slice %544 {offsets = [0, 128], sizes = [8, 128], strides = [1, 1]} : vector<8x384xf32> to vector<8x128xf32>
      %554 = vector.extract_strided_slice %542 {offsets = [0, 128], sizes = [8, 128], strides = [1, 1]} : vector<8x384xf32> to vector<8x128xf32>
      %555 = arith.addf %553, %554 : vector<8x128xf32>
      %556 = arith.negf %555 : vector<8x128xf32>
      %557 = math.exp %556 : vector<8x128xf32>
      %cst_194 = arith.constant 1.000000e+00 : f32
      %558 = vector.broadcast %cst_194 : f32 to vector<8x128xf32>
      %559 = arith.addf %558, %557 : vector<8x128xf32>
      %560 = arith.divf %558, %559 : vector<8x128xf32>
      %561 = vector.extract_strided_slice %544 {offsets = [0, 256], sizes = [8, 128], strides = [1, 1]} : vector<8x384xf32> to vector<8x128xf32>
      %562 = vector.extract_strided_slice %542 {offsets = [0, 256], sizes = [8, 128], strides = [1, 1]} : vector<8x384xf32> to vector<8x128xf32>
      %563 = vector.broadcast %320 : vector<1x128xf32> to vector<8x128xf32>
      %564 = arith.addf %562, %563 : vector<8x128xf32>
      %565 = arith.mulf %552, %564 : vector<8x128xf32>
      %566 = arith.addf %561, %565 : vector<8x128xf32>
      %567 = math.tanh %566 : vector<8x128xf32>
      %cst_195 = arith.constant 1.000000e+00 : f32
      %568 = vector.broadcast %cst_195 : f32 to vector<8x128xf32>
      %569 = arith.subf %568, %560 : vector<8x128xf32>
      %570 = arith.mulf %569, %567 : vector<8x128xf32>
      %571 = arith.mulf %560, %537 : vector<8x128xf32>
      %572 = arith.addf %570, %571 : vector<8x128xf32>
      %c6_196 = arith.constant 6 : index
      %c0_197 = arith.constant 0 : index
      %c0_198 = arith.constant 0 : index
      %573 = vector.load %arg13[%c6_196, %c0_197, %c0_198] : memref<8x8x128xf32, #tpu.memory_space<vmem>>, vector<1x8x128xf32>
      %574 = vector.shape_cast %573 : vector<1x8x128xf32> to vector<8x128xf32>
      %575 = vector.shape_cast %572 : vector<8x128xf32> to vector<1x8x128xf32>
      tpu.vector_store %arg13[%c6_196, %c0_197, %c0_198], %575 {strides = array<i32>} : memref<8x8x128xf32, #tpu.memory_space<vmem>>, vector<1x8x128xf32>,
      %576 = arith.truncf %572 : vector<8x128xf32> to vector<8x128xbf16>
      %cst_199 = arith.constant dense<0.000000e+00> : vector<8x384xf32>
      %577 = tpu.matmul %576, %316, %cst_199 {dimension_numbers = #tpu.dot_dimension_numbers<[1], [0], [0], [1], [0, 0, 1, 1], [], []>} : vector<8x128xbf16>, vector<128x384xbf16>, vector<8x384xf32> -> vector<8x384xf32>
      %c7_200 = arith.constant 7 : index
      %c0_201 = arith.constant 0 : index
      %c0_202 = arith.constant 0 : index
      %578 = vector.load %arg14[%c7_200, %c0_201, %c0_202] : memref<8x8x384xf32, #tpu.memory_space<vmem>>, vector<1x8x384xf32>
      %579 = vector.shape_cast %578 : vector<1x8x384xf32> to vector<8x384xf32>
      %580 = vector.extract_strided_slice %579 {offsets = [0, 0], sizes = [8, 128], strides = [1, 1]} : vector<8x384xf32> to vector<8x128xf32>
      %581 = vector.extract_strided_slice %577 {offsets = [0, 0], sizes = [8, 128], strides = [1, 1]} : vector<8x384xf32> to vector<8x128xf32>
      %582 = arith.addf %580, %581 : vector<8x128xf32>
      %583 = arith.negf %582 : vector<8x128xf32>
      %584 = math.exp %583 : vector<8x128xf32>
      %cst_203 = arith.constant 1.000000e+00 : f32
      %585 = vector.broadcast %cst_203 : f32 to vector<8x128xf32>
      %586 = arith.addf %585, %584 : vector<8x128xf32>
      %587 = arith.divf %585, %586 : vector<8x128xf32>
      %588 = vector.extract_strided_slice %579 {offsets = [0, 128], sizes = [8, 128], strides = [1, 1]} : vector<8x384xf32> to vector<8x128xf32>
      %589 = vector.extract_strided_slice %577 {offsets = [0, 128], sizes = [8, 128], strides = [1, 1]} : vector<8x384xf32> to vector<8x128xf32>
      %590 = arith.addf %588, %589 : vector<8x128xf32>
      %591 = arith.negf %590 : vector<8x128xf32>
      %592 = math.exp %591 : vector<8x128xf32>
      %cst_204 = arith.constant 1.000000e+00 : f32
      %593 = vector.broadcast %cst_204 : f32 to vector<8x128xf32>
      %594 = arith.addf %593, %592 : vector<8x128xf32>
      %595 = arith.divf %593, %594 : vector<8x128xf32>
      %596 = vector.extract_strided_slice %579 {offsets = [0, 256], sizes = [8, 128], strides = [1, 1]} : vector<8x384xf32> to vector<8x128xf32>
      %597 = vector.extract_strided_slice %577 {offsets = [0, 256], sizes = [8, 128], strides = [1, 1]} : vector<8x384xf32> to vector<8x128xf32>
      %598 = vector.broadcast %320 : vector<1x128xf32> to vector<8x128xf32>
      %599 = arith.addf %597, %598 : vector<8x128xf32>
      %600 = arith.mulf %587, %599 : vector<8x128xf32>
      %601 = arith.addf %596, %600 : vector<8x128xf32>
      %602 = math.tanh %601 : vector<8x128xf32>
      %cst_205 = arith.constant 1.000000e+00 : f32
      %603 = vector.broadcast %cst_205 : f32 to vector<8x128xf32>
      %604 = arith.subf %603, %595 : vector<8x128xf32>
      %605 = arith.mulf %604, %602 : vector<8x128xf32>
      %606 = arith.mulf %595, %572 : vector<8x128xf32>
      %607 = arith.addf %605, %606 : vector<8x128xf32>
      %c7_206 = arith.constant 7 : index
      %c0_207 = arith.constant 0 : index
      %c0_208 = arith.constant 0 : index
      %608 = vector.load %arg13[%c7_206, %c0_207, %c0_208] : memref<8x8x128xf32, #tpu.memory_space<vmem>>, vector<1x8x128xf32>
      %609 = vector.shape_cast %608 : vector<1x8x128xf32> to vector<8x128xf32>
      %610 = vector.shape_cast %607 : vector<8x128xf32> to vector<1x8x128xf32>
      tpu.vector_store %arg13[%c7_206, %c0_207, %c0_208], %610 {strides = array<i32>} : memref<8x8x128xf32, #tpu.memory_space<vmem>>, vector<1x8x128xf32>,
      %c1_209 = arith.constant 1 : index
      %c0_210 = arith.constant 0 : index
      %c0_211 = arith.constant 0 : index
      %611 = vector.load %arg12[%c1_209, %c0_210, %c0_211] : memref<2x8x128xf32, #tpu.memory_space<vmem>>, vector<1x8x128xf32>
      %612 = vector.shape_cast %611 : vector<1x8x128xf32> to vector<8x128xf32>
      %613 = vector.shape_cast %607 : vector<8x128xf32> to vector<1x8x128xf32>
      tpu.vector_store %arg12[%c1_209, %c0_210, %c0_211], %613 {strides = array<i32>} : memref<2x8x128xf32, #tpu.memory_space<vmem>>, vector<1x8x128xf32>,
    } else {
    }
    %c0 = arith.constant 0 : index
    %c0_1 = arith.constant 0 : index
    %c0_2 = arith.constant 0 : index
    %3 = vector.load %arg13[%c0, %c0_1, %c0_2] : memref<8x8x128xf32, #tpu.memory_space<vmem>>, vector<8x8x128xf32>
    %4 = vector.shape_cast %3 : vector<8x8x128xf32> to vector<64x128xf32>
    %5 = arith.truncf %4 : vector<64x128xf32> to vector<64x128xbf16>
    %c0_3 = arith.constant 0 : index
    %c0_4 = arith.constant 0 : index
    %6 = vector.load %arg9[%c0_3, %c0_4] : memref<128x128xbf16, #tpu.memory_space<vmem>>, vector<128x128xbf16>
    %cst = arith.constant dense<0.000000e+00> : vector<64x128xf32>
    %7 = tpu.matmul %5, %6, %cst {dimension_numbers = #tpu.dot_dimension_numbers<[1], [0], [0], [1], [0, 0, 1, 1], [], []>} : vector<64x128xbf16>, vector<128x128xbf16>, vector<64x128xf32> -> vector<64x128xf32>
    %c0_5 = arith.constant 0 : index
    %c0_6 = arith.constant 0 : index
    %8 = vector.load %arg10[%c0_5, %c0_6] : memref<1x128xf32, #tpu.memory_space<vmem>>, vector<1x128xf32>
    %9 = vector.broadcast %8 : vector<1x128xf32> to vector<64x128xf32>
    %10 = arith.addf %7, %9 : vector<64x128xf32>
    %11 = vector.shape_cast %10 : vector<64x128xf32> to vector<8x8x128xf32>
    %c0_7 = arith.constant 0 : index
    %c0_8 = arith.constant 0 : index
    %c0_9 = arith.constant 0 : index
    %12 = vector.load %arg11[%c0_7, %c0_8, %c0_9] : memref<8x8x128xf32, #tpu.memory_space<vmem>>, vector<8x8x128xf32>
    tpu.vector_store %arg11[%c0_7, %c0_8, %c0_9], %11 {strides = array<i32>} : memref<8x8x128xf32, #tpu.memory_space<vmem>>, vector<8x8x128xf32>,
    return
  }
  func.func @transform_0(%arg0: i32, %arg1: i32) -> (i32, i32, i32) {
    %c0_i32 = arith.constant 0 : i32
    %c0_i32_0 = arith.constant 0 : i32
    %c0_i32_1 = arith.constant 0 : i32
    return %c0_i32, %arg0, %c0_i32_0 : i32, i32, i32
  }
  func.func @transform_1(%arg0: i32, %arg1: i32) -> (i32, i32, i32) {
    %c0_i32 = arith.constant 0 : i32
    %c0_i32_0 = arith.constant 0 : i32
    %c0_i32_1 = arith.constant 0 : i32
    return %c0_i32, %arg0, %c0_i32_0 : i32, i32, i32
  }
  func.func @transform_2(%arg0: i32, %arg1: i32) -> (i32, i32) {
    %c0_i32 = arith.constant 0 : i32
    %c0_i32_0 = arith.constant 0 : i32
    %c0_i32_1 = arith.constant 0 : i32
    return %c0_i32, %c0_i32_0 : i32, i32
  }
  func.func @transform_3(%arg0: i32, %arg1: i32) -> (i32, i32, i32) {
    %c0_i32 = arith.constant 0 : i32
    %c0_i32_0 = arith.constant 0 : i32
    %c0_i32_1 = arith.constant 0 : i32
    %c0_i32_2 = arith.constant 0 : i32
    return %c0_i32, %c0_i32_0, %c0_i32_1 : i32, i32, i32
  }
  func.func @transform_4(%arg0: i32, %arg1: i32) -> (i32, i32, i32) {
    %c0_i32 = arith.constant 0 : i32
    %c0_i32_0 = arith.constant 0 : i32
    %c0_i32_1 = arith.constant 0 : i32
    %c0_i32_2 = arith.constant 0 : i32
    return %c0_i32, %c0_i32_0, %c0_i32_1 : i32, i32, i32
  }
  func.func @transform_5(%arg0: i32, %arg1: i32) -> (i32, i32, i32) {
    %c0_i32 = arith.constant 0 : i32
    %c0_i32_0 = arith.constant 0 : i32
    %c0_i32_1 = arith.constant 0 : i32
    %c0_i32_2 = arith.constant 0 : i32
    return %c0_i32, %c0_i32_0, %c0_i32_1 : i32, i32, i32
  }
  func.func @transform_6(%arg0: i32, %arg1: i32) -> (i32, i32, i32) {
    %c0_i32 = arith.constant 0 : i32
    %c0_i32_0 = arith.constant 0 : i32
    %c0_i32_1 = arith.constant 0 : i32
    %c0_i32_2 = arith.constant 0 : i32
    return %c0_i32, %c0_i32_0, %c0_i32_1 : i32, i32, i32
  }
  func.func @transform_7(%arg0: i32, %arg1: i32) -> (i32, i32) {
    %c0_i32 = arith.constant 0 : i32
    %c0_i32_0 = arith.constant 0 : i32
    return %c0_i32, %arg1 : i32, i32
  }
  func.func @transform_8(%arg0: i32, %arg1: i32) -> (i32, i32) {
    %c0_i32 = arith.constant 0 : i32
    %c0_i32_0 = arith.constant 0 : i32
    return %c0_i32, %arg1 : i32, i32
  }
  func.func @transform_9(%arg0: i32, %arg1: i32) -> (i32, i32, i32) {
    %c0_i32 = arith.constant 0 : i32
    %c0_i32_0 = arith.constant 0 : i32
    return %c0_i32, %arg0, %arg1 : i32, i32, i32
  }
  func.func @transform_10(%arg0: i32, %arg1: i32) -> (i32, i32, i32) {
    %c0_i32 = arith.constant 0 : i32
    %c0_i32_0 = arith.constant 0 : i32
    %c0_i32_1 = arith.constant 0 : i32
    return %c0_i32, %arg0, %c0_i32_0 : i32, i32, i32
  }
}

</mosaic_0001>

<llo_original>
// kernel: seq2seq_decoder_forward.1
$region0: #{seq2seq_decoder_forward.1}
  #allocation0 [shape = 'u32[]', space=smem, size = 0x4, offset = 0x4, fixed_abs, tag = 'smem constant byte address 0x4 - core index']
  #allocation1 [shape = 'u32[144,128]{1,0:T(1,128)}', space=vmem, size = 0x12000, scoped, tag = 'internal scratch']
  #allocation2 [shape = 'f32[8,8,128]{2,1,0:T(8,128)}', space=vmem, size = 0x8000, scoped, tag = 'scratch operand']
  #allocation3 [shape = 'f32[8,8,384]{2,1,0:T(8,128)}', space=vmem, size = 0x18000, scoped, tag = 'scratch operand']
  %s0 = inlined_call_operand.vmem [shape: f32[8,8,128], index: 0, kind: input, shape index: {}]
  %s1 = inlined_call_operand.vmem [shape: f32[2,8,128], index: 1, kind: input, shape index: {}]
  %s2 = inlined_call_operand.vmem [shape: bf16[128,384], index: 2, kind: input, shape index: {}]
  %s3 = inlined_call_operand.vmem [shape: bf16[1,128,384], index: 3, kind: input, shape index: {}]
  %s4 = inlined_call_operand.vmem [shape: bf16[2,128,384], index: 4, kind: input, shape index: {}]
  %s5 = inlined_call_operand.vmem [shape: f32[2,1,384], index: 5, kind: input, shape index: {}]
  %s6 = inlined_call_operand.vmem [shape: f32[2,1,128], index: 6, kind: input, shape index: {}]
  %s7 = inlined_call_operand.vmem [shape: bf16[128,128], index: 7, kind: input, shape index: {}]
  %s8 = inlined_call_operand.vmem [shape: f32[1,128], index: 8, kind: input, shape index: {}]
  %s9 = inlined_call_operand.vmem [shape: f32[8,8,128], index: 9, kind: output, shape index: {0}]
  %s10 = inlined_call_operand.vmem [shape: f32[2,8,128], index: 10, kind: output, shape index: {1}]
  %11 = xla_tuple %s9, %s10
  %s12 = sld [smem:[#allocation0]]
  $region58: #{seq2seq_decoder_forward.1} parent=0
    _
  %s14 = ssub.s32 1, %s12
  %s15 = scalar_select 0, %s14, %s12
  // Predicated region
  $region2: #{seq2seq_decoder_forward.1} parent=0 // pred_check
    _
  $region3: #{seq2seq_decoder_forward.1} parent=0 // pred_check_branch
    %17 = sbr.rel (0) target = $region5
  $region4: #{seq2seq_decoder_forward.1} parent=0 // pred_region
    _
  $region5: #{seq2seq_decoder_forward.1} parent=0 // pred_fallthru
    _
  // Predicated region
  $region6: #{seq2seq_decoder_forward.1} parent=0 // pred_check
    _
  $region7: #{seq2seq_decoder_forward.1} parent=0 // pred_check_branch
    %19 = sbr.rel (0) target = $region9
  $region8: #{seq2seq_decoder_forward.1} parent=0 // pred_region
    _
  $region9: #{seq2seq_decoder_forward.1} parent=0 // pred_fallthru
    _
  // Predicated region
  $region10: #{seq2seq_decoder_forward.1} parent=0 // pred_check
    _
  $region11: #{seq2seq_decoder_forward.1} parent=0 // pred_check_branch
    %21 = sbr.rel (0) target = $region13
  $region12: #{seq2seq_decoder_forward.1} parent=0 // pred_region
    _
  $region13: #{seq2seq_decoder_forward.1} parent=0 // pred_fallthru
    _
  // Predicated region
  $region14: #{seq2seq_decoder_forward.1} parent=0 // pred_check
    _
  $region15: #{seq2seq_decoder_forward.1} parent=0 // pred_check_branch
    %23 = sbr.rel (0) target = $region17
  $region16: #{seq2seq_decoder_forward.1} parent=0 // pred_region
    _
  $region17: #{seq2seq_decoder_forward.1} parent=0 // pred_fallthru
    _
  // Predicated region
  $region18: #{seq2seq_decoder_forward.1} parent=0 // pred_check
    _
  $region19: #{seq2seq_decoder_forward.1} parent=0 // pred_check_branch
    %25 = sbr.rel (0) target = $region21
  $region20: #{seq2seq_decoder_forward.1} parent=0 // pred_region
    _
  $region21: #{seq2seq_decoder_forward.1} parent=0 // pred_fallthru
    _
  // Predicated region
  $region22: #{seq2seq_decoder_forward.1} parent=0 // pred_check
    _
  $region23: #{seq2seq_decoder_forward.1} parent=0 // pred_check_branch
    %27 = sbr.rel (0) target = $region25
  $region24: #{seq2seq_decoder_forward.1} parent=0 // pred_region
    _
  $region25: #{seq2seq_decoder_forward.1} parent=0 // pred_fallthru
    _
  // Predicated region
  $region26: #{seq2seq_decoder_forward.1} parent=0 // pred_check
    _
  $region27: #{seq2seq_decoder_forward.1} parent=0 // pred_check_branch
    %29 = sbr.rel (0) target = $region29
  $region28: #{seq2seq_decoder_forward.1} parent=0 // pred_region
    _
  $region29: #{seq2seq_decoder_forward.1} parent=0 // pred_fallthru
    _
  // Predicated region
  $region30: #{seq2seq_decoder_forward.1} parent=0 // pred_check
    _
  $region31: #{seq2seq_decoder_forward.1} parent=0 // pred_check_branch
    %31 = sbr.rel (0) target = $region33
  $region32: #{seq2seq_decoder_forward.1} parent=0 // pred_region
    _
  $region33: #{seq2seq_decoder_forward.1} parent=0 // pred_fallthru
    _
  // Predicated region
  $region34: #{seq2seq_decoder_forward.1} parent=0 // pred_check
    _
  $region35: #{seq2seq_decoder_forward.1} parent=0 // pred_check_branch
    %33 = sbr.rel (0) target = $region37
  $region36: #{seq2seq_decoder_forward.1} parent=0 // pred_region
    _
  $region37: #{seq2seq_decoder_forward.1} parent=0 // pred_fallthru
    _
  %p35 = scmp.eq.s32.totalorder 0, 0
  // Predicated region
  $region38: #{seq2seq_decoder_forward.1} parent=0 // pred_check
    %p36 = pneg %p35
  $region39: #{seq2seq_decoder_forward.1} parent=0 // pred_check_branch
    %38 = sbr.rel (%p36) target = $region41
  $region40: #{seq2seq_decoder_forward.1} parent=0 // pred_region
    %v39 = vld [vmem:[%s2] sm:$0xff]
    %v40 = vld [vmem:[%s2 + $0x8] sm:$0xf]
    %v41 = vld [vmem:[%s2 + $0xc] sm:$0xff]
    %v42 = vld [vmem:[%s2 + $0x14] sm:$0xf]
    %v43 = vld [vmem:[%s2 + $0x18] sm:$0xff]
    %v44 = vld [vmem:[%s2 + $0x20] sm:$0xf]
    %v45 = vld [vmem:[%s2 + $0x24] sm:$0xff]
    %v46 = vld [vmem:[%s2 + $0x2c] sm:$0xf]
    %v47 = vld [vmem:[%s2 + $0x30] sm:$0xff]
    %v48 = vld [vmem:[%s2 + $0x38] sm:$0xf]
    %v49 = vld [vmem:[%s2 + $0x3c] sm:$0xff]
    %v50 = vld [vmem:[%s2 + $0x44] sm:$0xf]
    %v51 = vld [vmem:[%s2 + $0x48] sm:$0xff]
    %v52 = vld [vmem:[%s2 + $0x50] sm:$0xf]
    %v53 = vld [vmem:[%s2 + $0x54] sm:$0xff]
    %v54 = vld [vmem:[%s2 + $0x5c] sm:$0xf]
    %v55 = vld [vmem:[%s2 + $0x60] sm:$0xff]
    %v56 = vld [vmem:[%s2 + $0x68] sm:$0xf]
    %v57 = vld [vmem:[%s2 + $0x6c] sm:$0xff]
    %v58 = vld [vmem:[%s2 + $0x74] sm:$0xf]
    %v59 = vld [vmem:[%s2 + $0x78] sm:$0xff]
    %v60 = vld [vmem:[%s2 + $0x80] sm:$0xf]
    %v61 = vld [vmem:[%s2 + $0x84] sm:$0xff]
    %v62 = vld [vmem:[%s2 + $0x8c] sm:$0xf]
    %v63 = vld [vmem:[%s2 + $0x90] sm:$0xff]
    %v64 = vld [vmem:[%s2 + $0x98] sm:$0xf]
    %v65 = vld [vmem:[%s2 + $0x9c] sm:$0xff]
    %v66 = vld [vmem:[%s2 + $0xa4] sm:$0xf]
    %v67 = vld [vmem:[%s2 + $0xa8] sm:$0xff]
    %v68 = vld [vmem:[%s2 + $0xb0] sm:$0xf]
    %v69 = vld [vmem:[%s2 + $0xb4] sm:$0xff]
    %v70 = vld [vmem:[%s2 + $0xbc] sm:$0xf]
    %v71 = vld [vmem:[%s4] sm:$0xff]
    %v72 = vld [vmem:[%s4 + $0x8] sm:$0xf]
    %v73 = vld [vmem:[%s4 + $0xc] sm:$0xff]
    %v74 = vld [vmem:[%s4 + $0x14] sm:$0xf]
    %v75 = vld [vmem:[%s4 + $0x18] sm:$0xff]
    %v76 = vld [vmem:[%s4 + $0x20] sm:$0xf]
    %v77 = vld [vmem:[%s4 + $0x24] sm:$0xff]
    %v78 = vld [vmem:[%s4 + $0x2c] sm:$0xf]
    %v79 = vld [vmem:[%s4 + $0x30] sm:$0xff]
    %v80 = vld [vmem:[%s4 + $0x38] sm:$0xf]
    %v81 = vld [vmem:[%s4 + $0x3c] sm:$0xff]
    %v82 = vld [vmem:[%s4 + $0x44] sm:$0xf]
    %v83 = vld [vmem:[%s4 + $0x48] sm:$0xff]
    %v84 = vld [vmem:[%s4 + $0x50] sm:$0xf]
    %v85 = vld [vmem:[%s4 + $0x54] sm:$0xff]
    %v86 = vld [vmem:[%s4 + $0x5c] sm:$0xf]
    %v87 = vld [vmem:[%s4 + $0x60] sm:$0xff]
    %v88 = vld [vmem:[%s4 + $0x68] sm:$0xf]
    %v89 = vld [vmem:[%s4 + $0x6c] sm:$0xff]
    %v90 = vld [vmem:[%s4 + $0x74] sm:$0xf]
    %v91 = vld [vmem:[%s4 + $0x78] sm:$0xff]
    %v92 = vld [vmem:[%s4 + $0x80] sm:$0xf]
    %v93 = vld [vmem:[%s4 + $0x84] sm:$0xff]
    %v94 = vld [vmem:[%s4 + $0x8c] sm:$0xf]
    %v95 = vld [vmem:[%s4 + $0x90] sm:$0xff]
    %v96 = vld [vmem:[%s4 + $0x98] sm:$0xf]
    %v97 = vld [vmem:[%s4 + $0x9c] sm:$0xff]
    %v98 = vld [vmem:[%s4 + $0xa4] sm:$0xf]
    %v99 = vld [vmem:[%s4 + $0xa8] sm:$0xff]
    %v100 = vld [vmem:[%s4 + $0xb0] sm:$0xf]
    %v101 = vld [vmem:[%s4 + $0xb4] sm:$0xff]
    %v102 = vld [vmem:[%s4 + $0xbc] sm:$0xf]
    %v103 = vld [vmem:[%s5] sm:$0x7]
    %v104 = vld [vmem:[%s6] sm:$0x1]
    %v105 = vld [vmem:[%s1] sm:$0xff]
    %v106 = vld [vmem:[%s0] sm:$0xff]
    %v107 = vld [vmem:[%s0 + $0x8] sm:$0xff]
    %v108 = vld [vmem:[%s0 + $0x10] sm:$0xff]
    %v109 = vld [vmem:[%s0 + $0x18] sm:$0xff]
    %v110 = vld [vmem:[%s0 + $0x20] sm:$0xff]
    %v111 = vld [vmem:[%s0 + $0x28] sm:$0xff]
    %v112 = vld [vmem:[%s0 + $0x30] sm:$0xff]
    %v113 = vld [vmem:[%s0 + $0x38] sm:$0xff]
    %v114 = vpack.c.bf16 %v107, %v106
    %v115 = vpack.c.bf16 %v109, %v108
    %v116 = vpack.c.bf16 %v111, %v110
    %v117 = vpack.c.bf16 %v113, %v112
    %v119 = vlaneseq
    %v120 = vshrl.u32 %v119, 7
    %v121 = vsub.s32 0, %v120
    %v122 = vrot.slane %v103, %v121
    %v123 = vlaneseq
    %v124 = vshrl.u32 %v123, 7
    %v125 = vsub.s32 1, %v124
    %v126 = vrot.slane %v103, %v125
    %v127 = vlaneseq
    %v128 = vshrl.u32 %v127, 7
    %v129 = vsub.s32 2, %v128
    %v130 = vrot.slane %v103, %v129
    %v166 = vunpack.c.l.b16 %v39
    %v167 = vunpack.c.h.b16 %v39
    %v168 = vunpack.c.l.b16 %v40
    %v169 = vunpack.c.l.b16 %v41
    %v170 = vunpack.c.h.b16 %v41
    %v171 = vunpack.c.l.b16 %v42
    %v172 = vunpack.c.l.b16 %v43
    %v173 = vunpack.c.h.b16 %v43
    %v174 = vunpack.c.l.b16 %v44
    %v175 = vunpack.c.l.b16 %v45
    %v176 = vunpack.c.h.b16 %v45
    %v177 = vunpack.c.l.b16 %v46
    %v178 = vunpack.c.l.b16 %v47
    %v179 = vunpack.c.h.b16 %v47
    %v180 = vunpack.c.l.b16 %v48
    %v181 = vunpack.c.l.b16 %v49
    %v182 = vunpack.c.h.b16 %v49
    %v183 = vunpack.c.l.b16 %v50
    %v184 = vunpack.c.l.b16 %v51
    %v185 = vunpack.c.h.b16 %v51
    %v186 = vunpack.c.l.b16 %v52
    %v187 = vunpack.c.l.b16 %v53
    %v188 = vunpack.c.h.b16 %v53
    %v189 = vunpack.c.l.b16 %v54
    %v190 = vunpack.c.l.b16 %v55
    %v191 = vunpack.c.h.b16 %v55
    %v192 = vunpack.c.l.b16 %v56
    %v193 = vunpack.c.l.b16 %v57
    %v194 = vunpack.c.h.b16 %v57
    %v195 = vunpack.c.l.b16 %v58
    %v196 = vunpack.c.l.b16 %v59
    %v197 = vunpack.c.h.b16 %v59
    %v198 = vunpack.c.l.b16 %v60
    %v199 = vunpack.c.l.b16 %v61
    %v200 = vunpack.c.h.b16 %v61
    %v201 = vunpack.c.l.b16 %v62
    %v202 = vunpack.c.l.b16 %v63
    %v203 = vunpack.c.h.b16 %v63
    %v204 = vunpack.c.l.b16 %v64
    %v205 = vunpack.c.l.b16 %v65
    %v206 = vunpack.c.h.b16 %v65
    %v207 = vunpack.c.l.b16 %v66
    %v208 = vunpack.c.l.b16 %v67
    %v209 = vunpack.c.h.b16 %v67
    %v210 = vunpack.c.l.b16 %v68
    %v211 = vunpack.c.l.b16 %v69
    %v212 = vunpack.c.h.b16 %v69
    %v213 = vunpack.c.l.b16 %v70
    %v214 = vpack.c.b16 %v169, %v166
    %v215 = vpack.c.b16 %v170, %v167
    %v216 = vpack.c.b16 %v171, %v168
    %v217 = vpack.c.b16 %v175, %v172
    %v218 = vpack.c.b16 %v176, %v173
    %v219 = vpack.c.b16 %v177, %v174
    %v220 = vpack.c.b16 %v181, %v178
    %v221 = vpack.c.b16 %v182, %v179
    %v222 = vpack.c.b16 %v183, %v180
    %v223 = vpack.c.b16 %v187, %v184
    %v224 = vpack.c.b16 %v188, %v185
    %v225 = vpack.c.b16 %v189, %v186
    %v226 = vpack.c.b16 %v193, %v190
    %v227 = vpack.c.b16 %v194, %v191
    %v228 = vpack.c.b16 %v195, %v192
    %v229 = vpack.c.b16 %v199, %v196
    %v230 = vpack.c.b16 %v200, %v197
    %v231 = vpack.c.b16 %v201, %v198
    %v232 = vpack.c.b16 %v205, %v202
    %v233 = vpack.c.b16 %v206, %v203
    %v234 = vpack.c.b16 %v207, %v204
    %v235 = vpack.c.b16 %v211, %v208
    %v236 = vpack.c.b16 %v212, %v209
    %v237 = vpack.c.b16 %v213, %v210
    %262 = vmatprep.subr.bf16.mxu0 %v236
    %263 = vmatpush1.bf16.msra.mxu0 %v235
    %264 = vmatprep.subr.bf16.mxu0 %v233
    %265 = vmatpush1.bf16.msra.mxu0 %v232
    %266 = vmatprep.subr.bf16.mxu0 %v230
    %267 = vmatpush1.bf16.msra.mxu0 %v229
    %268 = vmatprep.subr.bf16.mxu0 %v227
    %269 = vmatpush1.bf16.msra.mxu0 %v226
    %270 = vmatprep.subr.bf16.mxu0 %v224
    %271 = vmatpush1.bf16.msra.mxu0 %v223
    %272 = vmatprep.subr.bf16.mxu0 %v221
    %273 = vmatpush1.bf16.msra.mxu0 %v220
    %274 = vmatprep.subr.bf16.mxu0 %v218
    %275 = vmatpush1.bf16.msra.mxu0 %v217
    %276 = vmatprep.subr.bf16.mxu0 %v215
    %277 = vmatpush1.bf16.msra.mxu0 %v214
    %278 = vmatprep.subr.bf16.mxu0 0
    %279 = vmatpush2.bf16.msra.mxu0 0
    %280 = vmatprep.subr.bf16.mxu0 0
    %281 = vmatpush2.bf16.msra.mxu0 0
    %282 = vmatprep.subr.bf16.mxu0 0
    %283 = vmatpush2.bf16.msra.mxu0 0
    %284 = vmatprep.subr.bf16.mxu0 0
    %285 = vmatpush2.bf16.msra.mxu0 0
    %286 = vmatprep.subr.bf16.mxu0 0
    %287 = vmatpush2.bf16.msra.mxu0 0
    %288 = vmatprep.subr.bf16.mxu0 0
    %289 = vmatpush2.bf16.msra.mxu0 0
    %290 = vmatprep.subr.bf16.mxu0 0
    %291 = vmatpush2.bf16.msra.mxu0 0
    %292 = vmatprep.subr.bf16.mxu0 0
    %293 = vmatpush2.bf16.msra.mxu0 0
    %294 = vmatprep.mubr.bf16.mxu0 0
    %295 = vmatmul.mubr.bf16.gmra.mxu0 %v114
    %v296 = vpop.f32.mrf.mxu0
    %v297 = vadd.f32 %v122, %v296
    %v298 = vpop.f32.mrf.mxu0
    %v299 = vadd.f32 %v126, %v298
    %v300 = vpop.f32.mrf.mxu0
    %v301 = vadd.f32 %v122, %v300
    %v302 = vpop.f32.mrf.mxu0
    %v303 = vadd.f32 %v126, %v302
    %304 = vmatprep.mubr.bf16.mxu0 0
    %305 = vmatmul.mubr.bf16.gmra.mxu0 %v115
    %v306 = vpop.f32.mrf.mxu0
    %v307 = vadd.f32 %v122, %v306
    %v308 = vpop.f32.mrf.mxu0
    %v309 = vadd.f32 %v126, %v308
    %v310 = vpop.f32.mrf.mxu0
    %v311 = vadd.f32 %v122, %v310
    %v312 = vpop.f32.mrf.mxu0
    %v313 = vadd.f32 %v126, %v312
    %314 = vmatprep.mubr.bf16.mxu0 0
    %315 = vmatmul.mubr.bf16.gmra.mxu0 %v116
    %v316 = vpop.f32.mrf.mxu0
    %v317 = vadd.f32 %v122, %v316
    %v318 = vpop.f32.mrf.mxu0
    %v319 = vadd.f32 %v126, %v318
    %v320 = vpop.f32.mrf.mxu0
    %v321 = vadd.f32 %v122, %v320
    %v322 = vpop.f32.mrf.mxu0
    %v323 = vadd.f32 %v126, %v322
    %324 = vmatprep.mubr.bf16.mxu0 0
    %325 = vmatmul.mubr.bf16.gmra.mxu0 %v117
    %v326 = vpop.f32.mrf.mxu0
    %v327 = vadd.f32 %v122, %v326
    %v328 = vpop.f32.mrf.mxu0
    %v329 = vadd.f32 %v126, %v328
    %v330 = vpop.f32.mrf.mxu0
    %v331 = vadd.f32 %v122, %v330
    %v332 = vpop.f32.mrf.mxu0
    %v333 = vadd.f32 %v126, %v332
    %334 = vdwg.mxu0
    %335 = vmatprep.subr.bf16.mxu0 0
    %336 = vmatpush1.bf16.msra.mxu0 %v237
    %337 = vmatprep.subr.bf16.mxu0 0
    %338 = vmatpush1.bf16.msra.mxu0 %v234
    %339 = vmatprep.subr.bf16.mxu0 0
    %340 = vmatpush1.bf16.msra.mxu0 %v231
    %341 = vmatprep.subr.bf16.mxu0 0
    %342 = vmatpush1.bf16.msra.mxu0 %v228
    %343 = vmatprep.subr.bf16.mxu0 0
    %344 = vmatpush1.bf16.msra.mxu0 %v225
    %345 = vmatprep.subr.bf16.mxu0 0
    %346 = vmatpush1.bf16.msra.mxu0 %v222
    %347 = vmatprep.subr.bf16.mxu0 0
    %348 = vmatpush1.bf16.msra.mxu0 %v219
    %349 = vmatprep.subr.bf16.mxu0 0
    %350 = vmatpush1.bf16.msra.mxu0 %v216
    %351 = vmatprep.subr.bf16.mxu0 0
    %352 = vmatpush2.bf16.msra.mxu0 0
    %353 = vmatprep.subr.bf16.mxu0 0
    %354 = vmatpush2.bf16.msra.mxu0 0
    %355 = vmatprep.subr.bf16.mxu0 0
    %356 = vmatpush2.bf16.msra.mxu0 0
    %357 = vmatprep.subr.bf16.mxu0 0
    %358 = vmatpush2.bf16.msra.mxu0 0
    %359 = vmatprep.subr.bf16.mxu0 0
    %360 = vmatpush2.bf16.msra.mxu0 0
    %361 = vmatprep.subr.bf16.mxu0 0
    %362 = vmatpush2.bf16.msra.mxu0 0
    %363 = vmatprep.subr.bf16.mxu0 0
    %364 = vmatpush2.bf16.msra.mxu0 0
    %365 = vmatprep.subr.bf16.mxu0 0
    %366 = vmatpush2.bf16.msra.mxu0 0
    %367 = vmatprep.mubr.bf16.mxu0 0
    %368 = vmatmul.mubr.bf16.gmra.mxu0 %v114
    %v369 = vpop.f32.mrf.mxu0
    %v370 = vadd.f32 %v130, %v369
    %v371 = vpop.f32.mrf.mxu0
    %v372 = vpop.f32.mrf.mxu0
    %v373 = vadd.f32 %v130, %v372
    %v374 = vpop.f32.mrf.mxu0
    %375 = vmatprep.mubr.bf16.mxu0 0
    %376 = vmatmul.mubr.bf16.gmra.mxu0 %v115
    %v377 = vpop.f32.mrf.mxu0
    %v378 = vadd.f32 %v130, %v377
    %v379 = vpop.f32.mrf.mxu0
    %v380 = vpop.f32.mrf.mxu0
    %v381 = vadd.f32 %v130, %v380
    %v382 = vpop.f32.mrf.mxu0
    %383 = vmatprep.mubr.bf16.mxu0 0
    %384 = vmatmul.mubr.bf16.gmra.mxu0 %v116
    %v385 = vpop.f32.mrf.mxu0
    %v386 = vadd.f32 %v130, %v385
    %v387 = vpop.f32.mrf.mxu0
    %v388 = vpop.f32.mrf.mxu0
    %v389 = vadd.f32 %v130, %v388
    %v390 = vpop.f32.mrf.mxu0
    %391 = vmatprep.mubr.bf16.mxu0 0
    %392 = vmatmul.mubr.bf16.gmra.mxu0 %v117
    %v393 = vpop.f32.mrf.mxu0
    %v394 = vadd.f32 %v130, %v393
    %v395 = vpop.f32.mrf.mxu0
    %v396 = vpop.f32.mrf.mxu0
    %v397 = vadd.f32 %v130, %v396
    %v398 = vpop.f32.mrf.mxu0
    %399 = vdwg.mxu0
    %400 = vst [vmem:[#allocation3] sm:$0xff] %v297
    %401 = vst [vmem:[#allocation3 + $0x8] sm:$0xff] %v299
    %402 = vst [vmem:[#allocation3 + $0x10] sm:$0xff] %v370
    %403 = vst [vmem:[#allocation3 + $0x18] sm:$0xff] %v301
    %404 = vst [vmem:[#allocation3 + $0x20] sm:$0xff] %v303
    %405 = vst [vmem:[#allocation3 + $0x28] sm:$0xff] %v373
    %406 = vst [vmem:[#allocation3 + $0x30] sm:$0xff] %v307
    %407 = vst [vmem:[#allocation3 + $0x38] sm:$0xff] %v309
    %408 = vst [vmem:[#allocation3 + $0x40] sm:$0xff] %v378
    %409 = vst [vmem:[#allocation3 + $0x48] sm:$0xff] %v311
    %410 = vst [vmem:[#allocation3 + $0x50] sm:$0xff] %v313
    %411 = vst [vmem:[#allocation3 + $0x58] sm:$0xff] %v381
    %412 = vst [vmem:[#allocation3 + $0x60] sm:$0xff] %v317
    %413 = vst [vmem:[#allocation3 + $0x68] sm:$0xff] %v319
    %414 = vst [vmem:[#allocation3 + $0x70] sm:$0xff] %v386
    %415 = vst [vmem:[#allocation3 + $0x78] sm:$0xff] %v321
    %416 = vst [vmem:[#allocation3 + $0x80] sm:$0xff] %v323
    %417 = vst [vmem:[#allocation3 + $0x88] sm:$0xff] %v389
    %418 = vst [vmem:[#allocation3 + $0x90] sm:$0xff] %v327
    %419 = vst [vmem:[#allocation3 + $0x98] sm:$0xff] %v329
    %420 = vst [vmem:[#allocation3 + $0xa0] sm:$0xff] %v394
    %421 = vst [vmem:[#allocation3 + $0xa8] sm:$0xff] %v331
    %422 = vst [vmem:[#allocation3 + $0xb0] sm:$0xff] %v333
    %423 = vst [vmem:[#allocation3 + $0xb8] sm:$0xff] %v397
    %v424 = vpack.c.bf16 %v105, %v105
    %v457 = vunpack.c.l.b16 %v71
    %v458 = vunpack.c.h.b16 %v71
    %v459 = vunpack.c.l.b16 %v72
    %v460 = vunpack.c.l.b16 %v73
    %v461 = vunpack.c.h.b16 %v73
    %v462 = vunpack.c.l.b16 %v74
    %v463 = vunpack.c.l.b16 %v75
    %v464 = vunpack.c.h.b16 %v75
    %v465 = vunpack.c.l.b16 %v76
    %v466 = vunpack.c.l.b16 %v77
    %v467 = vunpack.c.h.b16 %v77
    %v468 = vunpack.c.l.b16 %v78
    %v469 = vunpack.c.l.b16 %v79
    %v470 = vunpack.c.h.b16 %v79
    %v471 = vunpack.c.l.b16 %v80
    %v472 = vunpack.c.l.b16 %v81
    %v473 = vunpack.c.h.b16 %v81
    %v474 = vunpack.c.l.b16 %v82
    %v475 = vunpack.c.l.b16 %v83
    %v476 = vunpack.c.h.b16 %v83
    %v477 = vunpack.c.l.b16 %v84
    %v478 = vunpack.c.l.b16 %v85
    %v479 = vunpack.c.h.b16 %v85
    %v480 = vunpack.c.l.b16 %v86
    %v481 = vunpack.c.l.b16 %v87
    %v482 = vunpack.c.h.b16 %v87
    %v483 = vunpack.c.l.b16 %v88
    %v484 = vunpack.c.l.b16 %v89
    %v485 = vunpack.c.h.b16 %v89
    %v486 = vunpack.c.l.b16 %v90
    %v487 = vunpack.c.l.b16 %v91
    %v488 = vunpack.c.h.b16 %v91
    %v489 = vunpack.c.l.b16 %v92
    %v490 = vunpack.c.l.b16 %v93
    %v491 = vunpack.c.h.b16 %v93
    %v492 = vunpack.c.l.b16 %v94
    %v493 = vunpack.c.l.b16 %v95
    %v494 = vunpack.c.h.b16 %v95
    %v495 = vunpack.c.l.b16 %v96
    %v496 = vunpack.c.l.b16 %v97
    %v497 = vunpack.c.h.b16 %v97
    %v498 = vunpack.c.l.b16 %v98
    %v499 = vunpack.c.l.b16 %v99
    %v500 = vunpack.c.h.b16 %v99
    %v501 = vunpack.c.l.b16 %v100
    %v502 = vunpack.c.l.b16 %v101
    %v503 = vunpack.c.h.b16 %v101
    %v504 = vunpack.c.l.b16 %v102
    %v505 = vpack.c.b16 %v460, %v457
    %v506 = vpack.c.b16 %v461, %v458
    %v507 = vpack.c.b16 %v462, %v459
    %v508 = vpack.c.b16 %v466, %v463
    %v509 = vpack.c.b16 %v467, %v464
    %v510 = vpack.c.b16 %v468, %v465
    %v511 = vpack.c.b16 %v472, %v469
    %v512 = vpack.c.b16 %v473, %v470
    %v513 = vpack.c.b16 %v474, %v471
    %v514 = vpack.c.b16 %v478, %v475
    %v515 = vpack.c.b16 %v479, %v476
    %v516 = vpack.c.b16 %v480, %v477
    %v517 = vpack.c.b16 %v484, %v481
    %v518 = vpack.c.b16 %v485, %v482
    %v519 = vpack.c.b16 %v486, %v483
    %v520 = vpack.c.b16 %v490, %v487
    %v521 = vpack.c.b16 %v491, %v488
    %v522 = vpack.c.b16 %v492, %v489
    %v523 = vpack.c.b16 %v496, %v493
    %v524 = vpack.c.b16 %v497, %v494
    %v525 = vpack.c.b16 %v498, %v495
    %v526 = vpack.c.b16 %v502, %v499
    %v527 = vpack.c.b16 %v503, %v500
    %v528 = vpack.c.b16 %v504, %v501
    %553 = vmatprep.subr.bf16.mxu0 %v527
    %554 = vmatpush1.bf16.msra.mxu0 %v526
    %555 = vmatprep.subr.bf16.mxu0 %v524
    %556 = vmatpush1.bf16.msra.mxu0 %v523
    %557 = vmatprep.subr.bf16.mxu0 %v521
    %558 = vmatpush1.bf16.msra.mxu0 %v520
    %559 = vmatprep.subr.bf16.mxu0 %v518
    %560 = vmatpush1.bf16.msra.mxu0 %v517
    %561 = vmatprep.subr.bf16.mxu0 %v515
    %562 = vmatpush1.bf16.msra.mxu0 %v514
    %563 = vmatprep.subr.bf16.mxu0 %v512
    %564 = vmatpush1.bf16.msra.mxu0 %v511
    %565 = vmatprep.subr.bf16.mxu0 %v509
    %566 = vmatpush1.bf16.msra.mxu0 %v508
    %567 = vmatprep.subr.bf16.mxu0 %v506
    %568 = vmatpush1.bf16.msra.mxu0 %v505
    %569 = vmatprep.subr.bf16.mxu0 0
    %570 = vmatpush2.bf16.msra.mxu0 0
    %571 = vmatprep.subr.bf16.mxu0 0
    %572 = vmatpush2.bf16.msra.mxu0 0
    %573 = vmatprep.subr.bf16.mxu0 0
    %574 = vmatpush2.bf16.msra.mxu0 0
    %575 = vmatprep.subr.bf16.mxu0 0
    %576 = vmatpush2.bf16.msra.mxu0 0
    %577 = vmatprep.subr.bf16.mxu0 0
    %578 = vmatpush2.bf16.msra.mxu0 0
    %579 = vmatprep.subr.bf16.mxu0 0
    %580 = vmatpush2.bf16.msra.mxu0 0
    %581 = vmatprep.subr.bf16.mxu0 0
    %582 = vmatpush2.bf16.msra.mxu0 0
    %583 = vmatprep.subr.bf16.mxu0 0
    %584 = vmatpush2.bf16.msra.mxu0 0
    %585 = vmatprep.mubr.bf16.mxu0 0
    %586 = vmatmul.mubr.bf16.gmra.mxu0 %v424
    %v587 = vpop.f32.mrf.mxu0
    %v588 = vadd.f32 0.0, %v587
    %v589 = vpop.f32.mrf.mxu0
    %v590 = vadd.f32 0.0, %v589
    %v591 = vpop.f32.mrf.mxu0
    %v592 = vpop.f32.mrf.mxu0
    %593 = vdwg.mxu0
    %594 = vmatprep.subr.bf16.mxu0 0
    %595 = vmatpush1.bf16.msra.mxu0 %v528
    %596 = vmatprep.subr.bf16.mxu0 0
    %597 = vmatpush1.bf16.msra.mxu0 %v525
    %598 = vmatprep.subr.bf16.mxu0 0
    %599 = vmatpush1.bf16.msra.mxu0 %v522
    %600 = vmatprep.subr.bf16.mxu0 0
    %601 = vmatpush1.bf16.msra.mxu0 %v519
    %602 = vmatprep.subr.bf16.mxu0 0
    %603 = vmatpush1.bf16.msra.mxu0 %v516
    %604 = vmatprep.subr.bf16.mxu0 0
    %605 = vmatpush1.bf16.msra.mxu0 %v513
    %606 = vmatprep.subr.bf16.mxu0 0
    %607 = vmatpush1.bf16.msra.mxu0 %v510
    %608 = vmatprep.subr.bf16.mxu0 0
    %609 = vmatpush1.bf16.msra.mxu0 %v507
    %610 = vmatprep.subr.bf16.mxu0 0
    %611 = vmatpush2.bf16.msra.mxu0 0
    %612 = vmatprep.subr.bf16.mxu0 0
    %613 = vmatpush2.bf16.msra.mxu0 0
    %614 = vmatprep.subr.bf16.mxu0 0
    %615 = vmatpush2.bf16.msra.mxu0 0
    %616 = vmatprep.subr.bf16.mxu0 0
    %617 = vmatpush2.bf16.msra.mxu0 0
    %618 = vmatprep.subr.bf16.mxu0 0
    %619 = vmatpush2.bf16.msra.mxu0 0
    %620 = vmatprep.subr.bf16.mxu0 0
    %621 = vmatpush2.bf16.msra.mxu0 0
    %622 = vmatprep.subr.bf16.mxu0 0
    %623 = vmatpush2.bf16.msra.mxu0 0
    %624 = vmatprep.subr.bf16.mxu0 0
    %625 = vmatpush2.bf16.msra.mxu0 0
    %626 = vmatprep.mubr.bf16.mxu0 0
    %627 = vmatmul.mubr.bf16.gmra.mxu0 %v424
    %v628 = vpop.f32.mrf.mxu0
    %v629 = vadd.f32 0.0, %v628
    %v630 = vpop.f32.mrf.mxu0
    %v631 = vpop.f32.mrf.mxu0
    %v632 = vpop.f32.mrf.mxu0
    %633 = vdwg.mxu0
    %v634 = vld [vmem:[#allocation3] sm:$0xff]
    %v635 = vld [vmem:[#allocation3 + $0x8] sm:$0xff]
    %v636 = vld [vmem:[#allocation3 + $0x10] sm:$0xff]
    %v637 = vadd.f32 %v634, %v588
    %v638 = vxor.u32 %v637, 2147483648
    %v639 = vmul.f32 %v638, 1.442695
    %v640 = vpow.pop %v639
    %v641 = vadd.f32 %v640, 1.0
    %v642 = vrcp.pop %v641
    %v643 = vmul.f32 1.0, %v642
    %v644 = vadd.f32 %v635, %v590
    %v645 = vxor.u32 %v644, 2147483648
    %v646 = vmul.f32 %v645, 1.442695
    %v647 = vpow.pop %v646
    %v648 = vadd.f32 %v647, 1.0
    %v649 = vrcp.pop %v648
    %v650 = vmul.f32 1.0, %v649
    %v652 = vlaneseq
    %v653 = vshrl.u32 %v652, 7
    %v654 = vsub.s32 0, %v653
    %v655 = vrot.slane %v104, %v654
    %v657 = vadd.f32 %v629, %v655
    %v658 = vmul.f32 %v643, %v657
    %v659 = vadd.f32 %v636, %v658
    %v660 = vtanh.pop %v659
    %v661 = vsub.f32 1.0, %v650
    %v662 = vmul.f32 %v661, %v660
    %v663 = vmul.f32 %v650, %v105
    %v664 = vadd.f32 %v662, %v663
    %665 = vst [vmem:[#allocation2] sm:$0xff] %v664
    %v666 = vpack.c.bf16 %v664, %v664
    %667 = vmatprep.subr.bf16.mxu0 %v527
    %668 = vmatpush1.bf16.msra.mxu0 %v526
    %669 = vmatprep.subr.bf16.mxu0 %v524
    %670 = vmatpush1.bf16.msra.mxu0 %v523
    %671 = vmatprep.subr.bf16.mxu0 %v521
    %672 = vmatpush1.bf16.msra.mxu0 %v520
    %673 = vmatprep.subr.bf16.mxu0 %v518
    %674 = vmatpush1.bf16.msra.mxu0 %v517
    %675 = vmatprep.subr.bf16.mxu0 %v515
    %676 = vmatpush1.bf16.msra.mxu0 %v514
    %677 = vmatprep.subr.bf16.mxu0 %v512
    %678 = vmatpush1.bf16.msra.mxu0 %v511
    %679 = vmatprep.subr.bf16.mxu0 %v509
    %680 = vmatpush1.bf16.msra.mxu0 %v508
    %681 = vmatprep.subr.bf16.mxu0 %v506
    %682 = vmatpush1.bf16.msra.mxu0 %v505
    %683 = vmatprep.subr.bf16.mxu0 0
    %684 = vmatpush2.bf16.msra.mxu0 0
    %685 = vmatprep.subr.bf16.mxu0 0
    %686 = vmatpush2.bf16.msra.mxu0 0
    %687 = vmatprep.subr.bf16.mxu0 0
    %688 = vmatpush2.bf16.msra.mxu0 0
    %689 = vmatprep.subr.bf16.mxu0 0
    %690 = vmatpush2.bf16.msra.mxu0 0
    %691 = vmatprep.subr.bf16.mxu0 0
    %692 = vmatpush2.bf16.msra.mxu0 0
    %693 = vmatprep.subr.bf16.mxu0 0
    %694 = vmatpush2.bf16.msra.mxu0 0
    %695 = vmatprep.subr.bf16.mxu0 0
    %696 = vmatpush2.bf16.msra.mxu0 0
    %697 = vmatprep.subr.bf16.mxu0 0
    %698 = vmatpush2.bf16.msra.mxu0 0
    %699 = vmatprep.mubr.bf16.mxu0 0
    %700 = vmatmul.mubr.bf16.gmra.mxu0 %v666
    %v701 = vpop.f32.mrf.mxu0
    %v702 = vadd.f32 0.0, %v701
    %v703 = vpop.f32.mrf.mxu0
    %v704 = vadd.f32 0.0, %v703
    %v705 = vpop.f32.mrf.mxu0
    %v706 = vpop.f32.mrf.mxu0
    %707 = vdwg.mxu0
    %708 = vmatprep.subr.bf16.mxu0 0
    %709 = vmatpush1.bf16.msra.mxu0 %v528
    %710 = vmatprep.subr.bf16.mxu0 0
    %711 = vmatpush1.bf16.msra.mxu0 %v525
    %712 = vmatprep.subr.bf16.mxu0 0
    %713 = vmatpush1.bf16.msra.mxu0 %v522
    %714 = vmatprep.subr.bf16.mxu0 0
    %715 = vmatpush1.bf16.msra.mxu0 %v519
    %716 = vmatprep.subr.bf16.mxu0 0
    %717 = vmatpush1.bf16.msra.mxu0 %v516
    %718 = vmatprep.subr.bf16.mxu0 0
    %719 = vmatpush1.bf16.msra.mxu0 %v513
    %720 = vmatprep.subr.bf16.mxu0 0
    %721 = vmatpush1.bf16.msra.mxu0 %v510
    %722 = vmatprep.subr.bf16.mxu0 0
    %723 = vmatpush1.bf16.msra.mxu0 %v507
    %724 = vmatprep.subr.bf16.mxu0 0
    %725 = vmatpush2.bf16.msra.mxu0 0
    %726 = vmatprep.subr.bf16.mxu0 0
    %727 = vmatpush2.bf16.msra.mxu0 0
    %728 = vmatprep.subr.bf16.mxu0 0
    %729 = vmatpush2.bf16.msra.mxu0 0
    %730 = vmatprep.subr.bf16.mxu0 0
    %731 = vmatpush2.bf16.msra.mxu0 0
    %732 = vmatprep.subr.bf16.mxu0 0
    %733 = vmatpush2.bf16.msra.mxu0 0
    %734 = vmatprep.subr.bf16.mxu0 0
    %735 = vmatpush2.bf16.msra.mxu0 0
    %736 = vmatprep.subr.bf16.mxu0 0
    %737 = vmatpush2.bf16.msra.mxu0 0
    %738 = vmatprep.subr.bf16.mxu0 0
    %739 = vmatpush2.bf16.msra.mxu0 0
    %740 = vmatprep.mubr.bf16.mxu0 0
    %741 = vmatmul.mubr.bf16.gmra.mxu0 %v666
    %v742 = vpop.f32.mrf.mxu0
    %v743 = vadd.f32 0.0, %v742
    %v744 = vpop.f32.mrf.mxu0
    %v745 = vpop.f32.mrf.mxu0
    %v746 = vpop.f32.mrf.mxu0
    %747 = vdwg.mxu0
    %s748 = scalar_lea.vmem [#allocation3], 24
    %v749 = vld [vmem:[%s748] sm:$0xff]
    %v750 = vld [vmem:[%s748 + $0x8] sm:$0xff]
    %v751 = vld [vmem:[%s748 + $0x10] sm:$0xff]
    %v752 = vadd.f32 %v749, %v702
    %v753 = vxor.u32 %v752, 2147483648
    %v754 = vmul.f32 %v753, 1.442695
    %v755 = vpow.pop %v754
    %v756 = vadd.f32 %v755, 1.0
    %v757 = vrcp.pop %v756
    %v758 = vmul.f32 1.0, %v757
    %v759 = vadd.f32 %v750, %v704
    %v760 = vxor.u32 %v759, 2147483648
    %v761 = vmul.f32 %v760, 1.442695
    %v762 = vpow.pop %v761
    %v763 = vadd.f32 %v762, 1.0
    %v764 = vrcp.pop %v763
    %v765 = vmul.f32 1.0, %v764
    %v766 = vadd.f32 %v743, %v655
    %v767 = vmul.f32 %v758, %v766
    %v768 = vadd.f32 %v751, %v767
    %v769 = vtanh.pop %v768
    %v770 = vsub.f32 1.0, %v765
    %v771 = vmul.f32 %v770, %v769
    %v772 = vmul.f32 %v765, %v664
    %v773 = vadd.f32 %v771, %v772
    %s774 = scalar_lea.vmem [#allocation2], 8
    %775 = vst [vmem:[%s774] sm:$0xff] %v773
    %v776 = vpack.c.bf16 %v773, %v773
    %777 = vmatprep.subr.bf16.mxu0 %v527
    %778 = vmatpush1.bf16.msra.mxu0 %v526
    %779 = vmatprep.subr.bf16.mxu0 %v524
    %780 = vmatpush1.bf16.msra.mxu0 %v523
    %781 = vmatprep.subr.bf16.mxu0 %v521
    %782 = vmatpush1.bf16.msra.mxu0 %v520
    %783 = vmatprep.subr.bf16.mxu0 %v518
    %784 = vmatpush1.bf16.msra.mxu0 %v517
    %785 = vmatprep.subr.bf16.mxu0 %v515
    %786 = vmatpush1.bf16.msra.mxu0 %v514
    %787 = vmatprep.subr.bf16.mxu0 %v512
    %788 = vmatpush1.bf16.msra.mxu0 %v511
    %789 = vmatprep.subr.bf16.mxu0 %v509
    %790 = vmatpush1.bf16.msra.mxu0 %v508
    %791 = vmatprep.subr.bf16.mxu0 %v506
    %792 = vmatpush1.bf16.msra.mxu0 %v505
    %793 = vmatprep.subr.bf16.mxu0 0
    %794 = vmatpush2.bf16.msra.mxu0 0
    %795 = vmatprep.subr.bf16.mxu0 0
    %796 = vmatpush2.bf16.msra.mxu0 0
    %797 = vmatprep.subr.bf16.mxu0 0
    %798 = vmatpush2.bf16.msra.mxu0 0
    %799 = vmatprep.subr.bf16.mxu0 0
    %800 = vmatpush2.bf16.msra.mxu0 0
    %801 = vmatprep.subr.bf16.mxu0 0
    %802 = vmatpush2.bf16.msra.mxu0 0
    %803 = vmatprep.subr.bf16.mxu0 0
    %804 = vmatpush2.bf16.msra.mxu0 0
    %805 = vmatprep.subr.bf16.mxu0 0
    %806 = vmatpush2.bf16.msra.mxu0 0
    %807 = vmatprep.subr.bf16.mxu0 0
    %808 = vmatpush2.bf16.msra.mxu0 0
    %809 = vmatprep.mubr.bf16.mxu0 0
    %810 = vmatmul.mubr.bf16.gmra.mxu0 %v776
    %v811 = vpop.f32.mrf.mxu0
    %v812 = vadd.f32 0.0, %v811
    %v813 = vpop.f32.mrf.mxu0
    %v814 = vadd.f32 0.0, %v813
    %v815 = vpop.f32.mrf.mxu0
    %v816 = vpop.f32.mrf.mxu0
    %817 = vdwg.mxu0
    %818 = vmatprep.subr.bf16.mxu0 0
    %819 = vmatpush1.bf16.msra.mxu0 %v528
    %820 = vmatprep.subr.bf16.mxu0 0
    %821 = vmatpush1.bf16.msra.mxu0 %v525
    %822 = vmatprep.subr.bf16.mxu0 0
    %823 = vmatpush1.bf16.msra.mxu0 %v522
    %824 = vmatprep.subr.bf16.mxu0 0
    %825 = vmatpush1.bf16.msra.mxu0 %v519
    %826 = vmatprep.subr.bf16.mxu0 0
    %827 = vmatpush1.bf16.msra.mxu0 %v516
    %828 = vmatprep.subr.bf16.mxu0 0
    %829 = vmatpush1.bf16.msra.mxu0 %v513
    %830 = vmatprep.subr.bf16.mxu0 0
    %831 = vmatpush1.bf16.msra.mxu0 %v510
    %832 = vmatprep.subr.bf16.mxu0 0
    %833 = vmatpush1.bf16.msra.mxu0 %v507
    %834 = vmatprep.subr.bf16.mxu0 0
    %835 = vmatpush2.bf16.msra.mxu0 0
    %836 = vmatprep.subr.bf16.mxu0 0
    %837 = vmatpush2.bf16.msra.mxu0 0
    %838 = vmatprep.subr.bf16.mxu0 0
    %839 = vmatpush2.bf16.msra.mxu0 0
    %840 = vmatprep.subr.bf16.mxu0 0
    %841 = vmatpush2.bf16.msra.mxu0 0
    %842 = vmatprep.subr.bf16.mxu0 0
    %843 = vmatpush2.bf16.msra.mxu0 0
    %844 = vmatprep.subr.bf16.mxu0 0
    %845 = vmatpush2.bf16.msra.mxu0 0
    %846 = vmatprep.subr.bf16.mxu0 0
    %847 = vmatpush2.bf16.msra.mxu0 0
    %848 = vmatprep.subr.bf16.mxu0 0
    %849 = vmatpush2.bf16.msra.mxu0 0
    %850 = vmatprep.mubr.bf16.mxu0 0
    %851 = vmatmul.mubr.bf16.gmra.mxu0 %v776
    %v852 = vpop.f32.mrf.mxu0
    %v853 = vadd.f32 0.0, %v852
    %v854 = vpop.f32.mrf.mxu0
    %v855 = vpop.f32.mrf.mxu0
    %v856 = vpop.f32.mrf.mxu0
    %857 = vdwg.mxu0
    %s858 = scalar_lea.vmem [#allocation3], 48
    %v859 = vld [vmem:[%s858] sm:$0xff]
    %v860 = vld [vmem:[%s858 + $0x8] sm:$0xff]
    %v861 = vld [vmem:[%s858 + $0x10] sm:$0xff]
    %v862 = vadd.f32 %v859, %v812
    %v863 = vxor.u32 %v862, 2147483648
    %v864 = vmul.f32 %v863, 1.442695
    %v865 = vpow.pop %v864
    %v866 = vadd.f32 %v865, 1.0
    %v867 = vrcp.pop %v866
    %v868 = vmul.f32 1.0, %v867
    %v869 = vadd.f32 %v860, %v814
    %v870 = vxor.u32 %v869, 2147483648
    %v871 = vmul.f32 %v870, 1.442695
    %v872 = vpow.pop %v871
    %v873 = vadd.f32 %v872, 1.0
    %v874 = vrcp.pop %v873
    %v875 = vmul.f32 1.0, %v874
    %v876 = vadd.f32 %v853, %v655
    %v877 = vmul.f32 %v868, %v876
    %v878 = vadd.f32 %v861, %v877
    %v879 = vtanh.pop %v878
    %v880 = vsub.f32 1.0, %v875
    %v881 = vmul.f32 %v880, %v879
    %v882 = vmul.f32 %v875, %v773
    %v883 = vadd.f32 %v881, %v882
    %s884 = scalar_lea.vmem [#allocation2], 16
    %885 = vst [vmem:[%s884] sm:$0xff] %v883
    %v886 = vpack.c.bf16 %v883, %v883
    %887 = vmatprep.subr.bf16.mxu0 %v527
    %888 = vmatpush1.bf16.msra.mxu0 %v526
    %889 = vmatprep.subr.bf16.mxu0 %v524
    %890 = vmatpush1.bf16.msra.mxu0 %v523
    %891 = vmatprep.subr.bf16.mxu0 %v521
    %892 = vmatpush1.bf16.msra.mxu0 %v520
    %893 = vmatprep.subr.bf16.mxu0 %v518
    %894 = vmatpush1.bf16.msra.mxu0 %v517
    %895 = vmatprep.subr.bf16.mxu0 %v515
    %896 = vmatpush1.bf16.msra.mxu0 %v514
    %897 = vmatprep.subr.bf16.mxu0 %v512
    %898 = vmatpush1.bf16.msra.mxu0 %v511
    %899 = vmatprep.subr.bf16.mxu0 %v509
    %900 = vmatpush1.bf16.msra.mxu0 %v508
    %901 = vmatprep.subr.bf16.mxu0 %v506
    %902 = vmatpush1.bf16.msra.mxu0 %v505
    %903 = vmatprep.subr.bf16.mxu0 0
    %904 = vmatpush2.bf16.msra.mxu0 0
    %905 = vmatprep.subr.bf16.mxu0 0
    %906 = vmatpush2.bf16.msra.mxu0 0
    %907 = vmatprep.subr.bf16.mxu0 0
    %908 = vmatpush2.bf16.msra.mxu0 0
    %909 = vmatprep.subr.bf16.mxu0 0
    %910 = vmatpush2.bf16.msra.mxu0 0
    %911 = vmatprep.subr.bf16.mxu0 0
    %912 = vmatpush2.bf16.msra.mxu0 0
    %913 = vmatprep.subr.bf16.mxu0 0
    %914 = vmatpush2.bf16.msra.mxu0 0
    %915 = vmatprep.subr.bf16.mxu0 0
    %916 = vmatpush2.bf16.msra.mxu0 0
    %917 = vmatprep.subr.bf16.mxu0 0
    %918 = vmatpush2.bf16.msra.mxu0 0
    %919 = vmatprep.mubr.bf16.mxu0 0
    %920 = vmatmul.mubr.bf16.gmra.mxu0 %v886
    %v921 = vpop.f32.mrf.mxu0
    %v922 = vadd.f32 0.0, %v921
    %v923 = vpop.f32.mrf.mxu0
    %v924 = vadd.f32 0.0, %v923
    %v925 = vpop.f32.mrf.mxu0
    %v926 = vpop.f32.mrf.mxu0
    %927 = vdwg.mxu0
    %928 = vmatprep.subr.bf16.mxu0 0
    %929 = vmatpush1.bf16.msra.mxu0 %v528
    %930 = vmatprep.subr.bf16.mxu0 0
    %931 = vmatpush1.bf16.msra.mxu0 %v525
    %932 = vmatprep.subr.bf16.mxu0 0
    %933 = vmatpush1.bf16.msra.mxu0 %v522
    %934 = vmatprep.subr.bf16.mxu0 0
    %935 = vmatpush1.bf16.msra.mxu0 %v519
    %936 = vmatprep.subr.bf16.mxu0 0
    %937 = vmatpush1.bf16.msra.mxu0 %v516
    %938 = vmatprep.subr.bf16.mxu0 0
    %939 = vmatpush1.bf16.msra.mxu0 %v513
    %940 = vmatprep.subr.bf16.mxu0 0
    %941 = vmatpush1.bf16.msra.mxu0 %v510
    %942 = vmatprep.subr.bf16.mxu0 0
    %943 = vmatpush1.bf16.msra.mxu0 %v507
    %944 = vmatprep.subr.bf16.mxu0 0
    %945 = vmatpush2.bf16.msra.mxu0 0
    %946 = vmatprep.subr.bf16.mxu0 0
    %947 = vmatpush2.bf16.msra.mxu0 0
    %948 = vmatprep.subr.bf16.mxu0 0
    %949 = vmatpush2.bf16.msra.mxu0 0
    %950 = vmatprep.subr.bf16.mxu0 0
    %951 = vmatpush2.bf16.msra.mxu0 0
    %952 = vmatprep.subr.bf16.mxu0 0
    %953 = vmatpush2.bf16.msra.mxu0 0
    %954 = vmatprep.subr.bf16.mxu0 0
    %955 = vmatpush2.bf16.msra.mxu0 0
    %956 = vmatprep.subr.bf16.mxu0 0
    %957 = vmatpush2.bf16.msra.mxu0 0
    %958 = vmatprep.subr.bf16.mxu0 0
    %959 = vmatpush2.bf16.msra.mxu0 0
    %960 = vmatprep.mubr.bf16.mxu0 0
    %961 = vmatmul.mubr.bf16.gmra.mxu0 %v886
    %v962 = vpop.f32.mrf.mxu0
    %v963 = vadd.f32 0.0, %v962
    %v964 = vpop.f32.mrf.mxu0
    %v965 = vpop.f32.mrf.mxu0
    %v966 = vpop.f32.mrf.mxu0
    %967 = vdwg.mxu0
    %s968 = scalar_lea.vmem [#allocation3], 72
    %v969 = vld [vmem:[%s968] sm:$0xff]
    %v970 = vld [vmem:[%s968 + $0x8] sm:$0xff]
    %v971 = vld [vmem:[%s968 + $0x10] sm:$0xff]
    %v972 = vadd.f32 %v969, %v922
    %v973 = vxor.u32 %v972, 2147483648
    %v974 = vmul.f32 %v973, 1.442695
    %v975 = vpow.pop %v974
    %v976 = vadd.f32 %v975, 1.0
    %v977 = vrcp.pop %v976
    %v978 = vmul.f32 1.0, %v977
    %v979 = vadd.f32 %v970, %v924
    %v980 = vxor.u32 %v979, 2147483648
    %v981 = vmul.f32 %v980, 1.442695
    %v982 = vpow.pop %v981
    %v983 = vadd.f32 %v982, 1.0
    %v984 = vrcp.pop %v983
    %v985 = vmul.f32 1.0, %v984
    %v986 = vadd.f32 %v963, %v655
    %v987 = vmul.f32 %v978, %v986
    %v988 = vadd.f32 %v971, %v987
    %v989 = vtanh.pop %v988
    %v990 = vsub.f32 1.0, %v985
    %v991 = vmul.f32 %v990, %v989
    %v992 = vmul.f32 %v985, %v883
    %v993 = vadd.f32 %v991, %v992
    %s994 = scalar_lea.vmem [#allocation2], 24
    %995 = vst [vmem:[%s994] sm:$0xff] %v993
    %v996 = vpack.c.bf16 %v993, %v993
    %997 = vmatprep.subr.bf16.mxu0 %v527
    %998 = vmatpush1.bf16.msra.mxu0 %v526
    %999 = vmatprep.subr.bf16.mxu0 %v524
    %1000 = vmatpush1.bf16.msra.mxu0 %v523
    %1001 = vmatprep.subr.bf16.mxu0 %v521
    %1002 = vmatpush1.bf16.msra.mxu0 %v520
    %1003 = vmatprep.subr.bf16.mxu0 %v518
    %1004 = vmatpush1.bf16.msra.mxu0 %v517
    %1005 = vmatprep.subr.bf16.mxu0 %v515
    %1006 = vmatpush1.bf16.msra.mxu0 %v514
    %1007 = vmatprep.subr.bf16.mxu0 %v512
    %1008 = vmatpush1.bf16.msra.mxu0 %v511
    %1009 = vmatprep.subr.bf16.mxu0 %v509
    %1010 = vmatpush1.bf16.msra.mxu0 %v508
    %1011 = vmatprep.subr.bf16.mxu0 %v506
    %1012 = vmatpush1.bf16.msra.mxu0 %v505
    %1013 = vmatprep.subr.bf16.mxu0 0
    %1014 = vmatpush2.bf16.msra.mxu0 0
    %1015 = vmatprep.subr.bf16.mxu0 0
    %1016 = vmatpush2.bf16.msra.mxu0 0
    %1017 = vmatprep.subr.bf16.mxu0 0
    %1018 = vmatpush2.bf16.msra.mxu0 0
    %1019 = vmatprep.subr.bf16.mxu0 0
    %1020 = vmatpush2.bf16.msra.mxu0 0
    %1021 = vmatprep.subr.bf16.mxu0 0
    %1022 = vmatpush2.bf16.msra.mxu0 0
    %1023 = vmatprep.subr.bf16.mxu0 0
    %1024 = vmatpush2.bf16.msra.mxu0 0
    %1025 = vmatprep.subr.bf16.mxu0 0
    %1026 = vmatpush2.bf16.msra.mxu0 0
    %1027 = vmatprep.subr.bf16.mxu0 0
    %1028 = vmatpush2.bf16.msra.mxu0 0
    %1029 = vmatprep.mubr.bf16.mxu0 0
    %1030 = vmatmul.mubr.bf16.gmra.mxu0 %v996
    %v1031 = vpop.f32.mrf.mxu0
    %v1032 = vadd.f32 0.0, %v1031
    %v1033 = vpop.f32.mrf.mxu0
    %v1034 = vadd.f32 0.0, %v1033
    %v1035 = vpop.f32.mrf.mxu0
    %v1036 = vpop.f32.mrf.mxu0
    %1037 = vdwg.mxu0
    %1038 = vmatprep.subr.bf16.mxu0 0
    %1039 = vmatpush1.bf16.msra.mxu0 %v528
    %1040 = vmatprep.subr.bf16.mxu0 0
    %1041 = vmatpush1.bf16.msra.mxu0 %v525
    %1042 = vmatprep.subr.bf16.mxu0 0
    %1043 = vmatpush1.bf16.msra.mxu0 %v522
    %1044 = vmatprep.subr.bf16.mxu0 0
    %1045 = vmatpush1.bf16.msra.mxu0 %v519
    %1046 = vmatprep.subr.bf16.mxu0 0
    %1047 = vmatpush1.bf16.msra.mxu0 %v516
    %1048 = vmatprep.subr.bf16.mxu0 0
    %1049 = vmatpush1.bf16.msra.mxu0 %v513
    %1050 = vmatprep.subr.bf16.mxu0 0
    %1051 = vmatpush1.bf16.msra.mxu0 %v510
    %1052 = vmatprep.subr.bf16.mxu0 0
    %1053 = vmatpush1.bf16.msra.mxu0 %v507
    %1054 = vmatprep.subr.bf16.mxu0 0
    %1055 = vmatpush2.bf16.msra.mxu0 0
    %1056 = vmatprep.subr.bf16.mxu0 0
    %1057 = vmatpush2.bf16.msra.mxu0 0
    %1058 = vmatprep.subr.bf16.mxu0 0
    %1059 = vmatpush2.bf16.msra.mxu0 0
    %1060 = vmatprep.subr.bf16.mxu0 0
    %1061 = vmatpush2.bf16.msra.mxu0 0
    %1062 = vmatprep.subr.bf16.mxu0 0
    %1063 = vmatpush2.bf16.msra.mxu0 0
    %1064 = vmatprep.subr.bf16.mxu0 0
    %1065 = vmatpush2.bf16.msra.mxu0 0
    %1066 = vmatprep.subr.bf16.mxu0 0
    %1067 = vmatpush2.bf16.msra.mxu0 0
    %1068 = vmatprep.subr.bf16.mxu0 0
    %1069 = vmatpush2.bf16.msra.mxu0 0
    %1070 = vmatprep.mubr.bf16.mxu0 0
    %1071 = vmatmul.mubr.bf16.gmra.mxu0 %v996
    %v1072 = vpop.f32.mrf.mxu0
    %v1073 = vadd.f32 0.0, %v1072
    %v1074 = vpop.f32.mrf.mxu0
    %v1075 = vpop.f32.mrf.mxu0
    %v1076 = vpop.f32.mrf.mxu0
    %1077 = vdwg.mxu0
    %s1078 = scalar_lea.vmem [#allocation3], 96
    %v1079 = vld [vmem:[%s1078] sm:$0xff]
    %v1080 = vld [vmem:[%s1078 + $0x8] sm:$0xff]
    %v1081 = vld [vmem:[%s1078 + $0x10] sm:$0xff]
    %v1082 = vadd.f32 %v1079, %v1032
    %v1083 = vxor.u32 %v1082, 2147483648
    %v1084 = vmul.f32 %v1083, 1.442695
    %v1085 = vpow.pop %v1084
    %v1086 = vadd.f32 %v1085, 1.0
    %v1087 = vrcp.pop %v1086
    %v1088 = vmul.f32 1.0, %v1087
    %v1089 = vadd.f32 %v1080, %v1034
    %v1090 = vxor.u32 %v1089, 2147483648
    %v1091 = vmul.f32 %v1090, 1.442695
    %v1092 = vpow.pop %v1091
    %v1093 = vadd.f32 %v1092, 1.0
    %v1094 = vrcp.pop %v1093
    %v1095 = vmul.f32 1.0, %v1094
    %v1096 = vadd.f32 %v1073, %v655
    %v1097 = vmul.f32 %v1088, %v1096
    %v1098 = vadd.f32 %v1081, %v1097
    %v1099 = vtanh.pop %v1098
    %v1100 = vsub.f32 1.0, %v1095
    %v1101 = vmul.f32 %v1100, %v1099
    %v1102 = vmul.f32 %v1095, %v993
    %v1103 = vadd.f32 %v1101, %v1102
    %s1104 = scalar_lea.vmem [#allocation2], 32
    %1105 = vst [vmem:[%s1104] sm:$0xff] %v1103
    %v1106 = vpack.c.bf16 %v1103, %v1103
    %1107 = vmatprep.subr.bf16.mxu0 %v527
    %1108 = vmatpush1.bf16.msra.mxu0 %v526
    %1109 = vmatprep.subr.bf16.mxu0 %v524
    %1110 = vmatpush1.bf16.msra.mxu0 %v523
    %1111 = vmatprep.subr.bf16.mxu0 %v521
    %1112 = vmatpush1.bf16.msra.mxu0 %v520
    %1113 = vmatprep.subr.bf16.mxu0 %v518
    %1114 = vmatpush1.bf16.msra.mxu0 %v517
    %1115 = vmatprep.subr.bf16.mxu0 %v515
    %1116 = vmatpush1.bf16.msra.mxu0 %v514
    %1117 = vmatprep.subr.bf16.mxu0 %v512
    %1118 = vmatpush1.bf16.msra.mxu0 %v511
    %1119 = vmatprep.subr.bf16.mxu0 %v509
    %1120 = vmatpush1.bf16.msra.mxu0 %v508
    %1121 = vmatprep.subr.bf16.mxu0 %v506
    %1122 = vmatpush1.bf16.msra.mxu0 %v505
    %1123 = vmatprep.subr.bf16.mxu0 0
    %1124 = vmatpush2.bf16.msra.mxu0 0
    %1125 = vmatprep.subr.bf16.mxu0 0
    %1126 = vmatpush2.bf16.msra.mxu0 0
    %1127 = vmatprep.subr.bf16.mxu0 0
    %1128 = vmatpush2.bf16.msra.mxu0 0
    %1129 = vmatprep.subr.bf16.mxu0 0
    %1130 = vmatpush2.bf16.msra.mxu0 0
    %1131 = vmatprep.subr.bf16.mxu0 0
    %1132 = vmatpush2.bf16.msra.mxu0 0
    %1133 = vmatprep.subr.bf16.mxu0 0
    %1134 = vmatpush2.bf16.msra.mxu0 0
    %1135 = vmatprep.subr.bf16.mxu0 0
    %1136 = vmatpush2.bf16.msra.mxu0 0
    %1137 = vmatprep.subr.bf16.mxu0 0
    %1138 = vmatpush2.bf16.msra.mxu0 0
    %1139 = vmatprep.mubr.bf16.mxu0 0
    %1140 = vmatmul.mubr.bf16.gmra.mxu0 %v1106
    %v1141 = vpop.f32.mrf.mxu0
    %v1142 = vadd.f32 0.0, %v1141
    %v1143 = vpop.f32.mrf.mxu0
    %v1144 = vadd.f32 0.0, %v1143
    %v1145 = vpop.f32.mrf.mxu0
    %v1146 = vpop.f32.mrf.mxu0
    %1147 = vdwg.mxu0
    %1148 = vmatprep.subr.bf16.mxu0 0
    %1149 = vmatpush1.bf16.msra.mxu0 %v528
    %1150 = vmatprep.subr.bf16.mxu0 0
    %1151 = vmatpush1.bf16.msra.mxu0 %v525
    %1152 = vmatprep.subr.bf16.mxu0 0
    %1153 = vmatpush1.bf16.msra.mxu0 %v522
    %1154 = vmatprep.subr.bf16.mxu0 0
    %1155 = vmatpush1.bf16.msra.mxu0 %v519
    %1156 = vmatprep.subr.bf16.mxu0 0
    %1157 = vmatpush1.bf16.msra.mxu0 %v516
    %1158 = vmatprep.subr.bf16.mxu0 0
    %1159 = vmatpush1.bf16.msra.mxu0 %v513
    %1160 = vmatprep.subr.bf16.mxu0 0
    %1161 = vmatpush1.bf16.msra.mxu0 %v510
    %1162 = vmatprep.subr.bf16.mxu0 0
    %1163 = vmatpush1.bf16.msra.mxu0 %v507
    %1164 = vmatprep.subr.bf16.mxu0 0
    %1165 = vmatpush2.bf16.msra.mxu0 0
    %1166 = vmatprep.subr.bf16.mxu0 0
    %1167 = vmatpush2.bf16.msra.mxu0 0
    %1168 = vmatprep.subr.bf16.mxu0 0
    %1169 = vmatpush2.bf16.msra.mxu0 0
    %1170 = vmatprep.subr.bf16.mxu0 0
    %1171 = vmatpush2.bf16.msra.mxu0 0
    %1172 = vmatprep.subr.bf16.mxu0 0
    %1173 = vmatpush2.bf16.msra.mxu0 0
    %1174 = vmatprep.subr.bf16.mxu0 0
    %1175 = vmatpush2.bf16.msra.mxu0 0
    %1176 = vmatprep.subr.bf16.mxu0 0
    %1177 = vmatpush2.bf16.msra.mxu0 0
    %1178 = vmatprep.subr.bf16.mxu0 0
    %1179 = vmatpush2.bf16.msra.mxu0 0
    %1180 = vmatprep.mubr.bf16.mxu0 0
    %1181 = vmatmul.mubr.bf16.gmra.mxu0 %v1106
    %v1182 = vpop.f32.mrf.mxu0
    %v1183 = vadd.f32 0.0, %v1182
    %v1184 = vpop.f32.mrf.mxu0
    %v1185 = vpop.f32.mrf.mxu0
    %v1186 = vpop.f32.mrf.mxu0
    %1187 = vdwg.mxu0
    %s1188 = scalar_lea.vmem [#allocation3], 120
    %v1189 = vld [vmem:[%s1188] sm:$0xff]
    %v1190 = vld [vmem:[%s1188 + $0x8] sm:$0xff]
    %v1191 = vld [vmem:[%s1188 + $0x10] sm:$0xff]
    %v1192 = vadd.f32 %v1189, %v1142
    %v1193 = vxor.u32 %v1192, 2147483648
    %v1194 = vmul.f32 %v1193, 1.442695
    %v1195 = vpow.pop %v1194
    %v1196 = vadd.f32 %v1195, 1.0
    %v1197 = vrcp.pop %v1196
    %v1198 = vmul.f32 1.0, %v1197
    %v1199 = vadd.f32 %v1190, %v1144
    %v1200 = vxor.u32 %v1199, 2147483648
    %v1201 = vmul.f32 %v1200, 1.442695
    %v1202 = vpow.pop %v1201
    %v1203 = vadd.f32 %v1202, 1.0
    %v1204 = vrcp.pop %v1203
    %v1205 = vmul.f32 1.0, %v1204
    %v1206 = vadd.f32 %v1183, %v655
    %v1207 = vmul.f32 %v1198, %v1206
    %v1208 = vadd.f32 %v1191, %v1207
    %v1209 = vtanh.pop %v1208
    %v1210 = vsub.f32 1.0, %v1205
    %v1211 = vmul.f32 %v1210, %v1209
    %v1212 = vmul.f32 %v1205, %v1103
    %v1213 = vadd.f32 %v1211, %v1212
    %s1214 = scalar_lea.vmem [#allocation2], 40
    %1215 = vst [vmem:[%s1214] sm:$0xff] %v1213
    %v1216 = vpack.c.bf16 %v1213, %v1213
    %1217 = vmatprep.subr.bf16.mxu0 %v527
    %1218 = vmatpush1.bf16.msra.mxu0 %v526
    %1219 = vmatprep.subr.bf16.mxu0 %v524
    %1220 = vmatpush1.bf16.msra.mxu0 %v523
    %1221 = vmatprep.subr.bf16.mxu0 %v521
    %1222 = vmatpush1.bf16.msra.mxu0 %v520
    %1223 = vmatprep.subr.bf16.mxu0 %v518
    %1224 = vmatpush1.bf16.msra.mxu0 %v517
    %1225 = vmatprep.subr.bf16.mxu0 %v515
    %1226 = vmatpush1.bf16.msra.mxu0 %v514
    %1227 = vmatprep.subr.bf16.mxu0 %v512
    %1228 = vmatpush1.bf16.msra.mxu0 %v511
    %1229 = vmatprep.subr.bf16.mxu0 %v509
    %1230 = vmatpush1.bf16.msra.mxu0 %v508
    %1231 = vmatprep.subr.bf16.mxu0 %v506
    %1232 = vmatpush1.bf16.msra.mxu0 %v505
    %1233 = vmatprep.subr.bf16.mxu0 0
    %1234 = vmatpush2.bf16.msra.mxu0 0
    %1235 = vmatprep.subr.bf16.mxu0 0
    %1236 = vmatpush2.bf16.msra.mxu0 0
    %1237 = vmatprep.subr.bf16.mxu0 0
    %1238 = vmatpush2.bf16.msra.mxu0 0
    %1239 = vmatprep.subr.bf16.mxu0 0
    %1240 = vmatpush2.bf16.msra.mxu0 0
    %1241 = vmatprep.subr.bf16.mxu0 0
    %1242 = vmatpush2.bf16.msra.mxu0 0
    %1243 = vmatprep.subr.bf16.mxu0 0
    %1244 = vmatpush2.bf16.msra.mxu0 0
    %1245 = vmatprep.subr.bf16.mxu0 0
    %1246 = vmatpush2.bf16.msra.mxu0 0
    %1247 = vmatprep.subr.bf16.mxu0 0
    %1248 = vmatpush2.bf16.msra.mxu0 0
    %1249 = vmatprep.mubr.bf16.mxu0 0
    %1250 = vmatmul.mubr.bf16.gmra.mxu0 %v1216
    %v1251 = vpop.f32.mrf.mxu0
    %v1252 = vadd.f32 0.0, %v1251
    %v1253 = vpop.f32.mrf.mxu0
    %v1254 = vadd.f32 0.0, %v1253
    %v1255 = vpop.f32.mrf.mxu0
    %v1256 = vpop.f32.mrf.mxu0
    %1257 = vdwg.mxu0
    %1258 = vmatprep.subr.bf16.mxu0 0
    %1259 = vmatpush1.bf16.msra.mxu0 %v528
    %1260 = vmatprep.subr.bf16.mxu0 0
    %1261 = vmatpush1.bf16.msra.mxu0 %v525
    %1262 = vmatprep.subr.bf16.mxu0 0
    %1263 = vmatpush1.bf16.msra.mxu0 %v522
    %1264 = vmatprep.subr.bf16.mxu0 0
    %1265 = vmatpush1.bf16.msra.mxu0 %v519
    %1266 = vmatprep.subr.bf16.mxu0 0
    %1267 = vmatpush1.bf16.msra.mxu0 %v516
    %1268 = vmatprep.subr.bf16.mxu0 0
    %1269 = vmatpush1.bf16.msra.mxu0 %v513
    %1270 = vmatprep.subr.bf16.mxu0 0
    %1271 = vmatpush1.bf16.msra.mxu0 %v510
    %1272 = vmatprep.subr.bf16.mxu0 0
    %1273 = vmatpush1.bf16.msra.mxu0 %v507
    %1274 = vmatprep.subr.bf16.mxu0 0
    %1275 = vmatpush2.bf16.msra.mxu0 0
    %1276 = vmatprep.subr.bf16.mxu0 0
    %1277 = vmatpush2.bf16.msra.mxu0 0
    %1278 = vmatprep.subr.bf16.mxu0 0
    %1279 = vmatpush2.bf16.msra.mxu0 0
    %1280 = vmatprep.subr.bf16.mxu0 0
    %1281 = vmatpush2.bf16.msra.mxu0 0
    %1282 = vmatprep.subr.bf16.mxu0 0
    %1283 = vmatpush2.bf16.msra.mxu0 0
    %1284 = vmatprep.subr.bf16.mxu0 0
    %1285 = vmatpush2.bf16.msra.mxu0 0
    %1286 = vmatprep.subr.bf16.mxu0 0
    %1287 = vmatpush2.bf16.msra.mxu0 0
    %1288 = vmatprep.subr.bf16.mxu0 0
    %1289 = vmatpush2.bf16.msra.mxu0 0
    %1290 = vmatprep.mubr.bf16.mxu0 0
    %1291 = vmatmul.mubr.bf16.gmra.mxu0 %v1216
    %v1292 = vpop.f32.mrf.mxu0
    %v1293 = vadd.f32 0.0, %v1292
    %v1294 = vpop.f32.mrf.mxu0
    %v1295 = vpop.f32.mrf.mxu0
    %v1296 = vpop.f32.mrf.mxu0
    %1297 = vdwg.mxu0
    %s1298 = scalar_lea.vmem [#allocation3], 144
    %v1299 = vld [vmem:[%s1298] sm:$0xff]
    %v1300 = vld [vmem:[%s1298 + $0x8] sm:$0xff]
    %v1301 = vld [vmem:[%s1298 + $0x10] sm:$0xff]
    %v1302 = vadd.f32 %v1299, %v1252
    %v1303 = vxor.u32 %v1302, 2147483648
    %v1304 = vmul.f32 %v1303, 1.442695
    %v1305 = vpow.pop %v1304
    %v1306 = vadd.f32 %v1305, 1.0
    %v1307 = vrcp.pop %v1306
    %v1308 = vmul.f32 1.0, %v1307
    %v1309 = vadd.f32 %v1300, %v1254
    %v1310 = vxor.u32 %v1309, 2147483648
    %v1311 = vmul.f32 %v1310, 1.442695
    %v1312 = vpow.pop %v1311
    %v1313 = vadd.f32 %v1312, 1.0
    %v1314 = vrcp.pop %v1313
    %v1315 = vmul.f32 1.0, %v1314
    %v1316 = vadd.f32 %v1293, %v655
    %v1317 = vmul.f32 %v1308, %v1316
    %v1318 = vadd.f32 %v1301, %v1317
    %v1319 = vtanh.pop %v1318
    %v1320 = vsub.f32 1.0, %v1315
    %v1321 = vmul.f32 %v1320, %v1319
    %v1322 = vmul.f32 %v1315, %v1213
    %v1323 = vadd.f32 %v1321, %v1322
    %s1324 = scalar_lea.vmem [#allocation2], 48
    %1325 = vst [vmem:[%s1324] sm:$0xff] %v1323
    %v1326 = vpack.c.bf16 %v1323, %v1323
    %1327 = vmatprep.subr.bf16.mxu0 %v527
    %1328 = vmatpush1.bf16.msra.mxu0 %v526
    %1329 = vmatprep.subr.bf16.mxu0 %v524
    %1330 = vmatpush1.bf16.msra.mxu0 %v523
    %1331 = vmatprep.subr.bf16.mxu0 %v521
    %1332 = vmatpush1.bf16.msra.mxu0 %v520
    %1333 = vmatprep.subr.bf16.mxu0 %v518
    %1334 = vmatpush1.bf16.msra.mxu0 %v517
    %1335 = vmatprep.subr.bf16.mxu0 %v515
    %1336 = vmatpush1.bf16.msra.mxu0 %v514
    %1337 = vmatprep.subr.bf16.mxu0 %v512
    %1338 = vmatpush1.bf16.msra.mxu0 %v511
    %1339 = vmatprep.subr.bf16.mxu0 %v509
    %1340 = vmatpush1.bf16.msra.mxu0 %v508
    %1341 = vmatprep.subr.bf16.mxu0 %v506
    %1342 = vmatpush1.bf16.msra.mxu0 %v505
    %1343 = vmatprep.subr.bf16.mxu0 0
    %1344 = vmatpush2.bf16.msra.mxu0 0
    %1345 = vmatprep.subr.bf16.mxu0 0
    %1346 = vmatpush2.bf16.msra.mxu0 0
    %1347 = vmatprep.subr.bf16.mxu0 0
    %1348 = vmatpush2.bf16.msra.mxu0 0
    %1349 = vmatprep.subr.bf16.mxu0 0
    %1350 = vmatpush2.bf16.msra.mxu0 0
    %1351 = vmatprep.subr.bf16.mxu0 0
    %1352 = vmatpush2.bf16.msra.mxu0 0
    %1353 = vmatprep.subr.bf16.mxu0 0
    %1354 = vmatpush2.bf16.msra.mxu0 0
    %1355 = vmatprep.subr.bf16.mxu0 0
    %1356 = vmatpush2.bf16.msra.mxu0 0
    %1357 = vmatprep.subr.bf16.mxu0 0
    %1358 = vmatpush2.bf16.msra.mxu0 0
    %1359 = vmatprep.mubr.bf16.mxu0 0
    %1360 = vmatmul.mubr.bf16.gmra.mxu0 %v1326
    %v1361 = vpop.f32.mrf.mxu0
    %v1362 = vadd.f32 0.0, %v1361
    %v1363 = vpop.f32.mrf.mxu0
    %v1364 = vadd.f32 0.0, %v1363
    %v1365 = vpop.f32.mrf.mxu0
    %v1366 = vpop.f32.mrf.mxu0
    %1367 = vdwg.mxu0
    %1368 = vmatprep.subr.bf16.mxu0 0
    %1369 = vmatpush1.bf16.msra.mxu0 %v528
    %1370 = vmatprep.subr.bf16.mxu0 0
    %1371 = vmatpush1.bf16.msra.mxu0 %v525
    %1372 = vmatprep.subr.bf16.mxu0 0
    %1373 = vmatpush1.bf16.msra.mxu0 %v522
    %1374 = vmatprep.subr.bf16.mxu0 0
    %1375 = vmatpush1.bf16.msra.mxu0 %v519
    %1376 = vmatprep.subr.bf16.mxu0 0
    %1377 = vmatpush1.bf16.msra.mxu0 %v516
    %1378 = vmatprep.subr.bf16.mxu0 0
    %1379 = vmatpush1.bf16.msra.mxu0 %v513
    %1380 = vmatprep.subr.bf16.mxu0 0
    %1381 = vmatpush1.bf16.msra.mxu0 %v510
    %1382 = vmatprep.subr.bf16.mxu0 0
    %1383 = vmatpush1.bf16.msra.mxu0 %v507
    %1384 = vmatprep.subr.bf16.mxu0 0
    %1385 = vmatpush2.bf16.msra.mxu0 0
    %1386 = vmatprep.subr.bf16.mxu0 0
    %1387 = vmatpush2.bf16.msra.mxu0 0
    %1388 = vmatprep.subr.bf16.mxu0 0
    %1389 = vmatpush2.bf16.msra.mxu0 0
    %1390 = vmatprep.subr.bf16.mxu0 0
    %1391 = vmatpush2.bf16.msra.mxu0 0
    %1392 = vmatprep.subr.bf16.mxu0 0
    %1393 = vmatpush2.bf16.msra.mxu0 0
    %1394 = vmatprep.subr.bf16.mxu0 0
    %1395 = vmatpush2.bf16.msra.mxu0 0
    %1396 = vmatprep.subr.bf16.mxu0 0
    %1397 = vmatpush2.bf16.msra.mxu0 0
    %1398 = vmatprep.subr.bf16.mxu0 0
    %1399 = vmatpush2.bf16.msra.mxu0 0
    %1400 = vmatprep.mubr.bf16.mxu0 0
    %1401 = vmatmul.mubr.bf16.gmra.mxu0 %v1326
    %v1402 = vpop.f32.mrf.mxu0
    %v1403 = vadd.f32 0.0, %v1402
    %v1404 = vpop.f32.mrf.mxu0
    %v1405 = vpop.f32.mrf.mxu0
    %v1406 = vpop.f32.mrf.mxu0
    %1407 = vdwg.mxu0
    %s1408 = scalar_lea.vmem [#allocation3], 168
    %v1409 = vld [vmem:[%s1408] sm:$0xff]
    %v1410 = vld [vmem:[%s1408 + $0x8] sm:$0xff]
    %v1411 = vld [vmem:[%s1408 + $0x10] sm:$0xff]
    %v1412 = vadd.f32 %v1409, %v1362
    %v1413 = vxor.u32 %v1412, 2147483648
    %v1414 = vmul.f32 %v1413, 1.442695
    %v1415 = vpow.pop %v1414
    %v1416 = vadd.f32 %v1415, 1.0
    %v1417 = vrcp.pop %v1416
    %v1418 = vmul.f32 1.0, %v1417
    %v1419 = vadd.f32 %v1410, %v1364
    %v1420 = vxor.u32 %v1419, 2147483648
    %v1421 = vmul.f32 %v1420, 1.442695
    %v1422 = vpow.pop %v1421
    %v1423 = vadd.f32 %v1422, 1.0
    %v1424 = vrcp.pop %v1423
    %v1425 = vmul.f32 1.0, %v1424
    %v1426 = vadd.f32 %v1403, %v655
    %v1427 = vmul.f32 %v1418, %v1426
    %v1428 = vadd.f32 %v1411, %v1427
    %v1429 = vtanh.pop %v1428
    %v1430 = vsub.f32 1.0, %v1425
    %v1431 = vmul.f32 %v1430, %v1429
    %v1432 = vmul.f32 %v1425, %v1323
    %v1433 = vadd.f32 %v1431, %v1432
    %s1434 = scalar_lea.vmem [#allocation2], 56
    %1435 = vst [vmem:[%s1434] sm:$0xff] %v1433
    %1436 = vst [vmem:[%s10] sm:$0xff] %v1433
    %v1437 = vld [vmem:[%s3] sm:$0xff]
    %v1438 = vld [vmem:[%s3 + $0x8] sm:$0xf]
    %v1439 = vld [vmem:[%s3 + $0xc] sm:$0xff]
    %v1440 = vld [vmem:[%s3 + $0x14] sm:$0xf]
    %v1441 = vld [vmem:[%s3 + $0x18] sm:$0xff]
    %v1442 = vld [vmem:[%s3 + $0x20] sm:$0xf]
    %v1443 = vld [vmem:[%s3 + $0x24] sm:$0xff]
    %v1444 = vld [vmem:[%s3 + $0x2c] sm:$0xf]
    %v1445 = vld [vmem:[%s3 + $0x30] sm:$0xff]
    %v1446 = vld [vmem:[%s3 + $0x38] sm:$0xf]
    %v1447 = vld [vmem:[%s3 + $0x3c] sm:$0xff]
    %v1448 = vld [vmem:[%s3 + $0x44] sm:$0xf]
    %v1449 = vld [vmem:[%s3 + $0x48] sm:$0xff]
    %v1450 = vld [vmem:[%s3 + $0x50] sm:$0xf]
    %v1451 = vld [vmem:[%s3 + $0x54] sm:$0xff]
    %v1452 = vld [vmem:[%s3 + $0x5c] sm:$0xf]
    %v1453 = vld [vmem:[%s3 + $0x60] sm:$0xff]
    %v1454 = vld [vmem:[%s3 + $0x68] sm:$0xf]
    %v1455 = vld [vmem:[%s3 + $0x6c] sm:$0xff]
    %v1456 = vld [vmem:[%s3 + $0x74] sm:$0xf]
    %v1457 = vld [vmem:[%s3 + $0x78] sm:$0xff]
    %v1458 = vld [vmem:[%s3 + $0x80] sm:$0xf]
    %v1459 = vld [vmem:[%s3 + $0x84] sm:$0xff]
    %v1460 = vld [vmem:[%s3 + $0x8c] sm:$0xf]
    %v1461 = vld [vmem:[%s3 + $0x90] sm:$0xff]
    %v1462 = vld [vmem:[%s3 + $0x98] sm:$0xf]
    %v1463 = vld [vmem:[%s3 + $0x9c] sm:$0xff]
    %v1464 = vld [vmem:[%s3 + $0xa4] sm:$0xf]
    %v1465 = vld [vmem:[%s3 + $0xa8] sm:$0xff]
    %v1466 = vld [vmem:[%s3 + $0xb0] sm:$0xf]
    %v1467 = vld [vmem:[%s3 + $0xb4] sm:$0xff]
    %v1468 = vld [vmem:[%s3 + $0xbc] sm:$0xf]
    %s1469 = scalar_lea.vmem %s4, 192
    %v1470 = vld [vmem:[%s1469] sm:$0xff]
    %v1471 = vld [vmem:[%s1469 + $0x8] sm:$0xf]
    %v1472 = vld [vmem:[%s1469 + $0xc] sm:$0xff]
    %v1473 = vld [vmem:[%s1469 + $0x14] sm:$0xf]
    %v1474 = vld [vmem:[%s1469 + $0x18] sm:$0xff]
    %v1475 = vld [vmem:[%s1469 + $0x20] sm:$0xf]
    %v1476 = vld [vmem:[%s1469 + $0x24] sm:$0xff]
    %v1477 = vld [vmem:[%s1469 + $0x2c] sm:$0xf]
    %v1478 = vld [vmem:[%s1469 + $0x30] sm:$0xff]
    %v1479 = vld [vmem:[%s1469 + $0x38] sm:$0xf]
    %v1480 = vld [vmem:[%s1469 + $0x3c] sm:$0xff]
    %v1481 = vld [vmem:[%s1469 + $0x44] sm:$0xf]
    %v1482 = vld [vmem:[%s1469 + $0x48] sm:$0xff]
    %v1483 = vld [vmem:[%s1469 + $0x50] sm:$0xf]
    %v1484 = vld [vmem:[%s1469 + $0x54] sm:$0xff]
    %v1485 = vld [vmem:[%s1469 + $0x5c] sm:$0xf]
    %v1486 = vld [vmem:[%s1469 + $0x60] sm:$0xff]
    %v1487 = vld [vmem:[%s1469 + $0x68] sm:$0xf]
    %v1488 = vld [vmem:[%s1469 + $0x6c] sm:$0xff]
    %v1489 = vld [vmem:[%s1469 + $0x74] sm:$0xf]
    %v1490 = vld [vmem:[%s1469 + $0x78] sm:$0xff]
    %v1491 = vld [vmem:[%s1469 + $0x80] sm:$0xf]
    %v1492 = vld [vmem:[%s1469 + $0x84] sm:$0xff]
    %v1493 = vld [vmem:[%s1469 + $0x8c] sm:$0xf]
    %v1494 = vld [vmem:[%s1469 + $0x90] sm:$0xff]
    %v1495 = vld [vmem:[%s1469 + $0x98] sm:$0xf]
    %v1496 = vld [vmem:[%s1469 + $0x9c] sm:$0xff]
    %v1497 = vld [vmem:[%s1469 + $0xa4] sm:$0xf]
    %v1498 = vld [vmem:[%s1469 + $0xa8] sm:$0xff]
    %v1499 = vld [vmem:[%s1469 + $0xb0] sm:$0xf]
    %v1500 = vld [vmem:[%s1469 + $0xb4] sm:$0xff]
    %v1501 = vld [vmem:[%s1469 + $0xbc] sm:$0xf]
    %s1502 = scalar_lea.vmem %s5, 3
    %v1503 = vld [vmem:[%s1502] sm:$0x7]
    %s1504 = scalar_lea.vmem %s6, 1
    %v1505 = vld [vmem:[%s1504] sm:$0x1]
    %s1506 = scalar_lea.vmem %s1, 8
    %v1507 = vld [vmem:[%s1506] sm:$0xff]
    %v1508 = vld [vmem:[#allocation2] sm:$0xff]
    %v1509 = vld [vmem:[#allocation2 + $0x8] sm:$0xff]
    %v1510 = vld [vmem:[#allocation2 + $0x10] sm:$0xff]
    %v1511 = vld [vmem:[#allocation2 + $0x18] sm:$0xff]
    %v1512 = vld [vmem:[#allocation2 + $0x20] sm:$0xff]
    %v1513 = vld [vmem:[#allocation2 + $0x28] sm:$0xff]
    %v1514 = vld [vmem:[#allocation2 + $0x30] sm:$0xff]
    %v1515 = vld [vmem:[#allocation2 + $0x38] sm:$0xff]
    %v1516 = vpack.c.bf16 %v1509, %v1508
    %v1517 = vpack.c.bf16 %v1511, %v1510
    %v1518 = vpack.c.bf16 %v1513, %v1512
    %v1519 = vpack.c.bf16 %v1515, %v1514
    %v1521 = vlaneseq
    %v1522 = vshrl.u32 %v1521, 7
    %v1523 = vsub.s32 0, %v1522
    %v1524 = vrot.slane %v1503, %v1523
    %v1525 = vlaneseq
    %v1526 = vshrl.u32 %v1525, 7
    %v1527 = vsub.s32 1, %v1526
    %v1528 = vrot.slane %v1503, %v1527
    %v1529 = vlaneseq
    %v1530 = vshrl.u32 %v1529, 7
    %v1531 = vsub.s32 2, %v1530
    %v1532 = vrot.slane %v1503, %v1531
    %v1568 = vunpack.c.l.b16 %v1437
    %v1569 = vunpack.c.h.b16 %v1437
    %v1570 = vunpack.c.l.b16 %v1438
    %v1571 = vunpack.c.l.b16 %v1439
    %v1572 = vunpack.c.h.b16 %v1439
    %v1573 = vunpack.c.l.b16 %v1440
    %v1574 = vunpack.c.l.b16 %v1441
    %v1575 = vunpack.c.h.b16 %v1441
    %v1576 = vunpack.c.l.b16 %v1442
    %v1577 = vunpack.c.l.b16 %v1443
    %v1578 = vunpack.c.h.b16 %v1443
    %v1579 = vunpack.c.l.b16 %v1444
    %v1580 = vunpack.c.l.b16 %v1445
    %v1581 = vunpack.c.h.b16 %v1445
    %v1582 = vunpack.c.l.b16 %v1446
    %v1583 = vunpack.c.l.b16 %v1447
    %v1584 = vunpack.c.h.b16 %v1447
    %v1585 = vunpack.c.l.b16 %v1448
    %v1586 = vunpack.c.l.b16 %v1449
    %v1587 = vunpack.c.h.b16 %v1449
    %v1588 = vunpack.c.l.b16 %v1450
    %v1589 = vunpack.c.l.b16 %v1451
    %v1590 = vunpack.c.h.b16 %v1451
    %v1591 = vunpack.c.l.b16 %v1452
    %v1592 = vunpack.c.l.b16 %v1453
    %v1593 = vunpack.c.h.b16 %v1453
    %v1594 = vunpack.c.l.b16 %v1454
    %v1595 = vunpack.c.l.b16 %v1455
    %v1596 = vunpack.c.h.b16 %v1455
    %v1597 = vunpack.c.l.b16 %v1456
    %v1598 = vunpack.c.l.b16 %v1457
    %v1599 = vunpack.c.h.b16 %v1457
    %v1600 = vunpack.c.l.b16 %v1458
    %v1601 = vunpack.c.l.b16 %v1459
    %v1602 = vunpack.c.h.b16 %v1459
    %v1603 = vunpack.c.l.b16 %v1460
    %v1604 = vunpack.c.l.b16 %v1461
    %v1605 = vunpack.c.h.b16 %v1461
    %v1606 = vunpack.c.l.b16 %v1462
    %v1607 = vunpack.c.l.b16 %v1463
    %v1608 = vunpack.c.h.b16 %v1463
    %v1609 = vunpack.c.l.b16 %v1464
    %v1610 = vunpack.c.l.b16 %v1465
    %v1611 = vunpack.c.h.b16 %v1465
    %v1612 = vunpack.c.l.b16 %v1466
    %v1613 = vunpack.c.l.b16 %v1467
    %v1614 = vunpack.c.h.b16 %v1467
    %v1615 = vunpack.c.l.b16 %v1468
    %v1616 = vpack.c.b16 %v1571, %v1568
    %v1617 = vpack.c.b16 %v1572, %v1569
    %v1618 = vpack.c.b16 %v1573, %v1570
    %v1619 = vpack.c.b16 %v1577, %v1574
    %v1620 = vpack.c.b16 %v1578, %v1575
    %v1621 = vpack.c.b16 %v1579, %v1576
    %v1622 = vpack.c.b16 %v1583, %v1580
    %v1623 = vpack.c.b16 %v1584, %v1581
    %v1624 = vpack.c.b16 %v1585, %v1582
    %v1625 = vpack.c.b16 %v1589, %v1586
    %v1626 = vpack.c.b16 %v1590, %v1587
    %v1627 = vpack.c.b16 %v1591, %v1588
    %v1628 = vpack.c.b16 %v1595, %v1592
    %v1629 = vpack.c.b16 %v1596, %v1593
    %v1630 = vpack.c.b16 %v1597, %v1594
    %v1631 = vpack.c.b16 %v1601, %v1598
    %v1632 = vpack.c.b16 %v1602, %v1599
    %v1633 = vpack.c.b16 %v1603, %v1600
    %v1634 = vpack.c.b16 %v1607, %v1604
    %v1635 = vpack.c.b16 %v1608, %v1605
    %v1636 = vpack.c.b16 %v1609, %v1606
    %v1637 = vpack.c.b16 %v1613, %v1610
    %v1638 = vpack.c.b16 %v1614, %v1611
    %v1639 = vpack.c.b16 %v1615, %v1612
    %1664 = vmatprep.subr.bf16.mxu0 %v1638
    %1665 = vmatpush1.bf16.msra.mxu0 %v1637
    %1666 = vmatprep.subr.bf16.mxu0 %v1635
    %1667 = vmatpush1.bf16.msra.mxu0 %v1634
    %1668 = vmatprep.subr.bf16.mxu0 %v1632
    %1669 = vmatpush1.bf16.msra.mxu0 %v1631
    %1670 = vmatprep.subr.bf16.mxu0 %v1629
    %1671 = vmatpush1.bf16.msra.mxu0 %v1628
    %1672 = vmatprep.subr.bf16.mxu0 %v1626
    %1673 = vmatpush1.bf16.msra.mxu0 %v1625
    %1674 = vmatprep.subr.bf16.mxu0 %v1623
    %1675 = vmatpush1.bf16.msra.mxu0 %v1622
    %1676 = vmatprep.subr.bf16.mxu0 %v1620
    %1677 = vmatpush1.bf16.msra.mxu0 %v1619
    %1678 = vmatprep.subr.bf16.mxu0 %v1617
    %1679 = vmatpush1.bf16.msra.mxu0 %v1616
    %1680 = vmatprep.subr.bf16.mxu0 0
    %1681 = vmatpush2.bf16.msra.mxu0 0
    %1682 = vmatprep.subr.bf16.mxu0 0
    %1683 = vmatpush2.bf16.msra.mxu0 0
    %1684 = vmatprep.subr.bf16.mxu0 0
    %1685 = vmatpush2.bf16.msra.mxu0 0
    %1686 = vmatprep.subr.bf16.mxu0 0
    %1687 = vmatpush2.bf16.msra.mxu0 0
    %1688 = vmatprep.subr.bf16.mxu0 0
    %1689 = vmatpush2.bf16.msra.mxu0 0
    %1690 = vmatprep.subr.bf16.mxu0 0
    %1691 = vmatpush2.bf16.msra.mxu0 0
    %1692 = vmatprep.subr.bf16.mxu0 0
    %1693 = vmatpush2.bf16.msra.mxu0 0
    %1694 = vmatprep.subr.bf16.mxu0 0
    %1695 = vmatpush2.bf16.msra.mxu0 0
    %1696 = vmatprep.mubr.bf16.mxu0 0
    %1697 = vmatmul.mubr.bf16.gmra.mxu0 %v1516
    %v1698 = vpop.f32.mrf.mxu0
    %v1699 = vadd.f32 %v1524, %v1698
    %v1700 = vpop.f32.mrf.mxu0
    %v1701 = vadd.f32 %v1528, %v1700
    %v1702 = vpop.f32.mrf.mxu0
    %v1703 = vadd.f32 %v1524, %v1702
    %v1704 = vpop.f32.mrf.mxu0
    %v1705 = vadd.f32 %v1528, %v1704
    %1706 = vmatprep.mubr.bf16.mxu0 0
    %1707 = vmatmul.mubr.bf16.gmra.mxu0 %v1517
    %v1708 = vpop.f32.mrf.mxu0
    %v1709 = vadd.f32 %v1524, %v1708
    %v1710 = vpop.f32.mrf.mxu0
    %v1711 = vadd.f32 %v1528, %v1710
    %v1712 = vpop.f32.mrf.mxu0
    %v1713 = vadd.f32 %v1524, %v1712
    %v1714 = vpop.f32.mrf.mxu0
    %v1715 = vadd.f32 %v1528, %v1714
    %1716 = vmatprep.mubr.bf16.mxu0 0
    %1717 = vmatmul.mubr.bf16.gmra.mxu0 %v1518
    %v1718 = vpop.f32.mrf.mxu0
    %v1719 = vadd.f32 %v1524, %v1718
    %v1720 = vpop.f32.mrf.mxu0
    %v1721 = vadd.f32 %v1528, %v1720
    %v1722 = vpop.f32.mrf.mxu0
    %v1723 = vadd.f32 %v1524, %v1722
    %v1724 = vpop.f32.mrf.mxu0
    %v1725 = vadd.f32 %v1528, %v1724
    %1726 = vmatprep.mubr.bf16.mxu0 0
    %1727 = vmatmul.mubr.bf16.gmra.mxu0 %v1519
    %v1728 = vpop.f32.mrf.mxu0
    %v1729 = vadd.f32 %v1524, %v1728
    %v1730 = vpop.f32.mrf.mxu0
    %v1731 = vadd.f32 %v1528, %v1730
    %v1732 = vpop.f32.mrf.mxu0
    %v1733 = vadd.f32 %v1524, %v1732
    %v1734 = vpop.f32.mrf.mxu0
    %v1735 = vadd.f32 %v1528, %v1734
    %1736 = vdwg.mxu0
    %1737 = vmatprep.subr.bf16.mxu0 0
    %1738 = vmatpush1.bf16.msra.mxu0 %v1639
    %1739 = vmatprep.subr.bf16.mxu0 0
    %1740 = vmatpush1.bf16.msra.mxu0 %v1636
    %1741 = vmatprep.subr.bf16.mxu0 0
    %1742 = vmatpush1.bf16.msra.mxu0 %v1633
    %1743 = vmatprep.subr.bf16.mxu0 0
    %1744 = vmatpush1.bf16.msra.mxu0 %v1630
    %1745 = vmatprep.subr.bf16.mxu0 0
    %1746 = vmatpush1.bf16.msra.mxu0 %v1627
    %1747 = vmatprep.subr.bf16.mxu0 0
    %1748 = vmatpush1.bf16.msra.mxu0 %v1624
    %1749 = vmatprep.subr.bf16.mxu0 0
    %1750 = vmatpush1.bf16.msra.mxu0 %v1621
    %1751 = vmatprep.subr.bf16.mxu0 0
    %1752 = vmatpush1.bf16.msra.mxu0 %v1618
    %1753 = vmatprep.subr.bf16.mxu0 0
    %1754 = vmatpush2.bf16.msra.mxu0 0
    %1755 = vmatprep.subr.bf16.mxu0 0
    %1756 = vmatpush2.bf16.msra.mxu0 0
    %1757 = vmatprep.subr.bf16.mxu0 0
    %1758 = vmatpush2.bf16.msra.mxu0 0
    %1759 = vmatprep.subr.bf16.mxu0 0
    %1760 = vmatpush2.bf16.msra.mxu0 0
    %1761 = vmatprep.subr.bf16.mxu0 0
    %1762 = vmatpush2.bf16.msra.mxu0 0
    %1763 = vmatprep.subr.bf16.mxu0 0
    %1764 = vmatpush2.bf16.msra.mxu0 0
    %1765 = vmatprep.subr.bf16.mxu0 0
    %1766 = vmatpush2.bf16.msra.mxu0 0
    %1767 = vmatprep.subr.bf16.mxu0 0
    %1768 = vmatpush2.bf16.msra.mxu0 0
    %1769 = vmatprep.mubr.bf16.mxu0 0
    %1770 = vmatmul.mubr.bf16.gmra.mxu0 %v1516
    %v1771 = vpop.f32.mrf.mxu0
    %v1772 = vadd.f32 %v1532, %v1771
    %v1773 = vpop.f32.mrf.mxu0
    %v1774 = vpop.f32.mrf.mxu0
    %v1775 = vadd.f32 %v1532, %v1774
    %v1776 = vpop.f32.mrf.mxu0
    %1777 = vmatprep.mubr.bf16.mxu0 0
    %1778 = vmatmul.mubr.bf16.gmra.mxu0 %v1517
    %v1779 = vpop.f32.mrf.mxu0
    %v1780 = vadd.f32 %v1532, %v1779
    %v1781 = vpop.f32.mrf.mxu0
    %v1782 = vpop.f32.mrf.mxu0
    %v1783 = vadd.f32 %v1532, %v1782
    %v1784 = vpop.f32.mrf.mxu0
    %1785 = vmatprep.mubr.bf16.mxu0 0
    %1786 = vmatmul.mubr.bf16.gmra.mxu0 %v1518
    %v1787 = vpop.f32.mrf.mxu0
    %v1788 = vadd.f32 %v1532, %v1787
    %v1789 = vpop.f32.mrf.mxu0
    %v1790 = vpop.f32.mrf.mxu0
    %v1791 = vadd.f32 %v1532, %v1790
    %v1792 = vpop.f32.mrf.mxu0
    %1793 = vmatprep.mubr.bf16.mxu0 0
    %1794 = vmatmul.mubr.bf16.gmra.mxu0 %v1519
    %v1795 = vpop.f32.mrf.mxu0
    %v1796 = vadd.f32 %v1532, %v1795
    %v1797 = vpop.f32.mrf.mxu0
    %v1798 = vpop.f32.mrf.mxu0
    %v1799 = vadd.f32 %v1532, %v1798
    %v1800 = vpop.f32.mrf.mxu0
    %1801 = vdwg.mxu0
    %1802 = vst [vmem:[#allocation3] sm:$0xff] %v1699
    %1803 = vst [vmem:[#allocation3 + $0x8] sm:$0xff] %v1701
    %1804 = vst [vmem:[#allocation3 + $0x10] sm:$0xff] %v1772
    %1805 = vst [vmem:[#allocation3 + $0x18] sm:$0xff] %v1703
    %1806 = vst [vmem:[#allocation3 + $0x20] sm:$0xff] %v1705
    %1807 = vst [vmem:[#allocation3 + $0x28] sm:$0xff] %v1775
    %1808 = vst [vmem:[#allocation3 + $0x30] sm:$0xff] %v1709
    %1809 = vst [vmem:[#allocation3 + $0x38] sm:$0xff] %v1711
    %1810 = vst [vmem:[#allocation3 + $0x40] sm:$0xff] %v1780
    %1811 = vst [vmem:[#allocation3 + $0x48] sm:$0xff] %v1713
    %1812 = vst [vmem:[#allocation3 + $0x50] sm:$0xff] %v1715
    %1813 = vst [vmem:[#allocation3 + $0x58] sm:$0xff] %v1783
    %1814 = vst [vmem:[#allocation3 + $0x60] sm:$0xff] %v1719
    %1815 = vst [vmem:[#allocation3 + $0x68] sm:$0xff] %v1721
    %1816 = vst [vmem:[#allocation3 + $0x70] sm:$0xff] %v1788
    %1817 = vst [vmem:[#allocation3 + $0x78] sm:$0xff] %v1723
    %1818 = vst [vmem:[#allocation3 + $0x80] sm:$0xff] %v1725
    %1819 = vst [vmem:[#allocation3 + $0x88] sm:$0xff] %v1791
    %1820 = vst [vmem:[#allocation3 + $0x90] sm:$0xff] %v1729
    %1821 = vst [vmem:[#allocation3 + $0x98] sm:$0xff] %v1731
    %1822 = vst [vmem:[#allocation3 + $0xa0] sm:$0xff] %v1796
    %1823 = vst [vmem:[#allocation3 + $0xa8] sm:$0xff] %v1733
    %1824 = vst [vmem:[#allocation3 + $0xb0] sm:$0xff] %v1735
    %1825 = vst [vmem:[#allocation3 + $0xb8] sm:$0xff] %v1799
    %v1826 = vpack.c.bf16 %v1507, %v1507
    %v1859 = vunpack.c.l.b16 %v1470
    %v1860 = vunpack.c.h.b16 %v1470
    %v1861 = vunpack.c.l.b16 %v1471
    %v1862 = vunpack.c.l.b16 %v1472
    %v1863 = vunpack.c.h.b16 %v1472
    %v1864 = vunpack.c.l.b16 %v1473
    %v1865 = vunpack.c.l.b16 %v1474
    %v1866 = vunpack.c.h.b16 %v1474
    %v1867 = vunpack.c.l.b16 %v1475
    %v1868 = vunpack.c.l.b16 %v1476
    %v1869 = vunpack.c.h.b16 %v1476
    %v1870 = vunpack.c.l.b16 %v1477
    %v1871 = vunpack.c.l.b16 %v1478
    %v1872 = vunpack.c.h.b16 %v1478
    %v1873 = vunpack.c.l.b16 %v1479
    %v1874 = vunpack.c.l.b16 %v1480
    %v1875 = vunpack.c.h.b16 %v1480
    %v1876 = vunpack.c.l.b16 %v1481
    %v1877 = vunpack.c.l.b16 %v1482
    %v1878 = vunpack.c.h.b16 %v1482
    %v1879 = vunpack.c.l.b16 %v1483
    %v1880 = vunpack.c.l.b16 %v1484
    %v1881 = vunpack.c.h.b16 %v1484
    %v1882 = vunpack.c.l.b16 %v1485
    %v1883 = vunpack.c.l.b16 %v1486
    %v1884 = vunpack.c.h.b16 %v1486
    %v1885 = vunpack.c.l.b16 %v1487
    %v1886 = vunpack.c.l.b16 %v1488
    %v1887 = vunpack.c.h.b16 %v1488
    %v1888 = vunpack.c.l.b16 %v1489
    %v1889 = vunpack.c.l.b16 %v1490
    %v1890 = vunpack.c.h.b16 %v1490
    %v1891 = vunpack.c.l.b16 %v1491
    %v1892 = vunpack.c.l.b16 %v1492
    %v1893 = vunpack.c.h.b16 %v1492
    %v1894 = vunpack.c.l.b16 %v1493
    %v1895 = vunpack.c.l.b16 %v1494
    %v1896 = vunpack.c.h.b16 %v1494
    %v1897 = vunpack.c.l.b16 %v1495
    %v1898 = vunpack.c.l.b16 %v1496
    %v1899 = vunpack.c.h.b16 %v1496
    %v1900 = vunpack.c.l.b16 %v1497
    %v1901 = vunpack.c.l.b16 %v1498
    %v1902 = vunpack.c.h.b16 %v1498
    %v1903 = vunpack.c.l.b16 %v1499
    %v1904 = vunpack.c.l.b16 %v1500
    %v1905 = vunpack.c.h.b16 %v1500
    %v1906 = vunpack.c.l.b16 %v1501
    %v1907 = vpack.c.b16 %v1862, %v1859
    %v1908 = vpack.c.b16 %v1863, %v1860
    %v1909 = vpack.c.b16 %v1864, %v1861
    %v1910 = vpack.c.b16 %v1868, %v1865
    %v1911 = vpack.c.b16 %v1869, %v1866
    %v1912 = vpack.c.b16 %v1870, %v1867
    %v1913 = vpack.c.b16 %v1874, %v1871
    %v1914 = vpack.c.b16 %v1875, %v1872
    %v1915 = vpack.c.b16 %v1876, %v1873
    %v1916 = vpack.c.b16 %v1880, %v1877
    %v1917 = vpack.c.b16 %v1881, %v1878
    %v1918 = vpack.c.b16 %v1882, %v1879
    %v1919 = vpack.c.b16 %v1886, %v1883
    %v1920 = vpack.c.b16 %v1887, %v1884
    %v1921 = vpack.c.b16 %v1888, %v1885
    %v1922 = vpack.c.b16 %v1892, %v1889
    %v1923 = vpack.c.b16 %v1893, %v1890
    %v1924 = vpack.c.b16 %v1894, %v1891
    %v1925 = vpack.c.b16 %v1898, %v1895
    %v1926 = vpack.c.b16 %v1899, %v1896
    %v1927 = vpack.c.b16 %v1900, %v1897
    %v1928 = vpack.c.b16 %v1904, %v1901
    %v1929 = vpack.c.b16 %v1905, %v1902
    %v1930 = vpack.c.b16 %v1906, %v1903
    %1955 = vmatprep.subr.bf16.mxu0 %v1929
    %1956 = vmatpush1.bf16.msra.mxu0 %v1928
    %1957 = vmatprep.subr.bf16.mxu0 %v1926
    %1958 = vmatpush1.bf16.msra.mxu0 %v1925
    %1959 = vmatprep.subr.bf16.mxu0 %v1923
    %1960 = vmatpush1.bf16.msra.mxu0 %v1922
    %1961 = vmatprep.subr.bf16.mxu0 %v1920
    %1962 = vmatpush1.bf16.msra.mxu0 %v1919
    %1963 = vmatprep.subr.bf16.mxu0 %v1917
    %1964 = vmatpush1.bf16.msra.mxu0 %v1916
    %1965 = vmatprep.subr.bf16.mxu0 %v1914
    %1966 = vmatpush1.bf16.msra.mxu0 %v1913
    %1967 = vmatprep.subr.bf16.mxu0 %v1911
    %1968 = vmatpush1.bf16.msra.mxu0 %v1910
    %1969 = vmatprep.subr.bf16.mxu0 %v1908
    %1970 = vmatpush1.bf16.msra.mxu0 %v1907
    %1971 = vmatprep.subr.bf16.mxu0 0
    %1972 = vmatpush2.bf16.msra.mxu0 0
    %1973 = vmatprep.subr.bf16.mxu0 0
    %1974 = vmatpush2.bf16.msra.mxu0 0
    %1975 = vmatprep.subr.bf16.mxu0 0
    %1976 = vmatpush2.bf16.msra.mxu0 0
    %1977 = vmatprep.subr.bf16.mxu0 0
    %1978 = vmatpush2.bf16.msra.mxu0 0
    %1979 = vmatprep.subr.bf16.mxu0 0
    %1980 = vmatpush2.bf16.msra.mxu0 0
    %1981 = vmatprep.subr.bf16.mxu0 0
    %1982 = vmatpush2.bf16.msra.mxu0 0
    %1983 = vmatprep.subr.bf16.mxu0 0
    %1984 = vmatpush2.bf16.msra.mxu0 0
    %1985 = vmatprep.subr.bf16.mxu0 0
    %1986 = vmatpush2.bf16.msra.mxu0 0
    %1987 = vmatprep.mubr.bf16.mxu0 0
    %1988 = vmatmul.mubr.bf16.gmra.mxu0 %v1826
    %v1989 = vpop.f32.mrf.mxu0
    %v1990 = vadd.f32 0.0, %v1989
    %v1991 = vpop.f32.mrf.mxu0
    %v1992 = vadd.f32 0.0, %v1991
    %v1993 = vpop.f32.mrf.mxu0
    %v1994 = vpop.f32.mrf.mxu0
    %1995 = vdwg.mxu0
    %1996 = vmatprep.subr.bf16.mxu0 0
    %1997 = vmatpush1.bf16.msra.mxu0 %v1930
    %1998 = vmatprep.subr.bf16.mxu0 0
    %1999 = vmatpush1.bf16.msra.mxu0 %v1927
    %2000 = vmatprep.subr.bf16.mxu0 0
    %2001 = vmatpush1.bf16.msra.mxu0 %v1924
    %2002 = vmatprep.subr.bf16.mxu0 0
    %2003 = vmatpush1.bf16.msra.mxu0 %v1921
    %2004 = vmatprep.subr.bf16.mxu0 0
    %2005 = vmatpush1.bf16.msra.mxu0 %v1918
    %2006 = vmatprep.subr.bf16.mxu0 0
    %2007 = vmatpush1.bf16.msra.mxu0 %v1915
    %2008 = vmatprep.subr.bf16.mxu0 0
    %2009 = vmatpush1.bf16.msra.mxu0 %v1912
    %2010 = vmatprep.subr.bf16.mxu0 0
    %2011 = vmatpush1.bf16.msra.mxu0 %v1909
    %2012 = vmatprep.subr.bf16.mxu0 0
    %2013 = vmatpush2.bf16.msra.mxu0 0
    %2014 = vmatprep.subr.bf16.mxu0 0
    %2015 = vmatpush2.bf16.msra.mxu0 0
    %2016 = vmatprep.subr.bf16.mxu0 0
    %2017 = vmatpush2.bf16.msra.mxu0 0
    %2018 = vmatprep.subr.bf16.mxu0 0
    %2019 = vmatpush2.bf16.msra.mxu0 0
    %2020 = vmatprep.subr.bf16.mxu0 0
    %2021 = vmatpush2.bf16.msra.mxu0 0
    %2022 = vmatprep.subr.bf16.mxu0 0
    %2023 = vmatpush2.bf16.msra.mxu0 0
    %2024 = vmatprep.subr.bf16.mxu0 0
    %2025 = vmatpush2.bf16.msra.mxu0 0
    %2026 = vmatprep.subr.bf16.mxu0 0
    %2027 = vmatpush2.bf16.msra.mxu0 0
    %2028 = vmatprep.mubr.bf16.mxu0 0
    %2029 = vmatmul.mubr.bf16.gmra.mxu0 %v1826
    %v2030 = vpop.f32.mrf.mxu0
    %v2031 = vadd.f32 0.0, %v2030
    %v2032 = vpop.f32.mrf.mxu0
    %v2033 = vpop.f32.mrf.mxu0
    %v2034 = vpop.f32.mrf.mxu0
    %2035 = vdwg.mxu0
    %v2036 = vld [vmem:[#allocation3] sm:$0xff]
    %v2037 = vld [vmem:[#allocation3 + $0x8] sm:$0xff]
    %v2038 = vld [vmem:[#allocation3 + $0x10] sm:$0xff]
    %v2039 = vadd.f32 %v2036, %v1990
    %v2040 = vxor.u32 %v2039, 2147483648
    %v2041 = vmul.f32 %v2040, 1.442695
    %v2042 = vpow.pop %v2041
    %v2043 = vadd.f32 %v2042, 1.0
    %v2044 = vrcp.pop %v2043
    %v2045 = vmul.f32 1.0, %v2044
    %v2046 = vadd.f32 %v2037, %v1992
    %v2047 = vxor.u32 %v2046, 2147483648
    %v2048 = vmul.f32 %v2047, 1.442695
    %v2049 = vpow.pop %v2048
    %v2050 = vadd.f32 %v2049, 1.0
    %v2051 = vrcp.pop %v2050
    %v2052 = vmul.f32 1.0, %v2051
    %v2054 = vlaneseq
    %v2055 = vshrl.u32 %v2054, 7
    %v2056 = vsub.s32 0, %v2055
    %v2057 = vrot.slane %v1505, %v2056
    %v2059 = vadd.f32 %v2031, %v2057
    %v2060 = vmul.f32 %v2045, %v2059
    %v2061 = vadd.f32 %v2038, %v2060
    %v2062 = vtanh.pop %v2061
    %v2063 = vsub.f32 1.0, %v2052
    %v2064 = vmul.f32 %v2063, %v2062
    %v2065 = vmul.f32 %v2052, %v1507
    %v2066 = vadd.f32 %v2064, %v2065
    %2067 = vst [vmem:[#allocation2] sm:$0xff] %v2066
    %v2068 = vpack.c.bf16 %v2066, %v2066
    %2069 = vmatprep.subr.bf16.mxu0 %v1929
    %2070 = vmatpush1.bf16.msra.mxu0 %v1928
    %2071 = vmatprep.subr.bf16.mxu0 %v1926
    %2072 = vmatpush1.bf16.msra.mxu0 %v1925
    %2073 = vmatprep.subr.bf16.mxu0 %v1923
    %2074 = vmatpush1.bf16.msra.mxu0 %v1922
    %2075 = vmatprep.subr.bf16.mxu0 %v1920
    %2076 = vmatpush1.bf16.msra.mxu0 %v1919
    %2077 = vmatprep.subr.bf16.mxu0 %v1917
    %2078 = vmatpush1.bf16.msra.mxu0 %v1916
    %2079 = vmatprep.subr.bf16.mxu0 %v1914
    %2080 = vmatpush1.bf16.msra.mxu0 %v1913
    %2081 = vmatprep.subr.bf16.mxu0 %v1911
    %2082 = vmatpush1.bf16.msra.mxu0 %v1910
    %2083 = vmatprep.subr.bf16.mxu0 %v1908
    %2084 = vmatpush1.bf16.msra.mxu0 %v1907
    %2085 = vmatprep.subr.bf16.mxu0 0
    %2086 = vmatpush2.bf16.msra.mxu0 0
    %2087 = vmatprep.subr.bf16.mxu0 0
    %2088 = vmatpush2.bf16.msra.mxu0 0
    %2089 = vmatprep.subr.bf16.mxu0 0
    %2090 = vmatpush2.bf16.msra.mxu0 0
    %2091 = vmatprep.subr.bf16.mxu0 0
    %2092 = vmatpush2.bf16.msra.mxu0 0
    %2093 = vmatprep.subr.bf16.mxu0 0
    %2094 = vmatpush2.bf16.msra.mxu0 0
    %2095 = vmatprep.subr.bf16.mxu0 0
    %2096 = vmatpush2.bf16.msra.mxu0 0
    %2097 = vmatprep.subr.bf16.mxu0 0
    %2098 = vmatpush2.bf16.msra.mxu0 0
    %2099 = vmatprep.subr.bf16.mxu0 0
    %2100 = vmatpush2.bf16.msra.mxu0 0
    %2101 = vmatprep.mubr.bf16.mxu0 0
    %2102 = vmatmul.mubr.bf16.gmra.mxu0 %v2068
    %v2103 = vpop.f32.mrf.mxu0
    %v2104 = vadd.f32 0.0, %v2103
    %v2105 = vpop.f32.mrf.mxu0
    %v2106 = vadd.f32 0.0, %v2105
    %v2107 = vpop.f32.mrf.mxu0
    %v2108 = vpop.f32.mrf.mxu0
    %2109 = vdwg.mxu0
    %2110 = vmatprep.subr.bf16.mxu0 0
    %2111 = vmatpush1.bf16.msra.mxu0 %v1930
    %2112 = vmatprep.subr.bf16.mxu0 0
    %2113 = vmatpush1.bf16.msra.mxu0 %v1927
    %2114 = vmatprep.subr.bf16.mxu0 0
    %2115 = vmatpush1.bf16.msra.mxu0 %v1924
    %2116 = vmatprep.subr.bf16.mxu0 0
    %2117 = vmatpush1.bf16.msra.mxu0 %v1921
    %2118 = vmatprep.subr.bf16.mxu0 0
    %2119 = vmatpush1.bf16.msra.mxu0 %v1918
    %2120 = vmatprep.subr.bf16.mxu0 0
    %2121 = vmatpush1.bf16.msra.mxu0 %v1915
    %2122 = vmatprep.subr.bf16.mxu0 0
    %2123 = vmatpush1.bf16.msra.mxu0 %v1912
    %2124 = vmatprep.subr.bf16.mxu0 0
    %2125 = vmatpush1.bf16.msra.mxu0 %v1909
    %2126 = vmatprep.subr.bf16.mxu0 0
    %2127 = vmatpush2.bf16.msra.mxu0 0
    %2128 = vmatprep.subr.bf16.mxu0 0
    %2129 = vmatpush2.bf16.msra.mxu0 0
    %2130 = vmatprep.subr.bf16.mxu0 0
    %2131 = vmatpush2.bf16.msra.mxu0 0
    %2132 = vmatprep.subr.bf16.mxu0 0
    %2133 = vmatpush2.bf16.msra.mxu0 0
    %2134 = vmatprep.subr.bf16.mxu0 0
    %2135 = vmatpush2.bf16.msra.mxu0 0
    %2136 = vmatprep.subr.bf16.mxu0 0
    %2137 = vmatpush2.bf16.msra.mxu0 0
    %2138 = vmatprep.subr.bf16.mxu0 0
    %2139 = vmatpush2.bf16.msra.mxu0 0
    %2140 = vmatprep.subr.bf16.mxu0 0
    %2141 = vmatpush2.bf16.msra.mxu0 0
    %2142 = vmatprep.mubr.bf16.mxu0 0
    %2143 = vmatmul.mubr.bf16.gmra.mxu0 %v2068
    %v2144 = vpop.f32.mrf.mxu0
    %v2145 = vadd.f32 0.0, %v2144
    %v2146 = vpop.f32.mrf.mxu0
    %v2147 = vpop.f32.mrf.mxu0
    %v2148 = vpop.f32.mrf.mxu0
    %2149 = vdwg.mxu0
    %v2150 = vld [vmem:[%s748] sm:$0xff]
    %v2151 = vld [vmem:[%s748 + $0x8] sm:$0xff]
    %v2152 = vld [vmem:[%s748 + $0x10] sm:$0xff]
    %v2153 = vadd.f32 %v2150, %v2104
    %v2154 = vxor.u32 %v2153, 2147483648
    %v2155 = vmul.f32 %v2154, 1.442695
    %v2156 = vpow.pop %v2155
    %v2157 = vadd.f32 %v2156, 1.0
    %v2158 = vrcp.pop %v2157
    %v2159 = vmul.f32 1.0, %v2158
    %v2160 = vadd.f32 %v2151, %v2106
    %v2161 = vxor.u32 %v2160, 2147483648
    %v2162 = vmul.f32 %v2161, 1.442695
    %v2163 = vpow.pop %v2162
    %v2164 = vadd.f32 %v2163, 1.0
    %v2165 = vrcp.pop %v2164
    %v2166 = vmul.f32 1.0, %v2165
    %v2167 = vadd.f32 %v2145, %v2057
    %v2168 = vmul.f32 %v2159, %v2167
    %v2169 = vadd.f32 %v2152, %v2168
    %v2170 = vtanh.pop %v2169
    %v2171 = vsub.f32 1.0, %v2166
    %v2172 = vmul.f32 %v2171, %v2170
    %v2173 = vmul.f32 %v2166, %v2066
    %v2174 = vadd.f32 %v2172, %v2173
    %2175 = vst [vmem:[%s774] sm:$0xff] %v2174
    %v2176 = vpack.c.bf16 %v2174, %v2174
    %2177 = vmatprep.subr.bf16.mxu0 %v1929
    %2178 = vmatpush1.bf16.msra.mxu0 %v1928
    %2179 = vmatprep.subr.bf16.mxu0 %v1926
    %2180 = vmatpush1.bf16.msra.mxu0 %v1925
    %2181 = vmatprep.subr.bf16.mxu0 %v1923
    %2182 = vmatpush1.bf16.msra.mxu0 %v1922
    %2183 = vmatprep.subr.bf16.mxu0 %v1920
    %2184 = vmatpush1.bf16.msra.mxu0 %v1919
    %2185 = vmatprep.subr.bf16.mxu0 %v1917
    %2186 = vmatpush1.bf16.msra.mxu0 %v1916
    %2187 = vmatprep.subr.bf16.mxu0 %v1914
    %2188 = vmatpush1.bf16.msra.mxu0 %v1913
    %2189 = vmatprep.subr.bf16.mxu0 %v1911
    %2190 = vmatpush1.bf16.msra.mxu0 %v1910
    %2191 = vmatprep.subr.bf16.mxu0 %v1908
    %2192 = vmatpush1.bf16.msra.mxu0 %v1907
    %2193 = vmatprep.subr.bf16.mxu0 0
    %2194 = vmatpush2.bf16.msra.mxu0 0
    %2195 = vmatprep.subr.bf16.mxu0 0
    %2196 = vmatpush2.bf16.msra.mxu0 0
    %2197 = vmatprep.subr.bf16.mxu0 0
    %2198 = vmatpush2.bf16.msra.mxu0 0
    %2199 = vmatprep.subr.bf16.mxu0 0
    %2200 = vmatpush2.bf16.msra.mxu0 0
    %2201 = vmatprep.subr.bf16.mxu0 0
    %2202 = vmatpush2.bf16.msra.mxu0 0
    %2203 = vmatprep.subr.bf16.mxu0 0
    %2204 = vmatpush2.bf16.msra.mxu0 0
    %2205 = vmatprep.subr.bf16.mxu0 0
    %2206 = vmatpush2.bf16.msra.mxu0 0
    %2207 = vmatprep.subr.bf16.mxu0 0
    %2208 = vmatpush2.bf16.msra.mxu0 0
    %2209 = vmatprep.mubr.bf16.mxu0 0
    %2210 = vmatmul.mubr.bf16.gmra.mxu0 %v2176
    %v2211 = vpop.f32.mrf.mxu0
    %v2212 = vadd.f32 0.0, %v2211
    %v2213 = vpop.f32.mrf.mxu0
    %v2214 = vadd.f32 0.0, %v2213
    %v2215 = vpop.f32.mrf.mxu0
    %v2216 = vpop.f32.mrf.mxu0
    %2217 = vdwg.mxu0
    %2218 = vmatprep.subr.bf16.mxu0 0
    %2219 = vmatpush1.bf16.msra.mxu0 %v1930
    %2220 = vmatprep.subr.bf16.mxu0 0
    %2221 = vmatpush1.bf16.msra.mxu0 %v1927
    %2222 = vmatprep.subr.bf16.mxu0 0
    %2223 = vmatpush1.bf16.msra.mxu0 %v1924
    %2224 = vmatprep.subr.bf16.mxu0 0
    %2225 = vmatpush1.bf16.msra.mxu0 %v1921
    %2226 = vmatprep.subr.bf16.mxu0 0
    %2227 = vmatpush1.bf16.msra.mxu0 %v1918
    %2228 = vmatprep.subr.bf16.mxu0 0
    %2229 = vmatpush1.bf16.msra.mxu0 %v1915
    %2230 = vmatprep.subr.bf16.mxu0 0
    %2231 = vmatpush1.bf16.msra.mxu0 %v1912
    %2232 = vmatprep.subr.bf16.mxu0 0
    %2233 = vmatpush1.bf16.msra.mxu0 %v1909
    %2234 = vmatprep.subr.bf16.mxu0 0
    %2235 = vmatpush2.bf16.msra.mxu0 0
    %2236 = vmatprep.subr.bf16.mxu0 0
    %2237 = vmatpush2.bf16.msra.mxu0 0
    %2238 = vmatprep.subr.bf16.mxu0 0
    %2239 = vmatpush2.bf16.msra.mxu0 0
    %2240 = vmatprep.subr.bf16.mxu0 0
    %2241 = vmatpush2.bf16.msra.mxu0 0
    %2242 = vmatprep.subr.bf16.mxu0 0
    %2243 = vmatpush2.bf16.msra.mxu0 0
    %2244 = vmatprep.subr.bf16.mxu0 0
    %2245 = vmatpush2.bf16.msra.mxu0 0
    %2246 = vmatprep.subr.bf16.mxu0 0
    %2247 = vmatpush2.bf16.msra.mxu0 0
    %2248 = vmatprep.subr.bf16.mxu0 0
    %2249 = vmatpush2.bf16.msra.mxu0 0
    %2250 = vmatprep.mubr.bf16.mxu0 0
    %2251 = vmatmul.mubr.bf16.gmra.mxu0 %v2176
    %v2252 = vpop.f32.mrf.mxu0
    %v2253 = vadd.f32 0.0, %v2252
    %v2254 = vpop.f32.mrf.mxu0
    %v2255 = vpop.f32.mrf.mxu0
    %v2256 = vpop.f32.mrf.mxu0
    %2257 = vdwg.mxu0
    %v2258 = vld [vmem:[%s858] sm:$0xff]
    %v2259 = vld [vmem:[%s858 + $0x8] sm:$0xff]
    %v2260 = vld [vmem:[%s858 + $0x10] sm:$0xff]
    %v2261 = vadd.f32 %v2258, %v2212
    %v2262 = vxor.u32 %v2261, 2147483648
    %v2263 = vmul.f32 %v2262, 1.442695
    %v2264 = vpow.pop %v2263
    %v2265 = vadd.f32 %v2264, 1.0
    %v2266 = vrcp.pop %v2265
    %v2267 = vmul.f32 1.0, %v2266
    %v2268 = vadd.f32 %v2259, %v2214
    %v2269 = vxor.u32 %v2268, 2147483648
    %v2270 = vmul.f32 %v2269, 1.442695
    %v2271 = vpow.pop %v2270
    %v2272 = vadd.f32 %v2271, 1.0
    %v2273 = vrcp.pop %v2272
    %v2274 = vmul.f32 1.0, %v2273
    %v2275 = vadd.f32 %v2253, %v2057
    %v2276 = vmul.f32 %v2267, %v2275
    %v2277 = vadd.f32 %v2260, %v2276
    %v2278 = vtanh.pop %v2277
    %v2279 = vsub.f32 1.0, %v2274
    %v2280 = vmul.f32 %v2279, %v2278
    %v2281 = vmul.f32 %v2274, %v2174
    %v2282 = vadd.f32 %v2280, %v2281
    %2283 = vst [vmem:[%s884] sm:$0xff] %v2282
    %v2284 = vpack.c.bf16 %v2282, %v2282
    %2285 = vmatprep.subr.bf16.mxu0 %v1929
    %2286 = vmatpush1.bf16.msra.mxu0 %v1928
    %2287 = vmatprep.subr.bf16.mxu0 %v1926
    %2288 = vmatpush1.bf16.msra.mxu0 %v1925
    %2289 = vmatprep.subr.bf16.mxu0 %v1923
    %2290 = vmatpush1.bf16.msra.mxu0 %v1922
    %2291 = vmatprep.subr.bf16.mxu0 %v1920
    %2292 = vmatpush1.bf16.msra.mxu0 %v1919
    %2293 = vmatprep.subr.bf16.mxu0 %v1917
    %2294 = vmatpush1.bf16.msra.mxu0 %v1916
    %2295 = vmatprep.subr.bf16.mxu0 %v1914
    %2296 = vmatpush1.bf16.msra.mxu0 %v1913
    %2297 = vmatprep.subr.bf16.mxu0 %v1911
    %2298 = vmatpush1.bf16.msra.mxu0 %v1910
    %2299 = vmatprep.subr.bf16.mxu0 %v1908
    %2300 = vmatpush1.bf16.msra.mxu0 %v1907
    %2301 = vmatprep.subr.bf16.mxu0 0
    %2302 = vmatpush2.bf16.msra.mxu0 0
    %2303 = vmatprep.subr.bf16.mxu0 0
    %2304 = vmatpush2.bf16.msra.mxu0 0
    %2305 = vmatprep.subr.bf16.mxu0 0
    %2306 = vmatpush2.bf16.msra.mxu0 0
    %2307 = vmatprep.subr.bf16.mxu0 0
    %2308 = vmatpush2.bf16.msra.mxu0 0
    %2309 = vmatprep.subr.bf16.mxu0 0
    %2310 = vmatpush2.bf16.msra.mxu0 0
    %2311 = vmatprep.subr.bf16.mxu0 0
    %2312 = vmatpush2.bf16.msra.mxu0 0
    %2313 = vmatprep.subr.bf16.mxu0 0
    %2314 = vmatpush2.bf16.msra.mxu0 0
    %2315 = vmatprep.subr.bf16.mxu0 0
    %2316 = vmatpush2.bf16.msra.mxu0 0
    %2317 = vmatprep.mubr.bf16.mxu0 0
    %2318 = vmatmul.mubr.bf16.gmra.mxu0 %v2284
    %v2319 = vpop.f32.mrf.mxu0
    %v2320 = vadd.f32 0.0, %v2319
    %v2321 = vpop.f32.mrf.mxu0
    %v2322 = vadd.f32 0.0, %v2321
    %v2323 = vpop.f32.mrf.mxu0
    %v2324 = vpop.f32.mrf.mxu0
    %2325 = vdwg.mxu0
    %2326 = vmatprep.subr.bf16.mxu0 0
    %2327 = vmatpush1.bf16.msra.mxu0 %v1930
    %2328 = vmatprep.subr.bf16.mxu0 0
    %2329 = vmatpush1.bf16.msra.mxu0 %v1927
    %2330 = vmatprep.subr.bf16.mxu0 0
    %2331 = vmatpush1.bf16.msra.mxu0 %v1924
    %2332 = vmatprep.subr.bf16.mxu0 0
    %2333 = vmatpush1.bf16.msra.mxu0 %v1921
    %2334 = vmatprep.subr.bf16.mxu0 0
    %2335 = vmatpush1.bf16.msra.mxu0 %v1918
    %2336 = vmatprep.subr.bf16.mxu0 0
    %2337 = vmatpush1.bf16.msra.mxu0 %v1915
    %2338 = vmatprep.subr.bf16.mxu0 0
    %2339 = vmatpush1.bf16.msra.mxu0 %v1912
    %2340 = vmatprep.subr.bf16.mxu0 0
    %2341 = vmatpush1.bf16.msra.mxu0 %v1909
    %2342 = vmatprep.subr.bf16.mxu0 0
    %2343 = vmatpush2.bf16.msra.mxu0 0
    %2344 = vmatprep.subr.bf16.mxu0 0
    %2345 = vmatpush2.bf16.msra.mxu0 0
    %2346 = vmatprep.subr.bf16.mxu0 0
    %2347 = vmatpush2.bf16.msra.mxu0 0
    %2348 = vmatprep.subr.bf16.mxu0 0
    %2349 = vmatpush2.bf16.msra.mxu0 0
    %2350 = vmatprep.subr.bf16.mxu0 0
    %2351 = vmatpush2.bf16.msra.mxu0 0
    %2352 = vmatprep.subr.bf16.mxu0 0
    %2353 = vmatpush2.bf16.msra.mxu0 0
    %2354 = vmatprep.subr.bf16.mxu0 0
    %2355 = vmatpush2.bf16.msra.mxu0 0
    %2356 = vmatprep.subr.bf16.mxu0 0
    %2357 = vmatpush2.bf16.msra.mxu0 0
    %2358 = vmatprep.mubr.bf16.mxu0 0
    %2359 = vmatmul.mubr.bf16.gmra.mxu0 %v2284
    %v2360 = vpop.f32.mrf.mxu0
    %v2361 = vadd.f32 0.0, %v2360
    %v2362 = vpop.f32.mrf.mxu0
    %v2363 = vpop.f32.mrf.mxu0
    %v2364 = vpop.f32.mrf.mxu0
    %2365 = vdwg.mxu0
    %v2366 = vld [vmem:[%s968] sm:$0xff]
    %v2367 = vld [vmem:[%s968 + $0x8] sm:$0xff]
    %v2368 = vld [vmem:[%s968 + $0x10] sm:$0xff]
    %v2369 = vadd.f32 %v2366, %v2320
    %v2370 = vxor.u32 %v2369, 2147483648
    %v2371 = vmul.f32 %v2370, 1.442695
    %v2372 = vpow.pop %v2371
    %v2373 = vadd.f32 %v2372, 1.0
    %v2374 = vrcp.pop %v2373
    %v2375 = vmul.f32 1.0, %v2374
    %v2376 = vadd.f32 %v2367, %v2322
    %v2377 = vxor.u32 %v2376, 2147483648
    %v2378 = vmul.f32 %v2377, 1.442695
    %v2379 = vpow.pop %v2378
    %v2380 = vadd.f32 %v2379, 1.0
    %v2381 = vrcp.pop %v2380
    %v2382 = vmul.f32 1.0, %v2381
    %v2383 = vadd.f32 %v2361, %v2057
    %v2384 = vmul.f32 %v2375, %v2383
    %v2385 = vadd.f32 %v2368, %v2384
    %v2386 = vtanh.pop %v2385
    %v2387 = vsub.f32 1.0, %v2382
    %v2388 = vmul.f32 %v2387, %v2386
    %v2389 = vmul.f32 %v2382, %v2282
    %v2390 = vadd.f32 %v2388, %v2389
    %2391 = vst [vmem:[%s994] sm:$0xff] %v2390
    %v2392 = vpack.c.bf16 %v2390, %v2390
    %2393 = vmatprep.subr.bf16.mxu0 %v1929
    %2394 = vmatpush1.bf16.msra.mxu0 %v1928
    %2395 = vmatprep.subr.bf16.mxu0 %v1926
    %2396 = vmatpush1.bf16.msra.mxu0 %v1925
    %2397 = vmatprep.subr.bf16.mxu0 %v1923
    %2398 = vmatpush1.bf16.msra.mxu0 %v1922
    %2399 = vmatprep.subr.bf16.mxu0 %v1920
    %2400 = vmatpush1.bf16.msra.mxu0 %v1919
    %2401 = vmatprep.subr.bf16.mxu0 %v1917
    %2402 = vmatpush1.bf16.msra.mxu0 %v1916
    %2403 = vmatprep.subr.bf16.mxu0 %v1914
    %2404 = vmatpush1.bf16.msra.mxu0 %v1913
    %2405 = vmatprep.subr.bf16.mxu0 %v1911
    %2406 = vmatpush1.bf16.msra.mxu0 %v1910
    %2407 = vmatprep.subr.bf16.mxu0 %v1908
    %2408 = vmatpush1.bf16.msra.mxu0 %v1907
    %2409 = vmatprep.subr.bf16.mxu0 0
    %2410 = vmatpush2.bf16.msra.mxu0 0
    %2411 = vmatprep.subr.bf16.mxu0 0
    %2412 = vmatpush2.bf16.msra.mxu0 0
    %2413 = vmatprep.subr.bf16.mxu0 0
    %2414 = vmatpush2.bf16.msra.mxu0 0
    %2415 = vmatprep.subr.bf16.mxu0 0
    %2416 = vmatpush2.bf16.msra.mxu0 0
    %2417 = vmatprep.subr.bf16.mxu0 0
    %2418 = vmatpush2.bf16.msra.mxu0 0
    %2419 = vmatprep.subr.bf16.mxu0 0
    %2420 = vmatpush2.bf16.msra.mxu0 0
    %2421 = vmatprep.subr.bf16.mxu0 0
    %2422 = vmatpush2.bf16.msra.mxu0 0
    %2423 = vmatprep.subr.bf16.mxu0 0
    %2424 = vmatpush2.bf16.msra.mxu0 0
    %2425 = vmatprep.mubr.bf16.mxu0 0
    %2426 = vmatmul.mubr.bf16.gmra.mxu0 %v2392
    %v2427 = vpop.f32.mrf.mxu0
    %v2428 = vadd.f32 0.0, %v2427
    %v2429 = vpop.f32.mrf.mxu0
    %v2430 = vadd.f32 0.0, %v2429
    %v2431 = vpop.f32.mrf.mxu0
    %v2432 = vpop.f32.mrf.mxu0
    %2433 = vdwg.mxu0
    %2434 = vmatprep.subr.bf16.mxu0 0
    %2435 = vmatpush1.bf16.msra.mxu0 %v1930
    %2436 = vmatprep.subr.bf16.mxu0 0
    %2437 = vmatpush1.bf16.msra.mxu0 %v1927
    %2438 = vmatprep.subr.bf16.mxu0 0
    %2439 = vmatpush1.bf16.msra.mxu0 %v1924
    %2440 = vmatprep.subr.bf16.mxu0 0
    %2441 = vmatpush1.bf16.msra.mxu0 %v1921
    %2442 = vmatprep.subr.bf16.mxu0 0
    %2443 = vmatpush1.bf16.msra.mxu0 %v1918
    %2444 = vmatprep.subr.bf16.mxu0 0
    %2445 = vmatpush1.bf16.msra.mxu0 %v1915
    %2446 = vmatprep.subr.bf16.mxu0 0
    %2447 = vmatpush1.bf16.msra.mxu0 %v1912
    %2448 = vmatprep.subr.bf16.mxu0 0
    %2449 = vmatpush1.bf16.msra.mxu0 %v1909
    %2450 = vmatprep.subr.bf16.mxu0 0
    %2451 = vmatpush2.bf16.msra.mxu0 0
    %2452 = vmatprep.subr.bf16.mxu0 0
    %2453 = vmatpush2.bf16.msra.mxu0 0
    %2454 = vmatprep.subr.bf16.mxu0 0
    %2455 = vmatpush2.bf16.msra.mxu0 0
    %2456 = vmatprep.subr.bf16.mxu0 0
    %2457 = vmatpush2.bf16.msra.mxu0 0
    %2458 = vmatprep.subr.bf16.mxu0 0
    %2459 = vmatpush2.bf16.msra.mxu0 0
    %2460 = vmatprep.subr.bf16.mxu0 0
    %2461 = vmatpush2.bf16.msra.mxu0 0
    %2462 = vmatprep.subr.bf16.mxu0 0
    %2463 = vmatpush2.bf16.msra.mxu0 0
    %2464 = vmatprep.subr.bf16.mxu0 0
    %2465 = vmatpush2.bf16.msra.mxu0 0
    %2466 = vmatprep.mubr.bf16.mxu0 0
    %2467 = vmatmul.mubr.bf16.gmra.mxu0 %v2392
    %v2468 = vpop.f32.mrf.mxu0
    %v2469 = vadd.f32 0.0, %v2468
    %v2470 = vpop.f32.mrf.mxu0
    %v2471 = vpop.f32.mrf.mxu0
    %v2472 = vpop.f32.mrf.mxu0
    %2473 = vdwg.mxu0
    %v2474 = vld [vmem:[%s1078] sm:$0xff]
    %v2475 = vld [vmem:[%s1078 + $0x8] sm:$0xff]
    %v2476 = vld [vmem:[%s1078 + $0x10] sm:$0xff]
    %v2477 = vadd.f32 %v2474, %v2428
    %v2478 = vxor.u32 %v2477, 2147483648
    %v2479 = vmul.f32 %v2478, 1.442695
    %v2480 = vpow.pop %v2479
    %v2481 = vadd.f32 %v2480, 1.0
    %v2482 = vrcp.pop %v2481
    %v2483 = vmul.f32 1.0, %v2482
    %v2484 = vadd.f32 %v2475, %v2430
    %v2485 = vxor.u32 %v2484, 2147483648
    %v2486 = vmul.f32 %v2485, 1.442695
    %v2487 = vpow.pop %v2486
    %v2488 = vadd.f32 %v2487, 1.0
    %v2489 = vrcp.pop %v2488
    %v2490 = vmul.f32 1.0, %v2489
    %v2491 = vadd.f32 %v2469, %v2057
    %v2492 = vmul.f32 %v2483, %v2491
    %v2493 = vadd.f32 %v2476, %v2492
    %v2494 = vtanh.pop %v2493
    %v2495 = vsub.f32 1.0, %v2490
    %v2496 = vmul.f32 %v2495, %v2494
    %v2497 = vmul.f32 %v2490, %v2390
    %v2498 = vadd.f32 %v2496, %v2497
    %2499 = vst [vmem:[%s1104] sm:$0xff] %v2498
    %v2500 = vpack.c.bf16 %v2498, %v2498
    %2501 = vmatprep.subr.bf16.mxu0 %v1929
    %2502 = vmatpush1.bf16.msra.mxu0 %v1928
    %2503 = vmatprep.subr.bf16.mxu0 %v1926
    %2504 = vmatpush1.bf16.msra.mxu0 %v1925
    %2505 = vmatprep.subr.bf16.mxu0 %v1923
    %2506 = vmatpush1.bf16.msra.mxu0 %v1922
    %2507 = vmatprep.subr.bf16.mxu0 %v1920
    %2508 = vmatpush1.bf16.msra.mxu0 %v1919
    %2509 = vmatprep.subr.bf16.mxu0 %v1917
    %2510 = vmatpush1.bf16.msra.mxu0 %v1916
    %2511 = vmatprep.subr.bf16.mxu0 %v1914
    %2512 = vmatpush1.bf16.msra.mxu0 %v1913
    %2513 = vmatprep.subr.bf16.mxu0 %v1911
    %2514 = vmatpush1.bf16.msra.mxu0 %v1910
    %2515 = vmatprep.subr.bf16.mxu0 %v1908
    %2516 = vmatpush1.bf16.msra.mxu0 %v1907
    %2517 = vmatprep.subr.bf16.mxu0 0
    %2518 = vmatpush2.bf16.msra.mxu0 0
    %2519 = vmatprep.subr.bf16.mxu0 0
    %2520 = vmatpush2.bf16.msra.mxu0 0
    %2521 = vmatprep.subr.bf16.mxu0 0
    %2522 = vmatpush2.bf16.msra.mxu0 0
    %2523 = vmatprep.subr.bf16.mxu0 0
    %2524 = vmatpush2.bf16.msra.mxu0 0
    %2525 = vmatprep.subr.bf16.mxu0 0
    %2526 = vmatpush2.bf16.msra.mxu0 0
    %2527 = vmatprep.subr.bf16.mxu0 0
    %2528 = vmatpush2.bf16.msra.mxu0 0
    %2529 = vmatprep.subr.bf16.mxu0 0
    %2530 = vmatpush2.bf16.msra.mxu0 0
    %2531 = vmatprep.subr.bf16.mxu0 0
    %2532 = vmatpush2.bf16.msra.mxu0 0
    %2533 = vmatprep.mubr.bf16.mxu0 0
    %2534 = vmatmul.mubr.bf16.gmra.mxu0 %v2500
    %v2535 = vpop.f32.mrf.mxu0
    %v2536 = vadd.f32 0.0, %v2535
    %v2537 = vpop.f32.mrf.mxu0
    %v2538 = vadd.f32 0.0, %v2537
    %v2539 = vpop.f32.mrf.mxu0
    %v2540 = vpop.f32.mrf.mxu0
    %2541 = vdwg.mxu0
    %2542 = vmatprep.subr.bf16.mxu0 0
    %2543 = vmatpush1.bf16.msra.mxu0 %v1930
    %2544 = vmatprep.subr.bf16.mxu0 0
    %2545 = vmatpush1.bf16.msra.mxu0 %v1927
    %2546 = vmatprep.subr.bf16.mxu0 0
    %2547 = vmatpush1.bf16.msra.mxu0 %v1924
    %2548 = vmatprep.subr.bf16.mxu0 0
    %2549 = vmatpush1.bf16.msra.mxu0 %v1921
    %2550 = vmatprep.subr.bf16.mxu0 0
    %2551 = vmatpush1.bf16.msra.mxu0 %v1918
    %2552 = vmatprep.subr.bf16.mxu0 0
    %2553 = vmatpush1.bf16.msra.mxu0 %v1915
    %2554 = vmatprep.subr.bf16.mxu0 0
    %2555 = vmatpush1.bf16.msra.mxu0 %v1912
    %2556 = vmatprep.subr.bf16.mxu0 0
    %2557 = vmatpush1.bf16.msra.mxu0 %v1909
    %2558 = vmatprep.subr.bf16.mxu0 0
    %2559 = vmatpush2.bf16.msra.mxu0 0
    %2560 = vmatprep.subr.bf16.mxu0 0
    %2561 = vmatpush2.bf16.msra.mxu0 0
    %2562 = vmatprep.subr.bf16.mxu0 0
    %2563 = vmatpush2.bf16.msra.mxu0 0
    %2564 = vmatprep.subr.bf16.mxu0 0
    %2565 = vmatpush2.bf16.msra.mxu0 0
    %2566 = vmatprep.subr.bf16.mxu0 0
    %2567 = vmatpush2.bf16.msra.mxu0 0
    %2568 = vmatprep.subr.bf16.mxu0 0
    %2569 = vmatpush2.bf16.msra.mxu0 0
    %2570 = vmatprep.subr.bf16.mxu0 0
    %2571 = vmatpush2.bf16.msra.mxu0 0
    %2572 = vmatprep.subr.bf16.mxu0 0
    %2573 = vmatpush2.bf16.msra.mxu0 0
    %2574 = vmatprep.mubr.bf16.mxu0 0
    %2575 = vmatmul.mubr.bf16.gmra.mxu0 %v2500
    %v2576 = vpop.f32.mrf.mxu0
    %v2577 = vadd.f32 0.0, %v2576
    %v2578 = vpop.f32.mrf.mxu0
    %v2579 = vpop.f32.mrf.mxu0
    %v2580 = vpop.f32.mrf.mxu0
    %2581 = vdwg.mxu0
    %v2582 = vld [vmem:[%s1188] sm:$0xff]
    %v2583 = vld [vmem:[%s1188 + $0x8] sm:$0xff]
    %v2584 = vld [vmem:[%s1188 + $0x10] sm:$0xff]
    %v2585 = vadd.f32 %v2582, %v2536
    %v2586 = vxor.u32 %v2585, 2147483648
    %v2587 = vmul.f32 %v2586, 1.442695
    %v2588 = vpow.pop %v2587
    %v2589 = vadd.f32 %v2588, 1.0
    %v2590 = vrcp.pop %v2589
    %v2591 = vmul.f32 1.0, %v2590
    %v2592 = vadd.f32 %v2583, %v2538
    %v2593 = vxor.u32 %v2592, 2147483648
    %v2594 = vmul.f32 %v2593, 1.442695
    %v2595 = vpow.pop %v2594
    %v2596 = vadd.f32 %v2595, 1.0
    %v2597 = vrcp.pop %v2596
    %v2598 = vmul.f32 1.0, %v2597
    %v2599 = vadd.f32 %v2577, %v2057
    %v2600 = vmul.f32 %v2591, %v2599
    %v2601 = vadd.f32 %v2584, %v2600
    %v2602 = vtanh.pop %v2601
    %v2603 = vsub.f32 1.0, %v2598
    %v2604 = vmul.f32 %v2603, %v2602
    %v2605 = vmul.f32 %v2598, %v2498
    %v2606 = vadd.f32 %v2604, %v2605
    %2607 = vst [vmem:[%s1214] sm:$0xff] %v2606
    %v2608 = vpack.c.bf16 %v2606, %v2606
    %2609 = vmatprep.subr.bf16.mxu0 %v1929
    %2610 = vmatpush1.bf16.msra.mxu0 %v1928
    %2611 = vmatprep.subr.bf16.mxu0 %v1926
    %2612 = vmatpush1.bf16.msra.mxu0 %v1925
    %2613 = vmatprep.subr.bf16.mxu0 %v1923
    %2614 = vmatpush1.bf16.msra.mxu0 %v1922
    %2615 = vmatprep.subr.bf16.mxu0 %v1920
    %2616 = vmatpush1.bf16.msra.mxu0 %v1919
    %2617 = vmatprep.subr.bf16.mxu0 %v1917
    %2618 = vmatpush1.bf16.msra.mxu0 %v1916
    %2619 = vmatprep.subr.bf16.mxu0 %v1914
    %2620 = vmatpush1.bf16.msra.mxu0 %v1913
    %2621 = vmatprep.subr.bf16.mxu0 %v1911
    %2622 = vmatpush1.bf16.msra.mxu0 %v1910
    %2623 = vmatprep.subr.bf16.mxu0 %v1908
    %2624 = vmatpush1.bf16.msra.mxu0 %v1907
    %2625 = vmatprep.subr.bf16.mxu0 0
    %2626 = vmatpush2.bf16.msra.mxu0 0
    %2627 = vmatprep.subr.bf16.mxu0 0
    %2628 = vmatpush2.bf16.msra.mxu0 0
    %2629 = vmatprep.subr.bf16.mxu0 0
    %2630 = vmatpush2.bf16.msra.mxu0 0
    %2631 = vmatprep.subr.bf16.mxu0 0
    %2632 = vmatpush2.bf16.msra.mxu0 0
    %2633 = vmatprep.subr.bf16.mxu0 0
    %2634 = vmatpush2.bf16.msra.mxu0 0
    %2635 = vmatprep.subr.bf16.mxu0 0
    %2636 = vmatpush2.bf16.msra.mxu0 0
    %2637 = vmatprep.subr.bf16.mxu0 0
    %2638 = vmatpush2.bf16.msra.mxu0 0
    %2639 = vmatprep.subr.bf16.mxu0 0
    %2640 = vmatpush2.bf16.msra.mxu0 0
    %2641 = vmatprep.mubr.bf16.mxu0 0
    %2642 = vmatmul.mubr.bf16.gmra.mxu0 %v2608
    %v2643 = vpop.f32.mrf.mxu0
    %v2644 = vadd.f32 0.0, %v2643
    %v2645 = vpop.f32.mrf.mxu0
    %v2646 = vadd.f32 0.0, %v2645
    %v2647 = vpop.f32.mrf.mxu0
    %v2648 = vpop.f32.mrf.mxu0
    %2649 = vdwg.mxu0
    %2650 = vmatprep.subr.bf16.mxu0 0
    %2651 = vmatpush1.bf16.msra.mxu0 %v1930
    %2652 = vmatprep.subr.bf16.mxu0 0
    %2653 = vmatpush1.bf16.msra.mxu0 %v1927
    %2654 = vmatprep.subr.bf16.mxu0 0
    %2655 = vmatpush1.bf16.msra.mxu0 %v1924
    %2656 = vmatprep.subr.bf16.mxu0 0
    %2657 = vmatpush1.bf16.msra.mxu0 %v1921
    %2658 = vmatprep.subr.bf16.mxu0 0
    %2659 = vmatpush1.bf16.msra.mxu0 %v1918
    %2660 = vmatprep.subr.bf16.mxu0 0
    %2661 = vmatpush1.bf16.msra.mxu0 %v1915
    %2662 = vmatprep.subr.bf16.mxu0 0
    %2663 = vmatpush1.bf16.msra.mxu0 %v1912
    %2664 = vmatprep.subr.bf16.mxu0 0
    %2665 = vmatpush1.bf16.msra.mxu0 %v1909
    %2666 = vmatprep.subr.bf16.mxu0 0
    %2667 = vmatpush2.bf16.msra.mxu0 0
    %2668 = vmatprep.subr.bf16.mxu0 0
    %2669 = vmatpush2.bf16.msra.mxu0 0
    %2670 = vmatprep.subr.bf16.mxu0 0
    %2671 = vmatpush2.bf16.msra.mxu0 0
    %2672 = vmatprep.subr.bf16.mxu0 0
    %2673 = vmatpush2.bf16.msra.mxu0 0
    %2674 = vmatprep.subr.bf16.mxu0 0
    %2675 = vmatpush2.bf16.msra.mxu0 0
    %2676 = vmatprep.subr.bf16.mxu0 0
    %2677 = vmatpush2.bf16.msra.mxu0 0
    %2678 = vmatprep.subr.bf16.mxu0 0
    %2679 = vmatpush2.bf16.msra.mxu0 0
    %2680 = vmatprep.subr.bf16.mxu0 0
    %2681 = vmatpush2.bf16.msra.mxu0 0
    %2682 = vmatprep.mubr.bf16.mxu0 0
    %2683 = vmatmul.mubr.bf16.gmra.mxu0 %v2608
    %v2684 = vpop.f32.mrf.mxu0
    %v2685 = vadd.f32 0.0, %v2684
    %v2686 = vpop.f32.mrf.mxu0
    %v2687 = vpop.f32.mrf.mxu0
    %v2688 = vpop.f32.mrf.mxu0
    %2689 = vdwg.mxu0
    %v2690 = vld [vmem:[%s1298] sm:$0xff]
    %v2691 = vld [vmem:[%s1298 + $0x8] sm:$0xff]
    %v2692 = vld [vmem:[%s1298 + $0x10] sm:$0xff]
    %v2693 = vadd.f32 %v2690, %v2644
    %v2694 = vxor.u32 %v2693, 2147483648
    %v2695 = vmul.f32 %v2694, 1.442695
    %v2696 = vpow.pop %v2695
    %v2697 = vadd.f32 %v2696, 1.0
    %v2698 = vrcp.pop %v2697
    %v2699 = vmul.f32 1.0, %v2698
    %v2700 = vadd.f32 %v2691, %v2646
    %v2701 = vxor.u32 %v2700, 2147483648
    %v2702 = vmul.f32 %v2701, 1.442695
    %v2703 = vpow.pop %v2702
    %v2704 = vadd.f32 %v2703, 1.0
    %v2705 = vrcp.pop %v2704
    %v2706 = vmul.f32 1.0, %v2705
    %v2707 = vadd.f32 %v2685, %v2057
    %v2708 = vmul.f32 %v2699, %v2707
    %v2709 = vadd.f32 %v2692, %v2708
    %v2710 = vtanh.pop %v2709
    %v2711 = vsub.f32 1.0, %v2706
    %v2712 = vmul.f32 %v2711, %v2710
    %v2713 = vmul.f32 %v2706, %v2606
    %v2714 = vadd.f32 %v2712, %v2713
    %2715 = vst [vmem:[%s1324] sm:$0xff] %v2714
    %v2716 = vpack.c.bf16 %v2714, %v2714
    %2717 = vmatprep.subr.bf16.mxu0 %v1929
    %2718 = vmatpush1.bf16.msra.mxu0 %v1928
    %2719 = vmatprep.subr.bf16.mxu0 %v1926
    %2720 = vmatpush1.bf16.msra.mxu0 %v1925
    %2721 = vmatprep.subr.bf16.mxu0 %v1923
    %2722 = vmatpush1.bf16.msra.mxu0 %v1922
    %2723 = vmatprep.subr.bf16.mxu0 %v1920
    %2724 = vmatpush1.bf16.msra.mxu0 %v1919
    %2725 = vmatprep.subr.bf16.mxu0 %v1917
    %2726 = vmatpush1.bf16.msra.mxu0 %v1916
    %2727 = vmatprep.subr.bf16.mxu0 %v1914
    %2728 = vmatpush1.bf16.msra.mxu0 %v1913
    %2729 = vmatprep.subr.bf16.mxu0 %v1911
    %2730 = vmatpush1.bf16.msra.mxu0 %v1910
    %2731 = vmatprep.subr.bf16.mxu0 %v1908
    %2732 = vmatpush1.bf16.msra.mxu0 %v1907
    %2733 = vmatprep.subr.bf16.mxu0 0
    %2734 = vmatpush2.bf16.msra.mxu0 0
    %2735 = vmatprep.subr.bf16.mxu0 0
    %2736 = vmatpush2.bf16.msra.mxu0 0
    %2737 = vmatprep.subr.bf16.mxu0 0
    %2738 = vmatpush2.bf16.msra.mxu0 0
    %2739 = vmatprep.subr.bf16.mxu0 0
    %2740 = vmatpush2.bf16.msra.mxu0 0
    %2741 = vmatprep.subr.bf16.mxu0 0
    %2742 = vmatpush2.bf16.msra.mxu0 0
    %2743 = vmatprep.subr.bf16.mxu0 0
    %2744 = vmatpush2.bf16.msra.mxu0 0
    %2745 = vmatprep.subr.bf16.mxu0 0
    %2746 = vmatpush2.bf16.msra.mxu0 0
    %2747 = vmatprep.subr.bf16.mxu0 0
    %2748 = vmatpush2.bf16.msra.mxu0 0
    %2749 = vmatprep.mubr.bf16.mxu0 0
    %2750 = vmatmul.mubr.bf16.gmra.mxu0 %v2716
    %v2751 = vpop.f32.mrf.mxu0
    %v2752 = vadd.f32 0.0, %v2751
    %v2753 = vpop.f32.mrf.mxu0
    %v2754 = vadd.f32 0.0, %v2753
    %v2755 = vpop.f32.mrf.mxu0
    %v2756 = vpop.f32.mrf.mxu0
    %2757 = vdwg.mxu0
    %2758 = vmatprep.subr.bf16.mxu0 0
    %2759 = vmatpush1.bf16.msra.mxu0 %v1930
    %2760 = vmatprep.subr.bf16.mxu0 0
    %2761 = vmatpush1.bf16.msra.mxu0 %v1927
    %2762 = vmatprep.subr.bf16.mxu0 0
    %2763 = vmatpush1.bf16.msra.mxu0 %v1924
    %2764 = vmatprep.subr.bf16.mxu0 0
    %2765 = vmatpush1.bf16.msra.mxu0 %v1921
    %2766 = vmatprep.subr.bf16.mxu0 0
    %2767 = vmatpush1.bf16.msra.mxu0 %v1918
    %2768 = vmatprep.subr.bf16.mxu0 0
    %2769 = vmatpush1.bf16.msra.mxu0 %v1915
    %2770 = vmatprep.subr.bf16.mxu0 0
    %2771 = vmatpush1.bf16.msra.mxu0 %v1912
    %2772 = vmatprep.subr.bf16.mxu0 0
    %2773 = vmatpush1.bf16.msra.mxu0 %v1909
    %2774 = vmatprep.subr.bf16.mxu0 0
    %2775 = vmatpush2.bf16.msra.mxu0 0
    %2776 = vmatprep.subr.bf16.mxu0 0
    %2777 = vmatpush2.bf16.msra.mxu0 0
    %2778 = vmatprep.subr.bf16.mxu0 0
    %2779 = vmatpush2.bf16.msra.mxu0 0
    %2780 = vmatprep.subr.bf16.mxu0 0
    %2781 = vmatpush2.bf16.msra.mxu0 0
    %2782 = vmatprep.subr.bf16.mxu0 0
    %2783 = vmatpush2.bf16.msra.mxu0 0
    %2784 = vmatprep.subr.bf16.mxu0 0
    %2785 = vmatpush2.bf16.msra.mxu0 0
    %2786 = vmatprep.subr.bf16.mxu0 0
    %2787 = vmatpush2.bf16.msra.mxu0 0
    %2788 = vmatprep.subr.bf16.mxu0 0
    %2789 = vmatpush2.bf16.msra.mxu0 0
    %2790 = vmatprep.mubr.bf16.mxu0 0
    %2791 = vmatmul.mubr.bf16.gmra.mxu0 %v2716
    %v2792 = vpop.f32.mrf.mxu0
    %v2793 = vadd.f32 0.0, %v2792
    %v2794 = vpop.f32.mrf.mxu0
    %v2795 = vpop.f32.mrf.mxu0
    %v2796 = vpop.f32.mrf.mxu0
    %2797 = vdwg.mxu0
    %v2798 = vld [vmem:[%s1408] sm:$0xff]
    %v2799 = vld [vmem:[%s1408 + $0x8] sm:$0xff]
    %v2800 = vld [vmem:[%s1408 + $0x10] sm:$0xff]
    %v2801 = vadd.f32 %v2798, %v2752
    %v2802 = vxor.u32 %v2801, 2147483648
    %v2803 = vmul.f32 %v2802, 1.442695
    %v2804 = vpow.pop %v2803
    %v2805 = vadd.f32 %v2804, 1.0
    %v2806 = vrcp.pop %v2805
    %v2807 = vmul.f32 1.0, %v2806
    %v2808 = vadd.f32 %v2799, %v2754
    %v2809 = vxor.u32 %v2808, 2147483648
    %v2810 = vmul.f32 %v2809, 1.442695
    %v2811 = vpow.pop %v2810
    %v2812 = vadd.f32 %v2811, 1.0
    %v2813 = vrcp.pop %v2812
    %v2814 = vmul.f32 1.0, %v2813
    %v2815 = vadd.f32 %v2793, %v2057
    %v2816 = vmul.f32 %v2807, %v2815
    %v2817 = vadd.f32 %v2800, %v2816
    %v2818 = vtanh.pop %v2817
    %v2819 = vsub.f32 1.0, %v2814
    %v2820 = vmul.f32 %v2819, %v2818
    %v2821 = vmul.f32 %v2814, %v2714
    %v2822 = vadd.f32 %v2820, %v2821
    %2823 = vst [vmem:[%s1434] sm:$0xff] %v2822
    %s2824 = scalar_lea.vmem %s10, 8
    %2825 = vst [vmem:[%s2824] sm:$0xff] %v2822
  $region41: #{seq2seq_decoder_forward.1} parent=0 // pred_fallthru
    _
  %v2826 = vld [vmem:[#allocation2] sm:$0xff]
  %v2827 = vld [vmem:[#allocation2 + $0x8] sm:$0xff]
  %v2828 = vld [vmem:[#allocation2 + $0x10] sm:$0xff]
  %v2829 = vld [vmem:[#allocation2 + $0x18] sm:$0xff]
  %v2830 = vld [vmem:[#allocation2 + $0x20] sm:$0xff]
  %v2831 = vld [vmem:[#allocation2 + $0x28] sm:$0xff]
  %v2832 = vld [vmem:[#allocation2 + $0x30] sm:$0xff]
  %v2833 = vld [vmem:[#allocation2 + $0x38] sm:$0xff]
  %v2834 = vpack.c.bf16 %v2827, %v2826
  %v2835 = vpack.c.bf16 %v2829, %v2828
  %v2836 = vpack.c.bf16 %v2831, %v2830
  %v2837 = vpack.c.bf16 %v2833, %v2832
  %v2838 = vld [vmem:[%s7] sm:$0xf]
  %v2839 = vld [vmem:[%s7 + $0x4] sm:$0xf]
  %v2840 = vld [vmem:[%s7 + $0x8] sm:$0xf]
  %v2841 = vld [vmem:[%s7 + $0xc] sm:$0xf]
  %v2842 = vld [vmem:[%s7 + $0x10] sm:$0xf]
  %v2843 = vld [vmem:[%s7 + $0x14] sm:$0xf]
  %v2844 = vld [vmem:[%s7 + $0x18] sm:$0xf]
  %v2845 = vld [vmem:[%s7 + $0x1c] sm:$0xf]
  %v2846 = vld [vmem:[%s7 + $0x20] sm:$0xf]
  %v2847 = vld [vmem:[%s7 + $0x24] sm:$0xf]
  %v2848 = vld [vmem:[%s7 + $0x28] sm:$0xf]
  %v2849 = vld [vmem:[%s7 + $0x2c] sm:$0xf]
  %v2850 = vld [vmem:[%s7 + $0x30] sm:$0xf]
  %v2851 = vld [vmem:[%s7 + $0x34] sm:$0xf]
  %v2852 = vld [vmem:[%s7 + $0x38] sm:$0xf]
  %v2853 = vld [vmem:[%s7 + $0x3c] sm:$0xf]
  %v2854 = vld [vmem:[%s8] sm:$0x1]
  %v2856 = vlaneseq
  %v2857 = vshrl.u32 %v2856, 7
  %v2858 = vsub.s32 0, %v2857
  %v2859 = vrot.slane %v2854, %v2858
  %v2877 = vunpack.c.l.b16 %v2838
  %v2878 = vunpack.c.l.b16 %v2839
  %v2879 = vunpack.c.l.b16 %v2840
  %v2880 = vunpack.c.l.b16 %v2841
  %v2881 = vunpack.c.l.b16 %v2842
  %v2882 = vunpack.c.l.b16 %v2843
  %v2883 = vunpack.c.l.b16 %v2844
  %v2884 = vunpack.c.l.b16 %v2845
  %v2885 = vunpack.c.l.b16 %v2846
  %v2886 = vunpack.c.l.b16 %v2847
  %v2887 = vunpack.c.l.b16 %v2848
  %v2888 = vunpack.c.l.b16 %v2849
  %v2889 = vunpack.c.l.b16 %v2850
  %v2890 = vunpack.c.l.b16 %v2851
  %v2891 = vunpack.c.l.b16 %v2852
  %v2892 = vunpack.c.l.b16 %v2853
  %v2893 = vpack.c.b16 %v2878, %v2877
  %v2894 = vpack.c.b16 %v2880, %v2879
  %v2895 = vpack.c.b16 %v2882, %v2881
  %v2896 = vpack.c.b16 %v2884, %v2883
  %v2897 = vpack.c.b16 %v2886, %v2885
  %v2898 = vpack.c.b16 %v2888, %v2887
  %v2899 = vpack.c.b16 %v2890, %v2889
  %v2900 = vpack.c.b16 %v2892, %v2891
  %2909 = vmatprep.subr.bf16.mxu0 0
  %2910 = vmatpush1.bf16.msra.mxu0 %v2900
  %2911 = vmatprep.subr.bf16.mxu0 0
  %2912 = vmatpush1.bf16.msra.mxu0 %v2899
  %2913 = vmatprep.subr.bf16.mxu0 0
  %2914 = vmatpush1.bf16.msra.mxu0 %v2898
  %2915 = vmatprep.subr.bf16.mxu0 0
  %2916 = vmatpush1.bf16.msra.mxu0 %v2897
  %2917 = vmatprep.subr.bf16.mxu0 0
  %2918 = vmatpush1.bf16.msra.mxu0 %v2896
  %2919 = vmatprep.subr.bf16.mxu0 0
  %2920 = vmatpush1.bf16.msra.mxu0 %v2895
  %2921 = vmatprep.subr.bf16.mxu0 0
  %2922 = vmatpush1.bf16.msra.mxu0 %v2894
  %2923 = vmatprep.subr.bf16.mxu0 0
  %2924 = vmatpush1.bf16.msra.mxu0 %v2893
  %2925 = vmatprep.subr.bf16.mxu0 0
  %2926 = vmatpush2.bf16.msra.mxu0 0
  %2927 = vmatprep.subr.bf16.mxu0 0
  %2928 = vmatpush2.bf16.msra.mxu0 0
  %2929 = vmatprep.subr.bf16.mxu0 0
  %2930 = vmatpush2.bf16.msra.mxu0 0
  %2931 = vmatprep.subr.bf16.mxu0 0
  %2932 = vmatpush2.bf16.msra.mxu0 0
  %2933 = vmatprep.subr.bf16.mxu0 0
  %2934 = vmatpush2.bf16.msra.mxu0 0
  %2935 = vmatprep.subr.bf16.mxu0 0
  %2936 = vmatpush2.bf16.msra.mxu0 0
  %2937 = vmatprep.subr.bf16.mxu0 0
  %2938 = vmatpush2.bf16.msra.mxu0 0
  %2939 = vmatprep.subr.bf16.mxu0 0
  %2940 = vmatpush2.bf16.msra.mxu0 0
  %2941 = vmatprep.mubr.bf16.mxu0 0
  %2942 = vmatmul.mubr.bf16.gmra.mxu0 %v2834
  %v2943 = vpop.f32.mrf.mxu0
  %v2944 = vadd.f32 %v2859, %v2943
  %v2945 = vpop.f32.mrf.mxu0
  %v2946 = vpop.f32.mrf.mxu0
  %v2947 = vadd.f32 %v2859, %v2946
  %v2948 = vpop.f32.mrf.mxu0
  %2949 = vmatprep.mubr.bf16.mxu0 0
  %2950 = vmatmul.mubr.bf16.gmra.mxu0 %v2835
  %v2951 = vpop.f32.mrf.mxu0
  %v2952 = vadd.f32 %v2859, %v2951
  %v2953 = vpop.f32.mrf.mxu0
  %v2954 = vpop.f32.mrf.mxu0
  %v2955 = vadd.f32 %v2859, %v2954
  %v2956 = vpop.f32.mrf.mxu0
  %2957 = vmatprep.mubr.bf16.mxu0 0
  %2958 = vmatmul.mubr.bf16.gmra.mxu0 %v2836
  %v2959 = vpop.f32.mrf.mxu0
  %v2960 = vadd.f32 %v2859, %v2959
  %v2961 = vpop.f32.mrf.mxu0
  %v2962 = vpop.f32.mrf.mxu0
  %v2963 = vadd.f32 %v2859, %v2962
  %v2964 = vpop.f32.mrf.mxu0
  %2965 = vmatprep.mubr.bf16.mxu0 0
  %2966 = vmatmul.mubr.bf16.gmra.mxu0 %v2837
  %v2967 = vpop.f32.mrf.mxu0
  %v2968 = vadd.f32 %v2859, %v2967
  %v2969 = vpop.f32.mrf.mxu0
  %v2970 = vpop.f32.mrf.mxu0
  %v2971 = vadd.f32 %v2859, %v2970
  %v2972 = vpop.f32.mrf.mxu0
  %2973 = vdwg.mxu0
  %2974 = vst [vmem:[%s9] sm:$0xff] %v2944
  %2975 = vst [vmem:[%s9 + $0x8] sm:$0xff] %v2947
  %2976 = vst [vmem:[%s9 + $0x10] sm:$0xff] %v2952
  %2977 = vst [vmem:[%s9 + $0x18] sm:$0xff] %v2955
  %2978 = vst [vmem:[%s9 + $0x20] sm:$0xff] %v2960
  %2979 = vst [vmem:[%s9 + $0x28] sm:$0xff] %v2963
  %2980 = vst [vmem:[%s9 + $0x30] sm:$0xff] %v2968
  %2981 = vst [vmem:[%s9 + $0x38] sm:$0xff] %v2971
  // Predicated region
  $region42: #{seq2seq_decoder_forward.1} parent=0 // pred_check
    _
  $region43: #{seq2seq_decoder_forward.1} parent=0 // pred_check_branch
    %2983 = sbr.rel (0) target = $region45
  $region44: #{seq2seq_decoder_forward.1} parent=0 // pred_region
    _
  $region45: #{seq2seq_decoder_forward.1} parent=0 // pred_fallthru
    _
  // Predicated region
  $region46: #{seq2seq_decoder_forward.1} parent=0 // pred_check
    _
  $region47: #{seq2seq_decoder_forward.1} parent=0 // pred_check_branch
    %2985 = sbr.rel (0) target = $region49
  $region48: #{seq2seq_decoder_forward.1} parent=0 // pred_region
    _
  $region49: #{seq2seq_decoder_forward.1} parent=0 // pred_fallthru
    _
  // Predicated region
  $region50: #{seq2seq_decoder_forward.1} parent=0 // pred_check
    _
  $region51: #{seq2seq_decoder_forward.1} parent=0 // pred_check_branch
    %2987 = sbr.rel (0) target = $region53
  $region52: #{seq2seq_decoder_forward.1} parent=0 // pred_region
    _
  $region53: #{seq2seq_decoder_forward.1} parent=0 // pred_fallthru
    _
  // Predicated region
  $region54: #{seq2seq_decoder_forward.1} parent=0 // pred_check
    _
  $region55: #{seq2seq_decoder_forward.1} parent=0 // pred_check_branch
    %2989 = sbr.rel (0) target = $region57
  $region56: #{seq2seq_decoder_forward.1} parent=0 // pred_region
    _
  $region57: #{seq2seq_decoder_forward.1} parent=0 // pred_fallthru
    _

</llo_original>
